<compile_context>
chip_gen: v6e
topology: v6e:2x2x1
jax: 0.10.0
libtpu: 0.0.40
codegen_flags: <defaults>
</compile_context>

<pallas_src>
import functools

import jax
import jax.numpy as jnp
from jax.experimental import pallas as pl
from jax.experimental.pallas import tpu as pltpu


_HIDDEN = (512, 1024, 2048)
_VMEM_LIMIT = 28 * 1024 * 1024


# ---------------------------------------------------------------------------
# Kernels
# ---------------------------------------------------------------------------
def _q_layer(h_bf16, w_ref, s_ref, b_ref):
    """int8-weight linear layer: widen the int8 weight tile to bf16 (VPU),
    bf16 x bf16 MXU dot with f32 accumulation, then fold the per-output-channel
    scale and the bias into the f32 epilogue."""
    y = jnp.dot(h_bf16, w_ref[...].astype(jnp.bfloat16),
                preferred_element_type=jnp.float32)
    return y * s_ref[...] + b_ref[...]


def _fused_decoder_kernel(x_ref,
                          w1_ref, s1_ref, b1_ref,
                          w2_ref, s2_ref, b2_ref,
                          w3_ref, s3_ref, b3_ref,
                          w4_ref, s4_ref, b4_ref,
                          o_ref):
    """Whole decoder in one invocation; weights + activations stay in VMEM."""
    h = x_ref[...].astype(jnp.bfloat16)
    h = jnp.maximum(_q_layer(h, w1_ref, s1_ref, b1_ref), 0.0).astype(jnp.bfloat16)
    h = jnp.maximum(_q_layer(h, w2_ref, s2_ref, b2_ref), 0.0).astype(jnp.bfloat16)
    h = jnp.maximum(_q_layer(h, w3_ref, s3_ref, b3_ref), 0.0).astype(jnp.bfloat16)
    o_ref[...] = jax.nn.sigmoid(_q_layer(h, w4_ref, s4_ref, b4_ref)).astype(o_ref.dtype)


def _split_decoder_kernel(x_ref,
                          w1_ref, s1_ref, b1_ref,
                          w2_ref, s2_ref, b2_ref,
                          w3_ref, s3_ref, b3_ref,
                          w4_ref, s4_ref,
                          o_ref):
    """Per-TensorCore half of the decoder (v7x megacore split).

    Grid point i gets column-half i of W3 (and its scale/bias slice) and
    row-half i of W4, so each core moves roughly half of the dominant weight
    bytes.  It emits an s4-scaled f32 partial sum of layer 4; the wrapper adds
    the two partials, the bias and the sigmoid as one tiny fused XLA op."""
    h = x_ref[...].astype(jnp.bfloat16)
    h = jnp.maximum(_q_layer(h, w1_ref, s1_ref, b1_ref), 0.0).astype(jnp.bfloat16)
    h = jnp.maximum(_q_layer(h, w2_ref, s2_ref, b2_ref), 0.0).astype(jnp.bfloat16)
    h = jnp.maximum(_q_layer(h, w3_ref, s3_ref, b3_ref), 0.0).astype(jnp.bfloat16)
    partial = jnp.dot(h, w4_ref[...].astype(jnp.bfloat16),
                      preferred_element_type=jnp.float32) * s4_ref[...]
    o_ref[...] = partial[None].astype(o_ref.dtype)


# ---------------------------------------------------------------------------
# Wrapper
# ---------------------------------------------------------------------------
def _full_spec(shape):
    """Whole-array block, same block at every grid point."""
    nd = len(shape)
    return pl.BlockSpec(shape, lambda i: (0,) * nd)


def _cost_estimate(batch, d_in, d_out):
    dims = (d_in,) + _HIDDEN + (d_out,)
    w_elems = sum(dims[i] * dims[i + 1] for i in range(4))
    return pl.CostEstimate(
        flops=2 * batch * w_elems,
        transcendentals=batch * d_out,                      # sigmoid
        bytes_accessed=w_elems                              # int8 weights
        + 8 * sum(dims[1:])                                 # f32 scales + biases
        + 4 * batch * (d_in + d_out))                       # x in, y out


def _has_second_tensorcore():
    """v7x exposes 2 TensorCores per chip that a ('parallel',) grid axis can be
    sharded across; v5e/v6e have one, so they keep the single-kernel path."""
    try:
        kind = jax.devices()[0].device_kind.lower()
    except Exception:
        return False
    return "7" in kind


@functools.partial(jax.jit, static_argnames=("split_tc",))
def _forward_impl(params, x, split_tc):
    (w1, s1, b1), (w2, s2, b2), (w3, s3, b3), (w4, s4, b4) = params
    batch, d_in = x.shape
    d_out = w4.shape[1]

    # Pad the batch up to the bf16 sublane tile (16) so vregs / MXU rows are
    # full; the weight DMA (the roofline) is amortised over every row for free.
    bp = max(16, -(-batch // 16) * 16)
    if bp != batch:
        x = jnp.pad(x, ((0, bp - batch), (0, 0)))

    cost = _cost_estimate(bp, d_in, d_out)

    if not split_tc:
        args = (x, w1, s1, b1, w2, s2, b2, w3, s3, b3, w4, s4, b4)
        out = pl.pallas_call(
            _fused_decoder_kernel,
            out_shape=jax.ShapeDtypeStruct((bp, d_out), jnp.float32),
            grid=(1,),
            in_specs=[_full_spec(a.shape) for a in args],
            out_specs=_full_spec((bp, d_out)),
            compiler_params=pltpu.CompilerParams(
                dimension_semantics=("arbitrary",),
                vmem_limit_bytes=_VMEM_LIMIT),
            cost_estimate=cost,
        )(*args)
        return out[:batch] if bp != batch else out

    # ---- two-TensorCore (v7x) path ----------------------------------------
    h3_half = _HIDDEN[2] // 2      # 1024 columns of W3 / rows of W4 per core
    args = (x, w1, s1, b1, w2, s2, b2, w3, s3, b3, w4, s4)
    in_specs = [
        _full_spec(x.shape),
        _full_spec(w1.shape), _full_spec(s1.shape), _full_spec(b1.shape),
        _full_spec(w2.shape), _full_spec(s2.shape), _full_spec(b2.shape),
        pl.BlockSpec((_HIDDEN[1], h3_half), lambda i: (0, i)),   # W3 column half
        pl.BlockSpec((1, h3_half), lambda i: (0, i)),            # s3 half
        pl.BlockSpec((1, h3_half), lambda i: (0, i)),            # b3 half
        pl.BlockSpec((h3_half, d_out), lambda i: (i, 0)),        # W4 row half
        _full_spec(s4.shape),
    ]
    partials = pl.pallas_call(
        _split_decoder_kernel,
        out_shape=jax.ShapeDtypeStruct((2, bp, d_out), jnp.float32),
        grid=(2,),
        in_specs=in_specs,
        out_specs=pl.BlockSpec((1, bp, d_out), lambda i: (i, 0, 0)),
        compiler_params=pltpu.CompilerParams(
            dimension_semantics=("parallel",),
            vmem_limit_bytes=_VMEM_LIMIT),
        cost_estimate=cost,
    )(*args)
    out = jax.nn.sigmoid(partials[0] + partials[1] + b4)
    return out[:batch] if bp != batch else out


def vae_decoder_forward(params, x, split_tc=None):
    if split_tc is None:
        split_tc = _has_second_tensorcore()
    return _forward_impl(params, x, split_tc=split_tc)


# ---------------------------------------------------------------------------
# Params / reference
# ---------------------------------------------------------------------------
def init_vae_decoder_params(key, input_size, output_size):
    """Deterministic synthetic params, pre-staged for the kernel:
    weights stored (in, out) as int8 with per-output-channel f32 scales
    (symmetric quantisation), biases stored as (1, out) f32.  Computing
    x @ (W_i8 * scale) + b matches PyTorch's x @ W.T + b up to quantisation."""
    dims = [input_size, *_HIDDEN, output_size]
    params = []
    for i in range(4):
        fan_in, fan_out = dims[i], dims[i + 1]
        key, kw, kb = jax.random.split(key, 3)
        bound = 1.0 / float(fan_in) ** 0.5        # PyTorch nn.Linear init range
        w = jax.random.uniform(kw, (fan_in, fan_out), jnp.float32, -bound, bound)
        b = jax.random.uniform(kb, (fan_out,), jnp.float32, -bound, bound)
        scale = jnp.maximum(jnp.max(jnp.abs(w), axis=0, keepdims=True) / 127.0, 1e-8)
        w_i8 = jnp.clip(jnp.round(w / scale), -127, 127).astype(jnp.int8)
        params.append((w_i8, scale.astype(jnp.float32),
                       b.reshape(1, -1).astype(jnp.float32)))
    return params


def _reference_forward(params, x):
    """Pure-JAX reference using the identical int8-weight / bf16-activation /
    f32-accumulate math (self-consistent with the kernel)."""
    h = x.astype(jnp.bfloat16)
    for i, (w_i8, s, b) in enumerate(params):
        y = jnp.dot(h, w_i8.astype(jnp.bfloat16),
                    preferred_element_type=jnp.float32) * s + b
        if i < 3:
            h = jnp.maximum(y, 0.0).astype(jnp.bfloat16)
        else:
            return jax.nn.sigmoid(y)


if __name__ == "__main__":
    key = jax.random.PRNGKey(0)
    batch = 16          # >= bf16 sublane tile, per perf review
    input_size = 32     # latent dim
    output_size = 256   # decoded output dim

    kp, kx = jax.random.split(key)
    params = init_vae_decoder_params(kp, input_size, output_size)
    x = jax.random.normal(kx, (batch, input_size), jnp.float32)

    ref = _reference_forward(params, x)

    # Exercise both paths regardless of the chip generation we landed on.
    out_fused = jax.block_until_ready(vae_decoder_forward(params, x, split_tc=False))
    out_split = jax.block_until_ready(vae_decoder_forward(params, x, split_tc=True))
    out_auto = jax.block_until_ready(vae_decoder_forward(params, x))

    for out in (out_fused, out_split, out_auto):
        assert out.shape == (batch, output_size)
        assert jnp.allclose(out, ref, atol=1e-3, rtol=1e-3), "mismatch vs reference"

    # Exercise the batch-padding path (B=8 -> padded to 16 internally).
    out_small = jax.block_until_ready(vae_decoder_forward(params, x[:8], split_tc=False))
    assert out_small.shape == (8, output_size)
    assert jnp.allclose(out_small, ref[:8], atol=1e-3, rtol=1e-3), "pad-path mismatch"

    print("KERNEL_OK")
</pallas_src>

<mosaic_0001>
module attributes {stable_mosaic.version = 11 : i64} {
  func.func @_fused_decoder_kernel(%arg0: i32, %arg1: memref<16x32xf32, #tpu.memory_space<vmem>>, %arg2: memref<32x512xi8, #tpu.memory_space<vmem>>, %arg3: memref<1x512xf32, #tpu.memory_space<vmem>>, %arg4: memref<1x512xf32, #tpu.memory_space<vmem>>, %arg5: memref<512x1024xi8, #tpu.memory_space<vmem>>, %arg6: memref<1x1024xf32, #tpu.memory_space<vmem>>, %arg7: memref<1x1024xf32, #tpu.memory_space<vmem>>, %arg8: memref<1024x2048xi8, #tpu.memory_space<vmem>>, %arg9: memref<1x2048xf32, #tpu.memory_space<vmem>>, %arg10: memref<1x2048xf32, #tpu.memory_space<vmem>>, %arg11: memref<2048x256xi8, #tpu.memory_space<vmem>>, %arg12: memref<1x256xf32, #tpu.memory_space<vmem>>, %arg13: memref<1x256xf32, #tpu.memory_space<vmem>>, %arg14: memref<16x256xf32, #tpu.memory_space<vmem>>) attributes {dimension_semantics = [#tpu.dimension_semantics<arbitrary>], iteration_bounds = array<i64: 1>, scalar_prefetch = 0 : i64, scratch_operands = 0 : i64, tpu.core_type = #tpu.core_type<tc>, window_params = [{pipeline_mode = #tpu.pipeline_mode<synchronous>, transform_indices = @transform_0, window_bounds = array<i64: 16, 32>}, {pipeline_mode = #tpu.pipeline_mode<synchronous>, transform_indices = @transform_1, window_bounds = array<i64: 32, 512>}, {pipeline_mode = #tpu.pipeline_mode<synchronous>, transform_indices = @transform_2, window_bounds = array<i64: 1, 512>}, {pipeline_mode = #tpu.pipeline_mode<synchronous>, transform_indices = @transform_3, window_bounds = array<i64: 1, 512>}, {pipeline_mode = #tpu.pipeline_mode<synchronous>, transform_indices = @transform_4, window_bounds = array<i64: 512, 1024>}, {pipeline_mode = #tpu.pipeline_mode<synchronous>, transform_indices = @transform_5, window_bounds = array<i64: 1, 1024>}, {pipeline_mode = #tpu.pipeline_mode<synchronous>, transform_indices = @transform_6, window_bounds = array<i64: 1, 1024>}, {pipeline_mode = #tpu.pipeline_mode<synchronous>, transform_indices = @transform_7, window_bounds = array<i64: 1024, 2048>}, {pipeline_mode = #tpu.pipeline_mode<synchronous>, transform_indices = @transform_8, window_bounds = array<i64: 1, 2048>}, {pipeline_mode = #tpu.pipeline_mode<synchronous>, transform_indices = @transform_9, window_bounds = array<i64: 1, 2048>}, {pipeline_mode = #tpu.pipeline_mode<synchronous>, transform_indices = @transform_10, window_bounds = array<i64: 2048, 256>}, {pipeline_mode = #tpu.pipeline_mode<synchronous>, transform_indices = @transform_11, window_bounds = array<i64: 1, 256>}, {pipeline_mode = #tpu.pipeline_mode<synchronous>, transform_indices = @transform_12, window_bounds = array<i64: 1, 256>}, {pipeline_mode = #tpu.pipeline_mode<synchronous>, transform_indices = @transform_13, window_bounds = array<i64: 16, 256>}]} {
    %c0 = arith.constant 0 : index
    %c0_0 = arith.constant 0 : index
    %0 = vector.load %arg1[%c0, %c0_0] : memref<16x32xf32, #tpu.memory_space<vmem>>, vector<16x32xf32>
    %1 = arith.truncf %0 : vector<16x32xf32> to vector<16x32xbf16>
    %c0_1 = arith.constant 0 : index
    %c0_2 = arith.constant 0 : index
    %2 = vector.load %arg2[%c0_1, %c0_2] : memref<32x512xi8, #tpu.memory_space<vmem>>, vector<32x512xi8>
    %3 = arith.sitofp %2 : vector<32x512xi8> to vector<32x512xbf16>
    %cst = arith.constant dense<0.000000e+00> : vector<16x512xf32>
    %4 = tpu.matmul %1, %3, %cst {dimension_numbers = #tpu.dot_dimension_numbers<[1], [0], [0], [1], [0, 0, 1, 1], [], []>} : vector<16x32xbf16>, vector<32x512xbf16>, vector<16x512xf32> -> vector<16x512xf32>
    %c0_3 = arith.constant 0 : index
    %c0_4 = arith.constant 0 : index
    %5 = vector.load %arg3[%c0_3, %c0_4] : memref<1x512xf32, #tpu.memory_space<vmem>>, vector<1x512xf32>
    %6 = vector.broadcast %5 : vector<1x512xf32> to vector<16x512xf32>
    %7 = arith.mulf %4, %6 : vector<16x512xf32>
    %c0_5 = arith.constant 0 : index
    %c0_6 = arith.constant 0 : index
    %8 = vector.load %arg4[%c0_5, %c0_6] : memref<1x512xf32, #tpu.memory_space<vmem>>, vector<1x512xf32>
    %9 = vector.broadcast %8 : vector<1x512xf32> to vector<16x512xf32>
    %10 = arith.addf %7, %9 : vector<16x512xf32>
    %cst_7 = arith.constant 0.000000e+00 : f32
    %11 = vector.broadcast %cst_7 : f32 to vector<16x512xf32>
    %12 = arith.maximumf %10, %11 : vector<16x512xf32>
    %13 = arith.truncf %12 : vector<16x512xf32> to vector<16x512xbf16>
    %c0_8 = arith.constant 0 : index
    %c0_9 = arith.constant 0 : index
    %14 = vector.load %arg5[%c0_8, %c0_9] : memref<512x1024xi8, #tpu.memory_space<vmem>>, vector<512x1024xi8>
    %15 = arith.sitofp %14 : vector<512x1024xi8> to vector<512x1024xbf16>
    %cst_10 = arith.constant dense<0.000000e+00> : vector<16x1024xf32>
    %16 = tpu.matmul %13, %15, %cst_10 {dimension_numbers = #tpu.dot_dimension_numbers<[1], [0], [0], [1], [0, 0, 1, 1], [], []>} : vector<16x512xbf16>, vector<512x1024xbf16>, vector<16x1024xf32> -> vector<16x1024xf32>
    %c0_11 = arith.constant 0 : index
    %c0_12 = arith.constant 0 : index
    %17 = vector.load %arg6[%c0_11, %c0_12] : memref<1x1024xf32, #tpu.memory_space<vmem>>, vector<1x1024xf32>
    %18 = vector.broadcast %17 : vector<1x1024xf32> to vector<16x1024xf32>
    %19 = arith.mulf %16, %18 : vector<16x1024xf32>
    %c0_13 = arith.constant 0 : index
    %c0_14 = arith.constant 0 : index
    %20 = vector.load %arg7[%c0_13, %c0_14] : memref<1x1024xf32, #tpu.memory_space<vmem>>, vector<1x1024xf32>
    %21 = vector.broadcast %20 : vector<1x1024xf32> to vector<16x1024xf32>
    %22 = arith.addf %19, %21 : vector<16x1024xf32>
    %cst_15 = arith.constant 0.000000e+00 : f32
    %23 = vector.broadcast %cst_15 : f32 to vector<16x1024xf32>
    %24 = arith.maximumf %22, %23 : vector<16x1024xf32>
    %25 = arith.truncf %24 : vector<16x1024xf32> to vector<16x1024xbf16>
    %c0_16 = arith.constant 0 : index
    %c0_17 = arith.constant 0 : index
    %26 = vector.load %arg8[%c0_16, %c0_17] : memref<1024x2048xi8, #tpu.memory_space<vmem>>, vector<1024x2048xi8>
    %27 = arith.sitofp %26 : vector<1024x2048xi8> to vector<1024x2048xbf16>
    %cst_18 = arith.constant dense<0.000000e+00> : vector<16x2048xf32>
    %28 = tpu.matmul %25, %27, %cst_18 {dimension_numbers = #tpu.dot_dimension_numbers<[1], [0], [0], [1], [0, 0, 1, 1], [], []>} : vector<16x1024xbf16>, vector<1024x2048xbf16>, vector<16x2048xf32> -> vector<16x2048xf32>
    %c0_19 = arith.constant 0 : index
    %c0_20 = arith.constant 0 : index
    %29 = vector.load %arg9[%c0_19, %c0_20] : memref<1x2048xf32, #tpu.memory_space<vmem>>, vector<1x2048xf32>
    %30 = vector.broadcast %29 : vector<1x2048xf32> to vector<16x2048xf32>
    %31 = arith.mulf %28, %30 : vector<16x2048xf32>
    %c0_21 = arith.constant 0 : index
    %c0_22 = arith.constant 0 : index
    %32 = vector.load %arg10[%c0_21, %c0_22] : memref<1x2048xf32, #tpu.memory_space<vmem>>, vector<1x2048xf32>
    %33 = vector.broadcast %32 : vector<1x2048xf32> to vector<16x2048xf32>
    %34 = arith.addf %31, %33 : vector<16x2048xf32>
    %cst_23 = arith.constant 0.000000e+00 : f32
    %35 = vector.broadcast %cst_23 : f32 to vector<16x2048xf32>
    %36 = arith.maximumf %34, %35 : vector<16x2048xf32>
    %37 = arith.truncf %36 : vector<16x2048xf32> to vector<16x2048xbf16>
    %c0_24 = arith.constant 0 : index
    %c0_25 = arith.constant 0 : index
    %38 = vector.load %arg11[%c0_24, %c0_25] : memref<2048x256xi8, #tpu.memory_space<vmem>>, vector<2048x256xi8>
    %39 = arith.sitofp %38 : vector<2048x256xi8> to vector<2048x256xbf16>
    %cst_26 = arith.constant dense<0.000000e+00> : vector<16x256xf32>
    %40 = tpu.matmul %37, %39, %cst_26 {dimension_numbers = #tpu.dot_dimension_numbers<[1], [0], [0], [1], [0, 0, 1, 1], [], []>} : vector<16x2048xbf16>, vector<2048x256xbf16>, vector<16x256xf32> -> vector<16x256xf32>
    %c0_27 = arith.constant 0 : index
    %c0_28 = arith.constant 0 : index
    %41 = vector.load %arg12[%c0_27, %c0_28] : memref<1x256xf32, #tpu.memory_space<vmem>>, vector<1x256xf32>
    %42 = vector.broadcast %41 : vector<1x256xf32> to vector<16x256xf32>
    %43 = arith.mulf %40, %42 : vector<16x256xf32>
    %c0_29 = arith.constant 0 : index
    %c0_30 = arith.constant 0 : index
    %44 = vector.load %arg13[%c0_29, %c0_30] : memref<1x256xf32, #tpu.memory_space<vmem>>, vector<1x256xf32>
    %45 = vector.broadcast %44 : vector<1x256xf32> to vector<16x256xf32>
    %46 = arith.addf %43, %45 : vector<16x256xf32>
    %47 = arith.negf %46 : vector<16x256xf32>
    %48 = math.exp %47 : vector<16x256xf32>
    %cst_31 = arith.constant 1.000000e+00 : f32
    %49 = vector.broadcast %cst_31 : f32 to vector<16x256xf32>
    %50 = arith.addf %49, %48 : vector<16x256xf32>
    %51 = arith.divf %49, %50 : vector<16x256xf32>
    %c0_32 = arith.constant 0 : index
    %c0_33 = arith.constant 0 : index
    %52 = vector.load %arg14[%c0_32, %c0_33] : memref<16x256xf32, #tpu.memory_space<vmem>>, vector<16x256xf32>
    tpu.vector_store %arg14[%c0_32, %c0_33], %51 {strides = array<i32>} : memref<16x256xf32, #tpu.memory_space<vmem>>, vector<16x256xf32>,
    return
  }
  func.func @transform_0(%arg0: i32) -> (i32, i32) {
    %c0_i32 = arith.constant 0 : i32
    %c0_i32_0 = arith.constant 0 : i32
    %c0_i32_1 = arith.constant 0 : i32
    return %c0_i32, %c0_i32_0 : i32, i32
  }
  func.func @transform_1(%arg0: i32) -> (i32, i32) {
    %c0_i32 = arith.constant 0 : i32
    %c0_i32_0 = arith.constant 0 : i32
    %c0_i32_1 = arith.constant 0 : i32
    return %c0_i32, %c0_i32_0 : i32, i32
  }
  func.func @transform_2(%arg0: i32) -> (i32, i32) {
    %c0_i32 = arith.constant 0 : i32
    %c0_i32_0 = arith.constant 0 : i32
    %c0_i32_1 = arith.constant 0 : i32
    return %c0_i32, %c0_i32_0 : i32, i32
  }
  func.func @transform_3(%arg0: i32) -> (i32, i32) {
    %c0_i32 = arith.constant 0 : i32
    %c0_i32_0 = arith.constant 0 : i32
    %c0_i32_1 = arith.constant 0 : i32
    return %c0_i32, %c0_i32_0 : i32, i32
  }
  func.func @transform_4(%arg0: i32) -> (i32, i32) {
    %c0_i32 = arith.constant 0 : i32
    %c0_i32_0 = arith.constant 0 : i32
    %c0_i32_1 = arith.constant 0 : i32
    return %c0_i32, %c0_i32_0 : i32, i32
  }
  func.func @transform_5(%arg0: i32) -> (i32, i32) {
    %c0_i32 = arith.constant 0 : i32
    %c0_i32_0 = arith.constant 0 : i32
    %c0_i32_1 = arith.constant 0 : i32
    return %c0_i32, %c0_i32_0 : i32, i32
  }
  func.func @transform_6(%arg0: i32) -> (i32, i32) {
    %c0_i32 = arith.constant 0 : i32
    %c0_i32_0 = arith.constant 0 : i32
    %c0_i32_1 = arith.constant 0 : i32
    return %c0_i32, %c0_i32_0 : i32, i32
  }
  func.func @transform_7(%arg0: i32) -> (i32, i32) {
    %c0_i32 = arith.constant 0 : i32
    %c0_i32_0 = arith.constant 0 : i32
    %c0_i32_1 = arith.constant 0 : i32
    return %c0_i32, %c0_i32_0 : i32, i32
  }
  func.func @transform_8(%arg0: i32) -> (i32, i32) {
    %c0_i32 = arith.constant 0 : i32
    %c0_i32_0 = arith.constant 0 : i32
    %c0_i32_1 = arith.constant 0 : i32
    return %c0_i32, %c0_i32_0 : i32, i32
  }
  func.func @transform_9(%arg0: i32) -> (i32, i32) {
    %c0_i32 = arith.constant 0 : i32
    %c0_i32_0 = arith.constant 0 : i32
    %c0_i32_1 = arith.constant 0 : i32
    return %c0_i32, %c0_i32_0 : i32, i32
  }
  func.func @transform_10(%arg0: i32) -> (i32, i32) {
    %c0_i32 = arith.constant 0 : i32
    %c0_i32_0 = arith.constant 0 : i32
    %c0_i32_1 = arith.constant 0 : i32
    return %c0_i32, %c0_i32_0 : i32, i32
  }
  func.func @transform_11(%arg0: i32) -> (i32, i32) {
    %c0_i32 = arith.constant 0 : i32
    %c0_i32_0 = arith.constant 0 : i32
    %c0_i32_1 = arith.constant 0 : i32
    return %c0_i32, %c0_i32_0 : i32, i32
  }
  func.func @transform_12(%arg0: i32) -> (i32, i32) {
    %c0_i32 = arith.constant 0 : i32
    %c0_i32_0 = arith.constant 0 : i32
    %c0_i32_1 = arith.constant 0 : i32
    return %c0_i32, %c0_i32_0 : i32, i32
  }
  func.func @transform_13(%arg0: i32) -> (i32, i32) {
    %c0_i32 = arith.constant 0 : i32
    %c0_i32_0 = arith.constant 0 : i32
    %c0_i32_1 = arith.constant 0 : i32
    return %c0_i32, %c0_i32_0 : i32, i32
  }
}

</mosaic_0001>

<llo_original>
// kernel: _forward_impl.1
$region0: #{_forward_impl.1}
  #allocation0 [shape = 'u32[]', space=smem, size = 0x4, offset = 0x4, fixed_abs, tag = 'smem constant byte address 0x4 - core index']
  #allocation1 [shape = 'u32[144,128]{1,0:T(1,128)}', space=vmem, size = 0x12000, scoped, tag = 'internal scratch']
  %s0 = inlined_call_operand.hbm [shape: f32[16,32], index: 0, kind: input, shape index: {}]
  %s1 = inlined_call_operand.hbm [shape: s8[32,512], index: 1, kind: input, shape index: {}]
  %s2 = inlined_call_operand.hbm [shape: f32[1,512], index: 2, kind: input, shape index: {}]
  %s3 = inlined_call_operand.hbm [shape: f32[1,512], index: 3, kind: input, shape index: {}]
  %s4 = inlined_call_operand.hbm [shape: s8[512,1024], index: 4, kind: input, shape index: {}]
  %s5 = inlined_call_operand.hbm [shape: f32[1,1024], index: 5, kind: input, shape index: {}]
  %s6 = inlined_call_operand.hbm [shape: f32[1,1024], index: 6, kind: input, shape index: {}]
  %s7 = inlined_call_operand.hbm [shape: s8[1024,2048], index: 7, kind: input, shape index: {}]
  %s8 = inlined_call_operand.hbm [shape: f32[1,2048], index: 8, kind: input, shape index: {}]
  %s9 = inlined_call_operand.hbm [shape: f32[1,2048], index: 9, kind: input, shape index: {}]
  %s10 = inlined_call_operand.hbm [shape: s8[2048,256], index: 10, kind: input, shape index: {}]
  %s11 = inlined_call_operand.hbm [shape: f32[1,256], index: 11, kind: input, shape index: {}]
  %s12 = inlined_call_operand.hbm [shape: f32[1,256], index: 12, kind: input, shape index: {}]
  %s13 = inlined_call_operand.hbm [shape: f32[16,256], index: 13, kind: output, shape index: {}]
  %s14 = sld [smem:[#allocation0]]
  $region114: #{_forward_impl.1} parent=0
    _
  %s16 = ssub.s32 1, %s14
  %s17 = scalar_select 0, %s16, %s14
  $region1: #{_forward_impl.1} parent=0
    #allocation2 [shape = 'u8[8192]{0}', space=vmem, size = 0x2000, scoped, tag = 'input window, operand 0, single buffered']
    #allocation3 [shape = 's32[1]{0}', space=sflag, size = 0x4, scoped, tag = 'scoped memory for _forward_impl.1']
    #allocation4 [shape = 's32[1]{0}', space=sflag, size = 0x4, scoped, tag = 'scoped memory for _forward_impl.1']
    #allocation5 [shape = 'u8[16384]{0}', space=vmem, size = 0x4000, scoped, tag = 'input window, operand 1, single buffered']
    #allocation6 [shape = 's32[1]{0}', space=sflag, size = 0x4, scoped, tag = 'scoped memory for _forward_impl.1']
    #allocation7 [shape = 'u8[2048]{0}', space=vmem, size = 0x800, scoped, tag = 'input window, operand 2, single buffered']
    #allocation8 [shape = 'u8[2048]{0}', space=vmem, size = 0x800, scoped, tag = 'input window, operand 3, single buffered']
    #allocation9 [shape = 's32[1]{0}', space=sflag, size = 0x4, scoped, tag = 'scoped memory for _forward_impl.1']
    #allocation10 [shape = 'u8[524288]{0}', space=vmem, size = 0x80000, scoped, tag = 'input window, operand 4, single buffered']
    #allocation11 [shape = 'u8[4096]{0}', space=vmem, size = 0x1000, scoped, tag = 'input window, operand 5, single buffered']
    #allocation12 [shape = 's32[1]{0}', space=sflag, size = 0x4, scoped, tag = 'scoped memory for _forward_impl.1']
    #allocation13 [shape = 'u8[4096]{0}', space=vmem, size = 0x1000, scoped, tag = 'input window, operand 6, single buffered']
    #allocation14 [shape = 'u8[2097152]{0}', space=vmem, size = 0x200000, scoped, tag = 'input window, operand 7, single buffered']
    #allocation15 [shape = 's32[1]{0}', space=sflag, size = 0x4, scoped, tag = 'scoped memory for _forward_impl.1']
    #allocation16 [shape = 'u8[8192]{0}', space=vmem, size = 0x2000, scoped, tag = 'input window, operand 8, single buffered']
    #allocation17 [shape = 'u8[8192]{0}', space=vmem, size = 0x2000, scoped, tag = 'input window, operand 9, single buffered']
    #allocation18 [shape = 's32[1]{0}', space=sflag, size = 0x4, scoped, tag = 'scoped memory for _forward_impl.1']
    #allocation19 [shape = 'u8[524288]{0}', space=vmem, size = 0x80000, scoped, tag = 'input window, operand 10, single buffered']
    #allocation20 [shape = 'u8[1024]{0}', space=vmem, size = 0x400, scoped, tag = 'input window, operand 11, single buffered']
    #allocation21 [shape = 's32[1]{0}', space=sflag, size = 0x4, scoped, tag = 'scoped memory for _forward_impl.1']
    #allocation22 [shape = 'u8[1024]{0}', space=vmem, size = 0x400, scoped, tag = 'input window, operand 12, single buffered']
    #allocation23 [shape = 'u8[16384]{0}', space=vmem, size = 0x4000, scoped, tag = 'output window, operand 0, single buffered']
    %18 = vsyncpa [#allocation3], 0
    %19 = vsyncpa [#allocation6], 0
    %20 = vsyncpa [#allocation9], 0
    %21 = vsyncpa [#allocation12], 0
    %22 = vsyncpa [#allocation15], 0
    %23 = vsyncpa [#allocation18], 0
    %24 = vsyncpa [#allocation21], 0
    %25 = vsyncpa [#allocation4], 0
    // Predicated region
    $region2: #{_forward_impl.1} parent=1 // pred_check
      _
    $region3: #{_forward_impl.1} parent=1 // pred_check_branch
      %27 = sbr.rel (0) target = $region5
    $region4: #{_forward_impl.1} parent=1 // pred_region
      %s29 = ssub.s32 256, 256
      %30 = vsyncadd [#allocation3], %s29
      %s31 = sshll.u32 [#allocation2], 4
      %s32 = int_to_ptr.vmem [resolvable:$true] %s31
      %37 = dma.hbm_to_vmem [thread:$0]  %s0, 256, %s32, [#allocation3], 128, 128, 8
    $region5: #{_forward_impl.1} parent=1 // pred_fallthru
      _
    // Predicated region
    $region6: #{_forward_impl.1} parent=1 // pred_check
      _
    $region7: #{_forward_impl.1} parent=1 // pred_check_branch
      %39 = sbr.rel (0) target = $region9
    $region8: #{_forward_impl.1} parent=1 // pred_region
      %s41 = ssub.s32 512, 512
      %42 = vsyncadd [#allocation6], %s41
      %s44 = sshll.u32 [#allocation5], 4
      %s45 = int_to_ptr.vmem [resolvable:$true] %s44
      %47 = dma.hbm_to_vmem [thread:$0]  %s1, 512, %s45, [#allocation6]
    $region9: #{_forward_impl.1} parent=1 // pred_fallthru
      _
    // Predicated region
    $region10: #{_forward_impl.1} parent=1 // pred_check
      _
    $region11: #{_forward_impl.1} parent=1 // pred_check_branch
      %49 = sbr.rel (0) target = $region13
    $region12: #{_forward_impl.1} parent=1 // pred_region
      %s51 = ssub.s32 64, 64
      %52 = vsyncadd [#allocation6], %s51
      %s54 = sshll.u32 [#allocation7], 4
      %s55 = int_to_ptr.vmem [resolvable:$true] %s54
      %57 = dma.hbm_to_vmem [thread:$0]  %s2, 64, %s55, [#allocation6]
    $region13: #{_forward_impl.1} parent=1 // pred_fallthru
      _
    // Predicated region
    $region14: #{_forward_impl.1} parent=1 // pred_check
      _
    $region15: #{_forward_impl.1} parent=1 // pred_check_branch
      %59 = sbr.rel (0) target = $region17
    $region16: #{_forward_impl.1} parent=1 // pred_region
      %s61 = ssub.s32 64, 64
      %62 = vsyncadd [#allocation9], %s61
      %s64 = sshll.u32 [#allocation8], 4
      %s65 = int_to_ptr.vmem [resolvable:$true] %s64
      %67 = dma.hbm_to_vmem [thread:$0]  %s3, 64, %s65, [#allocation9]
    $region17: #{_forward_impl.1} parent=1 // pred_fallthru
      _
    // Predicated region
    $region18: #{_forward_impl.1} parent=1 // pred_check
      _
    $region19: #{_forward_impl.1} parent=1 // pred_check_branch
      %69 = sbr.rel (0) target = $region21
    $region20: #{_forward_impl.1} parent=1 // pred_region
      %s71 = ssub.s32 16384, 16384
      %72 = vsyncadd [#allocation9], %s71
      %s73 = sshll.u32 [#allocation10], 4
      %s74 = int_to_ptr.vmem [resolvable:$true] %s73
      %79 = dma.hbm_to_vmem [thread:$0]  %s4, 16384, %s74, [#allocation9], 1024, 1024, 64
    $region21: #{_forward_impl.1} parent=1 // pred_fallthru
      _
    // Predicated region
    $region22: #{_forward_impl.1} parent=1 // pred_check
      _
    $region23: #{_forward_impl.1} parent=1 // pred_check_branch
      %81 = sbr.rel (0) target = $region25
    $region24: #{_forward_impl.1} parent=1 // pred_region
      %s83 = ssub.s32 128, 128
      %84 = vsyncadd [#allocation12], %s83
      %s86 = sshll.u32 [#allocation11], 4
      %s87 = int_to_ptr.vmem [resolvable:$true] %s86
      %89 = dma.hbm_to_vmem [thread:$0]  %s5, 128, %s87, [#allocation12]
    $region25: #{_forward_impl.1} parent=1 // pred_fallthru
      _
    // Predicated region
    $region26: #{_forward_impl.1} parent=1 // pred_check
      _
    $region27: #{_forward_impl.1} parent=1 // pred_check_branch
      %91 = sbr.rel (0) target = $region29
    $region28: #{_forward_impl.1} parent=1 // pred_region
      %s93 = ssub.s32 128, 128
      %94 = vsyncadd [#allocation12], %s93
      %s96 = sshll.u32 [#allocation13], 4
      %s97 = int_to_ptr.vmem [resolvable:$true] %s96
      %99 = dma.hbm_to_vmem [thread:$0]  %s6, 128, %s97, [#allocation12]
    $region29: #{_forward_impl.1} parent=1 // pred_fallthru
      _
    // Predicated region
    $region30: #{_forward_impl.1} parent=1 // pred_check
      _
    $region31: #{_forward_impl.1} parent=1 // pred_check_branch
      %101 = sbr.rel (0) target = $region33
    $region32: #{_forward_impl.1} parent=1 // pred_region
      %s103 = ssub.s32 65536, 65536
      %104 = vsyncadd [#allocation15], %s103
      %s105 = sshll.u32 [#allocation14], 4
      %s106 = int_to_ptr.vmem [resolvable:$true] %s105
      %111 = dma.hbm_to_vmem [thread:$0]  %s7, 65536, %s106, [#allocation15], 2048, 2048, 128
    $region33: #{_forward_impl.1} parent=1 // pred_fallthru
      _
    // Predicated region
    $region34: #{_forward_impl.1} parent=1 // pred_check
      _
    $region35: #{_forward_impl.1} parent=1 // pred_check_branch
      %113 = sbr.rel (0) target = $region37
    $region36: #{_forward_impl.1} parent=1 // pred_region
      %s115 = ssub.s32 256, 256
      %116 = vsyncadd [#allocation15], %s115
      %s118 = sshll.u32 [#allocation16], 4
      %s119 = int_to_ptr.vmem [resolvable:$true] %s118
      %121 = dma.hbm_to_vmem [thread:$0]  %s8, 256, %s119, [#allocation15]
    $region37: #{_forward_impl.1} parent=1 // pred_fallthru
      _
    // Predicated region
    $region38: #{_forward_impl.1} parent=1 // pred_check
      _
    $region39: #{_forward_impl.1} parent=1 // pred_check_branch
      %123 = sbr.rel (0) target = $region41
    $region40: #{_forward_impl.1} parent=1 // pred_region
      %s125 = ssub.s32 256, 256
      %126 = vsyncadd [#allocation18], %s125
      %s128 = sshll.u32 [#allocation17], 4
      %s129 = int_to_ptr.vmem [resolvable:$true] %s128
      %131 = dma.hbm_to_vmem [thread:$0]  %s9, 256, %s129, [#allocation18]
    $region41: #{_forward_impl.1} parent=1 // pred_fallthru
      _
    // Predicated region
    $region42: #{_forward_impl.1} parent=1 // pred_check
      _
    $region43: #{_forward_impl.1} parent=1 // pred_check_branch
      %133 = sbr.rel (0) target = $region45
    $region44: #{_forward_impl.1} parent=1 // pred_region
      %s135 = ssub.s32 16384, 16384
      %136 = vsyncadd [#allocation18], %s135
      %s137 = sshll.u32 [#allocation19], 4
      %s138 = int_to_ptr.vmem [resolvable:$true] %s137
      %143 = dma.hbm_to_vmem [thread:$0]  %s10, 16384, %s138, [#allocation18], 256, 256, 16
    $region45: #{_forward_impl.1} parent=1 // pred_fallthru
      _
    // Predicated region
    $region46: #{_forward_impl.1} parent=1 // pred_check
      _
    $region47: #{_forward_impl.1} parent=1 // pred_check_branch
      %145 = sbr.rel (0) target = $region49
    $region48: #{_forward_impl.1} parent=1 // pred_region
      %s147 = ssub.s32 32, 32
      %148 = vsyncadd [#allocation21], %s147
      %s150 = sshll.u32 [#allocation20], 4
      %s151 = int_to_ptr.vmem [resolvable:$true] %s150
      %153 = dma.hbm_to_vmem [thread:$0]  %s11, 32, %s151, [#allocation21]
    $region49: #{_forward_impl.1} parent=1 // pred_fallthru
      _
    // Predicated region
    $region50: #{_forward_impl.1} parent=1 // pred_check
      _
    $region51: #{_forward_impl.1} parent=1 // pred_check_branch
      %155 = sbr.rel (0) target = $region53
    $region52: #{_forward_impl.1} parent=1 // pred_region
      %s157 = ssub.s32 32, 32
      %158 = vsyncadd [#allocation21], %s157
      %s160 = sshll.u32 [#allocation22], 4
      %s161 = int_to_ptr.vmem [resolvable:$true] %s160
      %163 = dma.hbm_to_vmem [thread:$0]  %s12, 32, %s161, [#allocation21]
    $region53: #{_forward_impl.1} parent=1 // pred_fallthru
      _
    // Predicated region
    $region54: #{_forward_impl.1} parent=1 // pred_check
      _
    $region55: #{_forward_impl.1} parent=1 // pred_check_branch
      %165 = sbr.rel (0) target = $region57
    $region56: #{_forward_impl.1} parent=1 // pred_region
      %166 = dma.done [#allocation3], 256
    $region57: #{_forward_impl.1} parent=1 // pred_fallthru
      _
    // Predicated region
    $region58: #{_forward_impl.1} parent=1 // pred_check
      _
    $region59: #{_forward_impl.1} parent=1 // pred_check_branch
      %168 = sbr.rel (0) target = $region61
    $region60: #{_forward_impl.1} parent=1 // pred_region
      %169 = dma.done [#allocation6], 512
    $region61: #{_forward_impl.1} parent=1 // pred_fallthru
      _
    // Predicated region
    $region62: #{_forward_impl.1} parent=1 // pred_check
      _
    $region63: #{_forward_impl.1} parent=1 // pred_check_branch
      %171 = sbr.rel (0) target = $region65
    $region64: #{_forward_impl.1} parent=1 // pred_region
      %172 = dma.done [#allocation6], 64
    $region65: #{_forward_impl.1} parent=1 // pred_fallthru
      _
    // Predicated region
    $region66: #{_forward_impl.1} parent=1 // pred_check
      _
    $region67: #{_forward_impl.1} parent=1 // pred_check_branch
      %174 = sbr.rel (0) target = $region69
    $region68: #{_forward_impl.1} parent=1 // pred_region
      %175 = dma.done [#allocation9], 64
    $region69: #{_forward_impl.1} parent=1 // pred_fallthru
      _
    // Predicated region
    $region70: #{_forward_impl.1} parent=1 // pred_check
      _
    $region71: #{_forward_impl.1} parent=1 // pred_check_branch
      %177 = sbr.rel (0) target = $region73
    $region72: #{_forward_impl.1} parent=1 // pred_region
      %178 = dma.done [#allocation9], 16384
    $region73: #{_forward_impl.1} parent=1 // pred_fallthru
      _
    // Predicated region
    $region74: #{_forward_impl.1} parent=1 // pred_check
      _
    $region75: #{_forward_impl.1} parent=1 // pred_check_branch
      %180 = sbr.rel (0) target = $region77
    $region76: #{_forward_impl.1} parent=1 // pred_region
      %181 = dma.done [#allocation12], 128
    $region77: #{_forward_impl.1} parent=1 // pred_fallthru
      _
    // Predicated region
    $region78: #{_forward_impl.1} parent=1 // pred_check
      _
    $region79: #{_forward_impl.1} parent=1 // pred_check_branch
      %183 = sbr.rel (0) target = $region81
    $region80: #{_forward_impl.1} parent=1 // pred_region
      %184 = dma.done [#allocation12], 128
    $region81: #{_forward_impl.1} parent=1 // pred_fallthru
      _
    // Predicated region
    $region82: #{_forward_impl.1} parent=1 // pred_check
      _
    $region83: #{_forward_impl.1} parent=1 // pred_check_branch
      %186 = sbr.rel (0) target = $region85
    $region84: #{_forward_impl.1} parent=1 // pred_region
      %187 = dma.done [#allocation15], 65536
    $region85: #{_forward_impl.1} parent=1 // pred_fallthru
      _
    // Predicated region
    $region86: #{_forward_impl.1} parent=1 // pred_check
      _
    $region87: #{_forward_impl.1} parent=1 // pred_check_branch
      %189 = sbr.rel (0) target = $region89
    $region88: #{_forward_impl.1} parent=1 // pred_region
      %190 = dma.done [#allocation15], 256
    $region89: #{_forward_impl.1} parent=1 // pred_fallthru
      _
    // Predicated region
    $region90: #{_forward_impl.1} parent=1 // pred_check
      _
    $region91: #{_forward_impl.1} parent=1 // pred_check_branch
      %192 = sbr.rel (0) target = $region93
    $region92: #{_forward_impl.1} parent=1 // pred_region
      %193 = dma.done [#allocation18], 256
    $region93: #{_forward_impl.1} parent=1 // pred_fallthru
      _
    // Predicated region
    $region94: #{_forward_impl.1} parent=1 // pred_check
      _
    $region95: #{_forward_impl.1} parent=1 // pred_check_branch
      %195 = sbr.rel (0) target = $region97
    $region96: #{_forward_impl.1} parent=1 // pred_region
      %196 = dma.done [#allocation18], 16384
    $region97: #{_forward_impl.1} parent=1 // pred_fallthru
      _
    // Predicated region
    $region98: #{_forward_impl.1} parent=1 // pred_check
      _
    $region99: #{_forward_impl.1} parent=1 // pred_check_branch
      %198 = sbr.rel (0) target = $region101
    $region100: #{_forward_impl.1} parent=1 // pred_region
      %199 = dma.done [#allocation21], 32
    $region101: #{_forward_impl.1} parent=1 // pred_fallthru
      _
    // Predicated region
    $region102: #{_forward_impl.1} parent=1 // pred_check
      _
    $region103: #{_forward_impl.1} parent=1 // pred_check_branch
      %201 = sbr.rel (0) target = $region105
    $region104: #{_forward_impl.1} parent=1 // pred_region
      %202 = dma.done [#allocation21], 32
    $region105: #{_forward_impl.1} parent=1 // pred_fallthru
      _
    %v204 = vld [vmem:[#allocation2] sm:$0xff]
    %v205 = vld [vmem:[#allocation2 + $0x8] sm:$0xff]
    %v206 = vpack.c.bf16 %v205, %v204
    %v207 = vld [vmem:[#allocation5] sm:$0xff]
    %v208 = vld [vmem:[#allocation5 + $0x8] sm:$0xff]
    %v209 = vld [vmem:[#allocation5 + $0x10] sm:$0xff]
    %v210 = vld [vmem:[#allocation5 + $0x18] sm:$0xff]
    %v211 = vunpack.c.l.s8.bf16 %v207
    %v212 = vunpack.c.l.s8.bf16 %v208
    %v213 = vunpack.c.l.s8.bf16 %v209
    %v214 = vunpack.c.l.s8.bf16 %v210
    %v215 = vunpack.c.h.s8.bf16 %v207
    %v216 = vunpack.c.h.s8.bf16 %v208
    %v217 = vunpack.c.h.s8.bf16 %v209
    %v218 = vunpack.c.h.s8.bf16 %v210
    %vm219 = vcmask 261120
    %v221 = vsel %vm219, %v206, 0
    %223 = vmatprep.subr.bf16.mxu0 0
    %224 = vmatpush1.bf16.msra.mxu0 0
    %225 = vmatprep.subr.bf16.mxu0 0
    %226 = vmatpush1.bf16.msra.mxu0 0
    %227 = vmatprep.subr.bf16.mxu0 0
    %228 = vmatpush1.bf16.msra.mxu0 0
    %229 = vmatprep.subr.bf16.mxu0 0
    %230 = vmatpush1.bf16.msra.mxu0 0
    %231 = vmatprep.subr.bf16.mxu0 0
    %232 = vmatpush1.bf16.msra.mxu0 0
    %233 = vmatprep.subr.bf16.mxu0 0
    %234 = vmatpush1.bf16.msra.mxu0 0
    %235 = vmatprep.subr.bf16.mxu0 %v216
    %236 = vmatpush1.bf16.msra.mxu0 %v215
    %237 = vmatprep.subr.bf16.mxu0 %v212
    %238 = vmatpush1.bf16.msra.mxu0 %v211
    %239 = vmatprep.subr.bf16.mxu0 0
    %240 = vmatpush2.bf16.msra.mxu0 0
    %241 = vmatprep.subr.bf16.mxu0 0
    %242 = vmatpush2.bf16.msra.mxu0 0
    %243 = vmatprep.subr.bf16.mxu0 0
    %244 = vmatpush2.bf16.msra.mxu0 0
    %245 = vmatprep.subr.bf16.mxu0 0
    %246 = vmatpush2.bf16.msra.mxu0 0
    %247 = vmatprep.subr.bf16.mxu0 0
    %248 = vmatpush2.bf16.msra.mxu0 0
    %249 = vmatprep.subr.bf16.mxu0 0
    %250 = vmatpush2.bf16.msra.mxu0 0
    %251 = vmatprep.subr.bf16.mxu0 0
    %252 = vmatpush2.bf16.msra.mxu0 0
    %253 = vmatprep.subr.bf16.mxu0 0
    %254 = vmatpush2.bf16.msra.mxu0 0
    %255 = vmatprep.mubr.bf16.mxu0 0
    %256 = vmatmul.mubr.bf16.gmra.mxu0 %v221
    %v257 = vpop.f32.mrf.mxu0
    %v258 = vadd.f32 0.0, %v257
    %v259 = vpop.f32.mrf.mxu0
    %v260 = vadd.f32 0.0, %v259
    %v261 = vpop.f32.mrf.mxu0
    %v262 = vadd.f32 0.0, %v261
    %v263 = vpop.f32.mrf.mxu0
    %v264 = vadd.f32 0.0, %v263
    %265 = vdwg.mxu0
    %266 = vmatprep.subr.bf16.mxu0 0
    %267 = vmatpush1.bf16.msra.mxu0 0
    %268 = vmatprep.subr.bf16.mxu0 0
    %269 = vmatpush1.bf16.msra.mxu0 0
    %270 = vmatprep.subr.bf16.mxu0 0
    %271 = vmatpush1.bf16.msra.mxu0 0
    %272 = vmatprep.subr.bf16.mxu0 0
    %273 = vmatpush1.bf16.msra.mxu0 0
    %274 = vmatprep.subr.bf16.mxu0 0
    %275 = vmatpush1.bf16.msra.mxu0 0
    %276 = vmatprep.subr.bf16.mxu0 0
    %277 = vmatpush1.bf16.msra.mxu0 0
    %278 = vmatprep.subr.bf16.mxu0 %v218
    %279 = vmatpush1.bf16.msra.mxu0 %v217
    %280 = vmatprep.subr.bf16.mxu0 %v214
    %281 = vmatpush1.bf16.msra.mxu0 %v213
    %282 = vmatprep.subr.bf16.mxu0 0
    %283 = vmatpush2.bf16.msra.mxu0 0
    %284 = vmatprep.subr.bf16.mxu0 0
    %285 = vmatpush2.bf16.msra.mxu0 0
    %286 = vmatprep.subr.bf16.mxu0 0
    %287 = vmatpush2.bf16.msra.mxu0 0
    %288 = vmatprep.subr.bf16.mxu0 0
    %289 = vmatpush2.bf16.msra.mxu0 0
    %290 = vmatprep.subr.bf16.mxu0 0
    %291 = vmatpush2.bf16.msra.mxu0 0
    %292 = vmatprep.subr.bf16.mxu0 0
    %293 = vmatpush2.bf16.msra.mxu0 0
    %294 = vmatprep.subr.bf16.mxu0 0
    %295 = vmatpush2.bf16.msra.mxu0 0
    %296 = vmatprep.subr.bf16.mxu0 0
    %297 = vmatpush2.bf16.msra.mxu0 0
    %298 = vmatprep.mubr.bf16.mxu0 0
    %299 = vmatmul.mubr.bf16.gmra.mxu0 %v221
    %v300 = vpop.f32.mrf.mxu0
    %v301 = vadd.f32 0.0, %v300
    %v302 = vpop.f32.mrf.mxu0
    %v303 = vadd.f32 0.0, %v302
    %v304 = vpop.f32.mrf.mxu0
    %v305 = vadd.f32 0.0, %v304
    %v306 = vpop.f32.mrf.mxu0
    %v307 = vadd.f32 0.0, %v306
    %308 = vdwg.mxu0
    %v309 = vld [vmem:[#allocation7] sm:$0xf]
    %v311 = vlaneseq
    %v312 = vshrl.u32 %v311, 7
    %v313 = vsub.s32 0, %v312
    %v314 = vrot.slane %v309, %v313
    %v315 = vlaneseq
    %v316 = vshrl.u32 %v315, 7
    %v317 = vsub.s32 1, %v316
    %v318 = vrot.slane %v309, %v317
    %v319 = vlaneseq
    %v320 = vshrl.u32 %v319, 7
    %v321 = vsub.s32 2, %v320
    %v322 = vrot.slane %v309, %v321
    %v323 = vlaneseq
    %v324 = vshrl.u32 %v323, 7
    %v325 = vsub.s32 3, %v324
    %v326 = vrot.slane %v309, %v325
    %v331 = vmul.f32 %v258, %v314
    %v332 = vmul.f32 %v260, %v318
    %v333 = vmul.f32 %v301, %v322
    %v334 = vmul.f32 %v303, %v326
    %v335 = vmul.f32 %v262, %v314
    %v336 = vmul.f32 %v264, %v318
    %v337 = vmul.f32 %v305, %v322
    %v338 = vmul.f32 %v307, %v326
    %v339 = vld [vmem:[#allocation8] sm:$0xf]
    %v341 = vlaneseq
    %v342 = vshrl.u32 %v341, 7
    %v343 = vsub.s32 0, %v342
    %v344 = vrot.slane %v339, %v343
    %v345 = vlaneseq
    %v346 = vshrl.u32 %v345, 7
    %v347 = vsub.s32 1, %v346
    %v348 = vrot.slane %v339, %v347
    %v349 = vlaneseq
    %v350 = vshrl.u32 %v349, 7
    %v351 = vsub.s32 2, %v350
    %v352 = vrot.slane %v339, %v351
    %v353 = vlaneseq
    %v354 = vshrl.u32 %v353, 7
    %v355 = vsub.s32 3, %v354
    %v356 = vrot.slane %v339, %v355
    %v361 = vadd.f32 %v331, %v344
    %v362 = vadd.f32 %v332, %v348
    %v363 = vadd.f32 %v333, %v352
    %v364 = vadd.f32 %v334, %v356
    %v365 = vadd.f32 %v335, %v344
    %v366 = vadd.f32 %v336, %v348
    %v367 = vadd.f32 %v337, %v352
    %v368 = vadd.f32 %v338, %v356
    %v369 = vmax.f32 %v361, 0.0
    %v370 = vmax.f32 %v362, 0.0
    %v371 = vmax.f32 %v363, 0.0
    %v372 = vmax.f32 %v364, 0.0
    %v373 = vmax.f32 %v365, 0.0
    %v374 = vmax.f32 %v366, 0.0
    %v375 = vmax.f32 %v367, 0.0
    %v376 = vmax.f32 %v368, 0.0
    %v377 = vpack.c.bf16 %v373, %v369
    %v378 = vpack.c.bf16 %v374, %v370
    %v379 = vpack.c.bf16 %v375, %v371
    %v380 = vpack.c.bf16 %v376, %v372
    %v381 = vld [vmem:[#allocation10] sm:$0xff]
    %v382 = vld [vmem:[#allocation10 + $0x8] sm:$0xff]
    %v383 = vld [vmem:[#allocation10 + $0x10] sm:$0xff]
    %v384 = vld [vmem:[#allocation10 + $0x18] sm:$0xff]
    %v385 = vld [vmem:[#allocation10 + $0x20] sm:$0xff]
    %v386 = vld [vmem:[#allocation10 + $0x28] sm:$0xff]
    %v387 = vld [vmem:[#allocation10 + $0x30] sm:$0xff]
    %v388 = vld [vmem:[#allocation10 + $0x38] sm:$0xff]
    %v389 = vld [vmem:[#allocation10 + $0x40] sm:$0xff]
    %v390 = vld [vmem:[#allocation10 + $0x48] sm:$0xff]
    %v391 = vld [vmem:[#allocation10 + $0x50] sm:$0xff]
    %v392 = vld [vmem:[#allocation10 + $0x58] sm:$0xff]
    %v393 = vld [vmem:[#allocation10 + $0x60] sm:$0xff]
    %v394 = vld [vmem:[#allocation10 + $0x68] sm:$0xff]
    %v395 = vld [vmem:[#allocation10 + $0x70] sm:$0xff]
    %v396 = vld [vmem:[#allocation10 + $0x78] sm:$0xff]
    %v397 = vld [vmem:[#allocation10 + $0x80] sm:$0xff]
    %v398 = vld [vmem:[#allocation10 + $0x88] sm:$0xff]
    %v399 = vld [vmem:[#allocation10 + $0x90] sm:$0xff]
    %v400 = vld [vmem:[#allocation10 + $0x98] sm:$0xff]
    %v401 = vld [vmem:[#allocation10 + $0xa0] sm:$0xff]
    %v402 = vld [vmem:[#allocation10 + $0xa8] sm:$0xff]
    %v403 = vld [vmem:[#allocation10 + $0xb0] sm:$0xff]
    %v404 = vld [vmem:[#allocation10 + $0xb8] sm:$0xff]
    %v405 = vld [vmem:[#allocation10 + $0xc0] sm:$0xff]
    %v406 = vld [vmem:[#allocation10 + $0xc8] sm:$0xff]
    %v407 = vld [vmem:[#allocation10 + $0xd0] sm:$0xff]
    %v408 = vld [vmem:[#allocation10 + $0xd8] sm:$0xff]
    %v409 = vld [vmem:[#allocation10 + $0xe0] sm:$0xff]
    %v410 = vld [vmem:[#allocation10 + $0xe8] sm:$0xff]
    %v411 = vld [vmem:[#allocation10 + $0xf0] sm:$0xff]
    %v412 = vld [vmem:[#allocation10 + $0xf8] sm:$0xff]
    %v413 = vld [vmem:[#allocation10 + $0x100] sm:$0xff]
    %v414 = vld [vmem:[#allocation10 + $0x108] sm:$0xff]
    %v415 = vld [vmem:[#allocation10 + $0x110] sm:$0xff]
    %v416 = vld [vmem:[#allocation10 + $0x118] sm:$0xff]
    %v417 = vld [vmem:[#allocation10 + $0x120] sm:$0xff]
    %v418 = vld [vmem:[#allocation10 + $0x128] sm:$0xff]
    %v419 = vld [vmem:[#allocation10 + $0x130] sm:$0xff]
    %v420 = vld [vmem:[#allocation10 + $0x138] sm:$0xff]
    %v421 = vld [vmem:[#allocation10 + $0x140] sm:$0xff]
    %v422 = vld [vmem:[#allocation10 + $0x148] sm:$0xff]
    %v423 = vld [vmem:[#allocation10 + $0x150] sm:$0xff]
    %v424 = vld [vmem:[#allocation10 + $0x158] sm:$0xff]
    %v425 = vld [vmem:[#allocation10 + $0x160] sm:$0xff]
    %v426 = vld [vmem:[#allocation10 + $0x168] sm:$0xff]
    %v427 = vld [vmem:[#allocation10 + $0x170] sm:$0xff]
    %v428 = vld [vmem:[#allocation10 + $0x178] sm:$0xff]
    %v429 = vld [vmem:[#allocation10 + $0x180] sm:$0xff]
    %v430 = vld [vmem:[#allocation10 + $0x188] sm:$0xff]
    %v431 = vld [vmem:[#allocation10 + $0x190] sm:$0xff]
    %v432 = vld [vmem:[#allocation10 + $0x198] sm:$0xff]
    %v433 = vld [vmem:[#allocation10 + $0x1a0] sm:$0xff]
    %v434 = vld [vmem:[#allocation10 + $0x1a8] sm:$0xff]
    %v435 = vld [vmem:[#allocation10 + $0x1b0] sm:$0xff]
    %v436 = vld [vmem:[#allocation10 + $0x1b8] sm:$0xff]
    %v437 = vld [vmem:[#allocation10 + $0x1c0] sm:$0xff]
    %v438 = vld [vmem:[#allocation10 + $0x1c8] sm:$0xff]
    %v439 = vld [vmem:[#allocation10 + $0x1d0] sm:$0xff]
    %v440 = vld [vmem:[#allocation10 + $0x1d8] sm:$0xff]
    %v441 = vld [vmem:[#allocation10 + $0x1e0] sm:$0xff]
    %v442 = vld [vmem:[#allocation10 + $0x1e8] sm:$0xff]
    %v443 = vld [vmem:[#allocation10 + $0x1f0] sm:$0xff]
    %v444 = vld [vmem:[#allocation10 + $0x1f8] sm:$0xff]
    %v445 = vld [vmem:[#allocation10 + $0x200] sm:$0xff]
    %v446 = vld [vmem:[#allocation10 + $0x208] sm:$0xff]
    %v447 = vld [vmem:[#allocation10 + $0x210] sm:$0xff]
    %v448 = vld [vmem:[#allocation10 + $0x218] sm:$0xff]
    %v449 = vld [vmem:[#allocation10 + $0x220] sm:$0xff]
    %v450 = vld [vmem:[#allocation10 + $0x228] sm:$0xff]
    %v451 = vld [vmem:[#allocation10 + $0x230] sm:$0xff]
    %v452 = vld [vmem:[#allocation10 + $0x238] sm:$0xff]
    %v453 = vld [vmem:[#allocation10 + $0x240] sm:$0xff]
    %v454 = vld [vmem:[#allocation10 + $0x248] sm:$0xff]
    %v455 = vld [vmem:[#allocation10 + $0x250] sm:$0xff]
    %v456 = vld [vmem:[#allocation10 + $0x258] sm:$0xff]
    %v457 = vld [vmem:[#allocation10 + $0x260] sm:$0xff]
    %v458 = vld [vmem:[#allocation10 + $0x268] sm:$0xff]
    %v459 = vld [vmem:[#allocation10 + $0x270] sm:$0xff]
    %v460 = vld [vmem:[#allocation10 + $0x278] sm:$0xff]
    %v461 = vld [vmem:[#allocation10 + $0x280] sm:$0xff]
    %v462 = vld [vmem:[#allocation10 + $0x288] sm:$0xff]
    %v463 = vld [vmem:[#allocation10 + $0x290] sm:$0xff]
    %v464 = vld [vmem:[#allocation10 + $0x298] sm:$0xff]
    %v465 = vld [vmem:[#allocation10 + $0x2a0] sm:$0xff]
    %v466 = vld [vmem:[#allocation10 + $0x2a8] sm:$0xff]
    %v467 = vld [vmem:[#allocation10 + $0x2b0] sm:$0xff]
    %v468 = vld [vmem:[#allocation10 + $0x2b8] sm:$0xff]
    %v469 = vld [vmem:[#allocation10 + $0x2c0] sm:$0xff]
    %v470 = vld [vmem:[#allocation10 + $0x2c8] sm:$0xff]
    %v471 = vld [vmem:[#allocation10 + $0x2d0] sm:$0xff]
    %v472 = vld [vmem:[#allocation10 + $0x2d8] sm:$0xff]
    %v473 = vld [vmem:[#allocation10 + $0x2e0] sm:$0xff]
    %v474 = vld [vmem:[#allocation10 + $0x2e8] sm:$0xff]
    %v475 = vld [vmem:[#allocation10 + $0x2f0] sm:$0xff]
    %v476 = vld [vmem:[#allocation10 + $0x2f8] sm:$0xff]
    %v477 = vld [vmem:[#allocation10 + $0x300] sm:$0xff]
    %v478 = vld [vmem:[#allocation10 + $0x308] sm:$0xff]
    %v479 = vld [vmem:[#allocation10 + $0x310] sm:$0xff]
    %v480 = vld [vmem:[#allocation10 + $0x318] sm:$0xff]
    %v481 = vld [vmem:[#allocation10 + $0x320] sm:$0xff]
    %v482 = vld [vmem:[#allocation10 + $0x328] sm:$0xff]
    %v483 = vld [vmem:[#allocation10 + $0x330] sm:$0xff]
    %v484 = vld [vmem:[#allocation10 + $0x338] sm:$0xff]
    %v485 = vld [vmem:[#allocation10 + $0x340] sm:$0xff]
    %v486 = vld [vmem:[#allocation10 + $0x348] sm:$0xff]
    %v487 = vld [vmem:[#allocation10 + $0x350] sm:$0xff]
    %v488 = vld [vmem:[#allocation10 + $0x358] sm:$0xff]
    %v489 = vld [vmem:[#allocation10 + $0x360] sm:$0xff]
    %v490 = vld [vmem:[#allocation10 + $0x368] sm:$0xff]
    %v491 = vld [vmem:[#allocation10 + $0x370] sm:$0xff]
    %v492 = vld [vmem:[#allocation10 + $0x378] sm:$0xff]
    %v493 = vld [vmem:[#allocation10 + $0x380] sm:$0xff]
    %v494 = vld [vmem:[#allocation10 + $0x388] sm:$0xff]
    %v495 = vld [vmem:[#allocation10 + $0x390] sm:$0xff]
    %v496 = vld [vmem:[#allocation10 + $0x398] sm:$0xff]
    %v497 = vld [vmem:[#allocation10 + $0x3a0] sm:$0xff]
    %v498 = vld [vmem:[#allocation10 + $0x3a8] sm:$0xff]
    %v499 = vld [vmem:[#allocation10 + $0x3b0] sm:$0xff]
    %v500 = vld [vmem:[#allocation10 + $0x3b8] sm:$0xff]
    %v501 = vld [vmem:[#allocation10 + $0x3c0] sm:$0xff]
    %v502 = vld [vmem:[#allocation10 + $0x3c8] sm:$0xff]
    %v503 = vld [vmem:[#allocation10 + $0x3d0] sm:$0xff]
    %v504 = vld [vmem:[#allocation10 + $0x3d8] sm:$0xff]
    %v505 = vld [vmem:[#allocation10 + $0x3e0] sm:$0xff]
    %v506 = vld [vmem:[#allocation10 + $0x3e8] sm:$0xff]
    %v507 = vld [vmem:[#allocation10 + $0x3f0] sm:$0xff]
    %v508 = vld [vmem:[#allocation10 + $0x3f8] sm:$0xff]
    %v509 = vunpack.c.l.s8.bf16 %v381
    %v510 = vunpack.c.l.s8.bf16 %v382
    %v511 = vunpack.c.l.s8.bf16 %v383
    %v512 = vunpack.c.l.s8.bf16 %v384
    %v513 = vunpack.c.l.s8.bf16 %v385
    %v514 = vunpack.c.l.s8.bf16 %v386
    %v515 = vunpack.c.l.s8.bf16 %v387
    %v516 = vunpack.c.l.s8.bf16 %v388
    %v517 = vunpack.c.h.s8.bf16 %v381
    %v518 = vunpack.c.h.s8.bf16 %v382
    %v519 = vunpack.c.h.s8.bf16 %v383
    %v520 = vunpack.c.h.s8.bf16 %v384
    %v521 = vunpack.c.h.s8.bf16 %v385
    %v522 = vunpack.c.h.s8.bf16 %v386
    %v523 = vunpack.c.h.s8.bf16 %v387
    %v524 = vunpack.c.h.s8.bf16 %v388
    %v525 = vunpack.c.l.s8.bf16 %v389
    %v526 = vunpack.c.l.s8.bf16 %v390
    %v527 = vunpack.c.l.s8.bf16 %v391
    %v528 = vunpack.c.l.s8.bf16 %v392
    %v529 = vunpack.c.l.s8.bf16 %v393
    %v530 = vunpack.c.l.s8.bf16 %v394
    %v531 = vunpack.c.l.s8.bf16 %v395
    %v532 = vunpack.c.l.s8.bf16 %v396
    %v533 = vunpack.c.h.s8.bf16 %v389
    %v534 = vunpack.c.h.s8.bf16 %v390
    %v535 = vunpack.c.h.s8.bf16 %v391
    %v536 = vunpack.c.h.s8.bf16 %v392
    %v537 = vunpack.c.h.s8.bf16 %v393
    %v538 = vunpack.c.h.s8.bf16 %v394
    %v539 = vunpack.c.h.s8.bf16 %v395
    %v540 = vunpack.c.h.s8.bf16 %v396
    %v541 = vunpack.c.l.s8.bf16 %v397
    %v542 = vunpack.c.l.s8.bf16 %v398
    %v543 = vunpack.c.l.s8.bf16 %v399
    %v544 = vunpack.c.l.s8.bf16 %v400
    %v545 = vunpack.c.l.s8.bf16 %v401
    %v546 = vunpack.c.l.s8.bf16 %v402
    %v547 = vunpack.c.l.s8.bf16 %v403
    %v548 = vunpack.c.l.s8.bf16 %v404
    %v549 = vunpack.c.h.s8.bf16 %v397
    %v550 = vunpack.c.h.s8.bf16 %v398
    %v551 = vunpack.c.h.s8.bf16 %v399
    %v552 = vunpack.c.h.s8.bf16 %v400
    %v553 = vunpack.c.h.s8.bf16 %v401
    %v554 = vunpack.c.h.s8.bf16 %v402
    %v555 = vunpack.c.h.s8.bf16 %v403
    %v556 = vunpack.c.h.s8.bf16 %v404
    %v557 = vunpack.c.l.s8.bf16 %v405
    %v558 = vunpack.c.l.s8.bf16 %v406
    %v559 = vunpack.c.l.s8.bf16 %v407
    %v560 = vunpack.c.l.s8.bf16 %v408
    %v561 = vunpack.c.l.s8.bf16 %v409
    %v562 = vunpack.c.l.s8.bf16 %v410
    %v563 = vunpack.c.l.s8.bf16 %v411
    %v564 = vunpack.c.l.s8.bf16 %v412
    %v565 = vunpack.c.h.s8.bf16 %v405
    %v566 = vunpack.c.h.s8.bf16 %v406
    %v567 = vunpack.c.h.s8.bf16 %v407
    %v568 = vunpack.c.h.s8.bf16 %v408
    %v569 = vunpack.c.h.s8.bf16 %v409
    %v570 = vunpack.c.h.s8.bf16 %v410
    %v571 = vunpack.c.h.s8.bf16 %v411
    %v572 = vunpack.c.h.s8.bf16 %v412
    %v573 = vunpack.c.l.s8.bf16 %v413
    %v574 = vunpack.c.l.s8.bf16 %v414
    %v575 = vunpack.c.l.s8.bf16 %v415
    %v576 = vunpack.c.l.s8.bf16 %v416
    %v577 = vunpack.c.l.s8.bf16 %v417
    %v578 = vunpack.c.l.s8.bf16 %v418
    %v579 = vunpack.c.l.s8.bf16 %v419
    %v580 = vunpack.c.l.s8.bf16 %v420
    %v581 = vunpack.c.h.s8.bf16 %v413
    %v582 = vunpack.c.h.s8.bf16 %v414
    %v583 = vunpack.c.h.s8.bf16 %v415
    %v584 = vunpack.c.h.s8.bf16 %v416
    %v585 = vunpack.c.h.s8.bf16 %v417
    %v586 = vunpack.c.h.s8.bf16 %v418
    %v587 = vunpack.c.h.s8.bf16 %v419
    %v588 = vunpack.c.h.s8.bf16 %v420
    %v589 = vunpack.c.l.s8.bf16 %v421
    %v590 = vunpack.c.l.s8.bf16 %v422
    %v591 = vunpack.c.l.s8.bf16 %v423
    %v592 = vunpack.c.l.s8.bf16 %v424
    %v593 = vunpack.c.l.s8.bf16 %v425
    %v594 = vunpack.c.l.s8.bf16 %v426
    %v595 = vunpack.c.l.s8.bf16 %v427
    %v596 = vunpack.c.l.s8.bf16 %v428
    %v597 = vunpack.c.h.s8.bf16 %v421
    %v598 = vunpack.c.h.s8.bf16 %v422
    %v599 = vunpack.c.h.s8.bf16 %v423
    %v600 = vunpack.c.h.s8.bf16 %v424
    %v601 = vunpack.c.h.s8.bf16 %v425
    %v602 = vunpack.c.h.s8.bf16 %v426
    %v603 = vunpack.c.h.s8.bf16 %v427
    %v604 = vunpack.c.h.s8.bf16 %v428
    %v605 = vunpack.c.l.s8.bf16 %v429
    %v606 = vunpack.c.l.s8.bf16 %v430
    %v607 = vunpack.c.l.s8.bf16 %v431
    %v608 = vunpack.c.l.s8.bf16 %v432
    %v609 = vunpack.c.l.s8.bf16 %v433
    %v610 = vunpack.c.l.s8.bf16 %v434
    %v611 = vunpack.c.l.s8.bf16 %v435
    %v612 = vunpack.c.l.s8.bf16 %v436
    %v613 = vunpack.c.h.s8.bf16 %v429
    %v614 = vunpack.c.h.s8.bf16 %v430
    %v615 = vunpack.c.h.s8.bf16 %v431
    %v616 = vunpack.c.h.s8.bf16 %v432
    %v617 = vunpack.c.h.s8.bf16 %v433
    %v618 = vunpack.c.h.s8.bf16 %v434
    %v619 = vunpack.c.h.s8.bf16 %v435
    %v620 = vunpack.c.h.s8.bf16 %v436
    %v621 = vunpack.c.l.s8.bf16 %v437
    %v622 = vunpack.c.l.s8.bf16 %v438
    %v623 = vunpack.c.l.s8.bf16 %v439
    %v624 = vunpack.c.l.s8.bf16 %v440
    %v625 = vunpack.c.l.s8.bf16 %v441
    %v626 = vunpack.c.l.s8.bf16 %v442
    %v627 = vunpack.c.l.s8.bf16 %v443
    %v628 = vunpack.c.l.s8.bf16 %v444
    %v629 = vunpack.c.h.s8.bf16 %v437
    %v630 = vunpack.c.h.s8.bf16 %v438
    %v631 = vunpack.c.h.s8.bf16 %v439
    %v632 = vunpack.c.h.s8.bf16 %v440
    %v633 = vunpack.c.h.s8.bf16 %v441
    %v634 = vunpack.c.h.s8.bf16 %v442
    %v635 = vunpack.c.h.s8.bf16 %v443
    %v636 = vunpack.c.h.s8.bf16 %v444
    %v637 = vunpack.c.l.s8.bf16 %v445
    %v638 = vunpack.c.l.s8.bf16 %v446
    %v639 = vunpack.c.l.s8.bf16 %v447
    %v640 = vunpack.c.l.s8.bf16 %v448
    %v641 = vunpack.c.l.s8.bf16 %v449
    %v642 = vunpack.c.l.s8.bf16 %v450
    %v643 = vunpack.c.l.s8.bf16 %v451
    %v644 = vunpack.c.l.s8.bf16 %v452
    %v645 = vunpack.c.h.s8.bf16 %v445
    %v646 = vunpack.c.h.s8.bf16 %v446
    %v647 = vunpack.c.h.s8.bf16 %v447
    %v648 = vunpack.c.h.s8.bf16 %v448
    %v649 = vunpack.c.h.s8.bf16 %v449
    %v650 = vunpack.c.h.s8.bf16 %v450
    %v651 = vunpack.c.h.s8.bf16 %v451
    %v652 = vunpack.c.h.s8.bf16 %v452
    %v653 = vunpack.c.l.s8.bf16 %v453
    %v654 = vunpack.c.l.s8.bf16 %v454
    %v655 = vunpack.c.l.s8.bf16 %v455
    %v656 = vunpack.c.l.s8.bf16 %v456
    %v657 = vunpack.c.l.s8.bf16 %v457
    %v658 = vunpack.c.l.s8.bf16 %v458
    %v659 = vunpack.c.l.s8.bf16 %v459
    %v660 = vunpack.c.l.s8.bf16 %v460
    %v661 = vunpack.c.h.s8.bf16 %v453
    %v662 = vunpack.c.h.s8.bf16 %v454
    %v663 = vunpack.c.h.s8.bf16 %v455
    %v664 = vunpack.c.h.s8.bf16 %v456
    %v665 = vunpack.c.h.s8.bf16 %v457
    %v666 = vunpack.c.h.s8.bf16 %v458
    %v667 = vunpack.c.h.s8.bf16 %v459
    %v668 = vunpack.c.h.s8.bf16 %v460
    %v669 = vunpack.c.l.s8.bf16 %v461
    %v670 = vunpack.c.l.s8.bf16 %v462
    %v671 = vunpack.c.l.s8.bf16 %v463
    %v672 = vunpack.c.l.s8.bf16 %v464
    %v673 = vunpack.c.l.s8.bf16 %v465
    %v674 = vunpack.c.l.s8.bf16 %v466
    %v675 = vunpack.c.l.s8.bf16 %v467
    %v676 = vunpack.c.l.s8.bf16 %v468
    %v677 = vunpack.c.h.s8.bf16 %v461
    %v678 = vunpack.c.h.s8.bf16 %v462
    %v679 = vunpack.c.h.s8.bf16 %v463
    %v680 = vunpack.c.h.s8.bf16 %v464
    %v681 = vunpack.c.h.s8.bf16 %v465
    %v682 = vunpack.c.h.s8.bf16 %v466
    %v683 = vunpack.c.h.s8.bf16 %v467
    %v684 = vunpack.c.h.s8.bf16 %v468
    %v685 = vunpack.c.l.s8.bf16 %v469
    %v686 = vunpack.c.l.s8.bf16 %v470
    %v687 = vunpack.c.l.s8.bf16 %v471
    %v688 = vunpack.c.l.s8.bf16 %v472
    %v689 = vunpack.c.l.s8.bf16 %v473
    %v690 = vunpack.c.l.s8.bf16 %v474
    %v691 = vunpack.c.l.s8.bf16 %v475
    %v692 = vunpack.c.l.s8.bf16 %v476
    %v693 = vunpack.c.h.s8.bf16 %v469
    %v694 = vunpack.c.h.s8.bf16 %v470
    %v695 = vunpack.c.h.s8.bf16 %v471
    %v696 = vunpack.c.h.s8.bf16 %v472
    %v697 = vunpack.c.h.s8.bf16 %v473
    %v698 = vunpack.c.h.s8.bf16 %v474
    %v699 = vunpack.c.h.s8.bf16 %v475
    %v700 = vunpack.c.h.s8.bf16 %v476
    %v701 = vunpack.c.l.s8.bf16 %v477
    %v702 = vunpack.c.l.s8.bf16 %v478
    %v703 = vunpack.c.l.s8.bf16 %v479
    %v704 = vunpack.c.l.s8.bf16 %v480
    %v705 = vunpack.c.l.s8.bf16 %v481
    %v706 = vunpack.c.l.s8.bf16 %v482
    %v707 = vunpack.c.l.s8.bf16 %v483
    %v708 = vunpack.c.l.s8.bf16 %v484
    %v709 = vunpack.c.h.s8.bf16 %v477
    %v710 = vunpack.c.h.s8.bf16 %v478
    %v711 = vunpack.c.h.s8.bf16 %v479
    %v712 = vunpack.c.h.s8.bf16 %v480
    %v713 = vunpack.c.h.s8.bf16 %v481
    %v714 = vunpack.c.h.s8.bf16 %v482
    %v715 = vunpack.c.h.s8.bf16 %v483
    %v716 = vunpack.c.h.s8.bf16 %v484
    %v717 = vunpack.c.l.s8.bf16 %v485
    %v718 = vunpack.c.l.s8.bf16 %v486
    %v719 = vunpack.c.l.s8.bf16 %v487
    %v720 = vunpack.c.l.s8.bf16 %v488
    %v721 = vunpack.c.l.s8.bf16 %v489
    %v722 = vunpack.c.l.s8.bf16 %v490
    %v723 = vunpack.c.l.s8.bf16 %v491
    %v724 = vunpack.c.l.s8.bf16 %v492
    %v725 = vunpack.c.h.s8.bf16 %v485
    %v726 = vunpack.c.h.s8.bf16 %v486
    %v727 = vunpack.c.h.s8.bf16 %v487
    %v728 = vunpack.c.h.s8.bf16 %v488
    %v729 = vunpack.c.h.s8.bf16 %v489
    %v730 = vunpack.c.h.s8.bf16 %v490
    %v731 = vunpack.c.h.s8.bf16 %v491
    %v732 = vunpack.c.h.s8.bf16 %v492
    %v733 = vunpack.c.l.s8.bf16 %v493
    %v734 = vunpack.c.l.s8.bf16 %v494
    %v735 = vunpack.c.l.s8.bf16 %v495
    %v736 = vunpack.c.l.s8.bf16 %v496
    %v737 = vunpack.c.l.s8.bf16 %v497
    %v738 = vunpack.c.l.s8.bf16 %v498
    %v739 = vunpack.c.l.s8.bf16 %v499
    %v740 = vunpack.c.l.s8.bf16 %v500
    %v741 = vunpack.c.h.s8.bf16 %v493
    %v742 = vunpack.c.h.s8.bf16 %v494
    %v743 = vunpack.c.h.s8.bf16 %v495
    %v744 = vunpack.c.h.s8.bf16 %v496
    %v745 = vunpack.c.h.s8.bf16 %v497
    %v746 = vunpack.c.h.s8.bf16 %v498
    %v747 = vunpack.c.h.s8.bf16 %v499
    %v748 = vunpack.c.h.s8.bf16 %v500
    %v749 = vunpack.c.l.s8.bf16 %v501
    %v750 = vunpack.c.l.s8.bf16 %v502
    %v751 = vunpack.c.l.s8.bf16 %v503
    %v752 = vunpack.c.l.s8.bf16 %v504
    %v753 = vunpack.c.l.s8.bf16 %v505
    %v754 = vunpack.c.l.s8.bf16 %v506
    %v755 = vunpack.c.l.s8.bf16 %v507
    %v756 = vunpack.c.l.s8.bf16 %v508
    %v757 = vunpack.c.h.s8.bf16 %v501
    %v758 = vunpack.c.h.s8.bf16 %v502
    %v759 = vunpack.c.h.s8.bf16 %v503
    %v760 = vunpack.c.h.s8.bf16 %v504
    %v761 = vunpack.c.h.s8.bf16 %v505
    %v762 = vunpack.c.h.s8.bf16 %v506
    %v763 = vunpack.c.h.s8.bf16 %v507
    %v764 = vunpack.c.h.s8.bf16 %v508
    %765 = vmatprep.subr.bf16.mxu0 %v566
    %766 = vmatpush1.bf16.msra.mxu0 %v565
    %767 = vmatprep.subr.bf16.mxu0 %v558
    %768 = vmatpush1.bf16.msra.mxu0 %v557
    %769 = vmatprep.subr.bf16.mxu0 %v550
    %770 = vmatpush1.bf16.msra.mxu0 %v549
    %771 = vmatprep.subr.bf16.mxu0 %v542
    %772 = vmatpush1.bf16.msra.mxu0 %v541
    %773 = vmatprep.subr.bf16.mxu0 %v534
    %774 = vmatpush1.bf16.msra.mxu0 %v533
    %775 = vmatprep.subr.bf16.mxu0 %v526
    %776 = vmatpush1.bf16.msra.mxu0 %v525
    %777 = vmatprep.subr.bf16.mxu0 %v518
    %778 = vmatpush1.bf16.msra.mxu0 %v517
    %779 = vmatprep.subr.bf16.mxu0 %v510
    %780 = vmatpush1.bf16.msra.mxu0 %v509
    %781 = vmatprep.subr.bf16.mxu0 %v630
    %782 = vmatpush2.bf16.msra.mxu0 %v629
    %783 = vmatprep.subr.bf16.mxu0 %v622
    %784 = vmatpush2.bf16.msra.mxu0 %v621
    %785 = vmatprep.subr.bf16.mxu0 %v614
    %786 = vmatpush2.bf16.msra.mxu0 %v613
    %787 = vmatprep.subr.bf16.mxu0 %v606
    %788 = vmatpush2.bf16.msra.mxu0 %v605
    %789 = vmatprep.subr.bf16.mxu0 %v598
    %790 = vmatpush2.bf16.msra.mxu0 %v597
    %791 = vmatprep.subr.bf16.mxu0 %v590
    %792 = vmatpush2.bf16.msra.mxu0 %v589
    %793 = vmatprep.subr.bf16.mxu0 %v582
    %794 = vmatpush2.bf16.msra.mxu0 %v581
    %795 = vmatprep.subr.bf16.mxu0 %v574
    %796 = vmatpush2.bf16.msra.mxu0 %v573
    %797 = vmatprep.mubr.bf16.mxu0 %v378
    %798 = vmatmul.mubr.bf16.gmra.mxu0 %v377
    %v799 = vpop.f32.mrf.mxu0
    %v800 = vadd.f32 0.0, %v799
    %v801 = vpop.f32.mrf.mxu0
    %v802 = vadd.f32 0.0, %v801
    %v803 = vpop.f32.mrf.mxu0
    %v804 = vadd.f32 0.0, %v803
    %v805 = vpop.f32.mrf.mxu0
    %v806 = vadd.f32 0.0, %v805
    %807 = vdwg.mxu0
    %808 = vmatprep.subr.bf16.mxu0 %v694
    %809 = vmatpush1.bf16.msra.mxu0 %v693
    %810 = vmatprep.subr.bf16.mxu0 %v686
    %811 = vmatpush1.bf16.msra.mxu0 %v685
    %812 = vmatprep.subr.bf16.mxu0 %v678
    %813 = vmatpush1.bf16.msra.mxu0 %v677
    %814 = vmatprep.subr.bf16.mxu0 %v670
    %815 = vmatpush1.bf16.msra.mxu0 %v669
    %816 = vmatprep.subr.bf16.mxu0 %v662
    %817 = vmatpush1.bf16.msra.mxu0 %v661
    %818 = vmatprep.subr.bf16.mxu0 %v654
    %819 = vmatpush1.bf16.msra.mxu0 %v653
    %820 = vmatprep.subr.bf16.mxu0 %v646
    %821 = vmatpush1.bf16.msra.mxu0 %v645
    %822 = vmatprep.subr.bf16.mxu0 %v638
    %823 = vmatpush1.bf16.msra.mxu0 %v637
    %824 = vmatprep.subr.bf16.mxu0 %v758
    %825 = vmatpush2.bf16.msra.mxu0 %v757
    %826 = vmatprep.subr.bf16.mxu0 %v750
    %827 = vmatpush2.bf16.msra.mxu0 %v749
    %828 = vmatprep.subr.bf16.mxu0 %v742
    %829 = vmatpush2.bf16.msra.mxu0 %v741
    %830 = vmatprep.subr.bf16.mxu0 %v734
    %831 = vmatpush2.bf16.msra.mxu0 %v733
    %832 = vmatprep.subr.bf16.mxu0 %v726
    %833 = vmatpush2.bf16.msra.mxu0 %v725
    %834 = vmatprep.subr.bf16.mxu0 %v718
    %835 = vmatpush2.bf16.msra.mxu0 %v717
    %836 = vmatprep.subr.bf16.mxu0 %v710
    %837 = vmatpush2.bf16.msra.mxu0 %v709
    %838 = vmatprep.subr.bf16.mxu0 %v702
    %839 = vmatpush2.bf16.msra.mxu0 %v701
    %840 = vmatprep.mubr.bf16.mxu0 %v380
    %841 = vmatmul.mubr.bf16.gmra.mxu0 %v379
    %v842 = vpop.f32.mrf.mxu0
    %v843 = vadd.f32 %v800, %v842
    %v844 = vpop.f32.mrf.mxu0
    %v845 = vadd.f32 %v802, %v844
    %v846 = vpop.f32.mrf.mxu0
    %v847 = vadd.f32 %v804, %v846
    %v848 = vpop.f32.mrf.mxu0
    %v849 = vadd.f32 %v806, %v848
    %850 = vdwg.mxu0
    %851 = vmatprep.subr.bf16.mxu0 %v568
    %852 = vmatpush1.bf16.msra.mxu0 %v567
    %853 = vmatprep.subr.bf16.mxu0 %v560
    %854 = vmatpush1.bf16.msra.mxu0 %v559
    %855 = vmatprep.subr.bf16.mxu0 %v552
    %856 = vmatpush1.bf16.msra.mxu0 %v551
    %857 = vmatprep.subr.bf16.mxu0 %v544
    %858 = vmatpush1.bf16.msra.mxu0 %v543
    %859 = vmatprep.subr.bf16.mxu0 %v536
    %860 = vmatpush1.bf16.msra.mxu0 %v535
    %861 = vmatprep.subr.bf16.mxu0 %v528
    %862 = vmatpush1.bf16.msra.mxu0 %v527
    %863 = vmatprep.subr.bf16.mxu0 %v520
    %864 = vmatpush1.bf16.msra.mxu0 %v519
    %865 = vmatprep.subr.bf16.mxu0 %v512
    %866 = vmatpush1.bf16.msra.mxu0 %v511
    %867 = vmatprep.subr.bf16.mxu0 %v632
    %868 = vmatpush2.bf16.msra.mxu0 %v631
    %869 = vmatprep.subr.bf16.mxu0 %v624
    %870 = vmatpush2.bf16.msra.mxu0 %v623
    %871 = vmatprep.subr.bf16.mxu0 %v616
    %872 = vmatpush2.bf16.msra.mxu0 %v615
    %873 = vmatprep.subr.bf16.mxu0 %v608
    %874 = vmatpush2.bf16.msra.mxu0 %v607
    %875 = vmatprep.subr.bf16.mxu0 %v600
    %876 = vmatpush2.bf16.msra.mxu0 %v599
    %877 = vmatprep.subr.bf16.mxu0 %v592
    %878 = vmatpush2.bf16.msra.mxu0 %v591
    %879 = vmatprep.subr.bf16.mxu0 %v584
    %880 = vmatpush2.bf16.msra.mxu0 %v583
    %881 = vmatprep.subr.bf16.mxu0 %v576
    %882 = vmatpush2.bf16.msra.mxu0 %v575
    %883 = vmatprep.mubr.bf16.mxu0 %v378
    %884 = vmatmul.mubr.bf16.gmra.mxu0 %v377
    %v885 = vpop.f32.mrf.mxu0
    %v886 = vadd.f32 0.0, %v885
    %v887 = vpop.f32.mrf.mxu0
    %v888 = vadd.f32 0.0, %v887
    %v889 = vpop.f32.mrf.mxu0
    %v890 = vadd.f32 0.0, %v889
    %v891 = vpop.f32.mrf.mxu0
    %v892 = vadd.f32 0.0, %v891
    %893 = vdwg.mxu0
    %894 = vmatprep.subr.bf16.mxu0 %v696
    %895 = vmatpush1.bf16.msra.mxu0 %v695
    %896 = vmatprep.subr.bf16.mxu0 %v688
    %897 = vmatpush1.bf16.msra.mxu0 %v687
    %898 = vmatprep.subr.bf16.mxu0 %v680
    %899 = vmatpush1.bf16.msra.mxu0 %v679
    %900 = vmatprep.subr.bf16.mxu0 %v672
    %901 = vmatpush1.bf16.msra.mxu0 %v671
    %902 = vmatprep.subr.bf16.mxu0 %v664
    %903 = vmatpush1.bf16.msra.mxu0 %v663
    %904 = vmatprep.subr.bf16.mxu0 %v656
    %905 = vmatpush1.bf16.msra.mxu0 %v655
    %906 = vmatprep.subr.bf16.mxu0 %v648
    %907 = vmatpush1.bf16.msra.mxu0 %v647
    %908 = vmatprep.subr.bf16.mxu0 %v640
    %909 = vmatpush1.bf16.msra.mxu0 %v639
    %910 = vmatprep.subr.bf16.mxu0 %v760
    %911 = vmatpush2.bf16.msra.mxu0 %v759
    %912 = vmatprep.subr.bf16.mxu0 %v752
    %913 = vmatpush2.bf16.msra.mxu0 %v751
    %914 = vmatprep.subr.bf16.mxu0 %v744
    %915 = vmatpush2.bf16.msra.mxu0 %v743
    %916 = vmatprep.subr.bf16.mxu0 %v736
    %917 = vmatpush2.bf16.msra.mxu0 %v735
    %918 = vmatprep.subr.bf16.mxu0 %v728
    %919 = vmatpush2.bf16.msra.mxu0 %v727
    %920 = vmatprep.subr.bf16.mxu0 %v720
    %921 = vmatpush2.bf16.msra.mxu0 %v719
    %922 = vmatprep.subr.bf16.mxu0 %v712
    %923 = vmatpush2.bf16.msra.mxu0 %v711
    %924 = vmatprep.subr.bf16.mxu0 %v704
    %925 = vmatpush2.bf16.msra.mxu0 %v703
    %926 = vmatprep.mubr.bf16.mxu0 %v380
    %927 = vmatmul.mubr.bf16.gmra.mxu0 %v379
    %v928 = vpop.f32.mrf.mxu0
    %v929 = vadd.f32 %v886, %v928
    %v930 = vpop.f32.mrf.mxu0
    %v931 = vadd.f32 %v888, %v930
    %v932 = vpop.f32.mrf.mxu0
    %v933 = vadd.f32 %v890, %v932
    %v934 = vpop.f32.mrf.mxu0
    %v935 = vadd.f32 %v892, %v934
    %936 = vdwg.mxu0
    %937 = vmatprep.subr.bf16.mxu0 %v570
    %938 = vmatpush1.bf16.msra.mxu0 %v569
    %939 = vmatprep.subr.bf16.mxu0 %v562
    %940 = vmatpush1.bf16.msra.mxu0 %v561
    %941 = vmatprep.subr.bf16.mxu0 %v554
    %942 = vmatpush1.bf16.msra.mxu0 %v553
    %943 = vmatprep.subr.bf16.mxu0 %v546
    %944 = vmatpush1.bf16.msra.mxu0 %v545
    %945 = vmatprep.subr.bf16.mxu0 %v538
    %946 = vmatpush1.bf16.msra.mxu0 %v537
    %947 = vmatprep.subr.bf16.mxu0 %v530
    %948 = vmatpush1.bf16.msra.mxu0 %v529
    %949 = vmatprep.subr.bf16.mxu0 %v522
    %950 = vmatpush1.bf16.msra.mxu0 %v521
    %951 = vmatprep.subr.bf16.mxu0 %v514
    %952 = vmatpush1.bf16.msra.mxu0 %v513
    %953 = vmatprep.subr.bf16.mxu0 %v634
    %954 = vmatpush2.bf16.msra.mxu0 %v633
    %955 = vmatprep.subr.bf16.mxu0 %v626
    %956 = vmatpush2.bf16.msra.mxu0 %v625
    %957 = vmatprep.subr.bf16.mxu0 %v618
    %958 = vmatpush2.bf16.msra.mxu0 %v617
    %959 = vmatprep.subr.bf16.mxu0 %v610
    %960 = vmatpush2.bf16.msra.mxu0 %v609
    %961 = vmatprep.subr.bf16.mxu0 %v602
    %962 = vmatpush2.bf16.msra.mxu0 %v601
    %963 = vmatprep.subr.bf16.mxu0 %v594
    %964 = vmatpush2.bf16.msra.mxu0 %v593
    %965 = vmatprep.subr.bf16.mxu0 %v586
    %966 = vmatpush2.bf16.msra.mxu0 %v585
    %967 = vmatprep.subr.bf16.mxu0 %v578
    %968 = vmatpush2.bf16.msra.mxu0 %v577
    %969 = vmatprep.mubr.bf16.mxu0 %v378
    %970 = vmatmul.mubr.bf16.gmra.mxu0 %v377
    %v971 = vpop.f32.mrf.mxu0
    %v972 = vadd.f32 0.0, %v971
    %v973 = vpop.f32.mrf.mxu0
    %v974 = vadd.f32 0.0, %v973
    %v975 = vpop.f32.mrf.mxu0
    %v976 = vadd.f32 0.0, %v975
    %v977 = vpop.f32.mrf.mxu0
    %v978 = vadd.f32 0.0, %v977
    %979 = vdwg.mxu0
    %980 = vmatprep.subr.bf16.mxu0 %v698
    %981 = vmatpush1.bf16.msra.mxu0 %v697
    %982 = vmatprep.subr.bf16.mxu0 %v690
    %983 = vmatpush1.bf16.msra.mxu0 %v689
    %984 = vmatprep.subr.bf16.mxu0 %v682
    %985 = vmatpush1.bf16.msra.mxu0 %v681
    %986 = vmatprep.subr.bf16.mxu0 %v674
    %987 = vmatpush1.bf16.msra.mxu0 %v673
    %988 = vmatprep.subr.bf16.mxu0 %v666
    %989 = vmatpush1.bf16.msra.mxu0 %v665
    %990 = vmatprep.subr.bf16.mxu0 %v658
    %991 = vmatpush1.bf16.msra.mxu0 %v657
    %992 = vmatprep.subr.bf16.mxu0 %v650
    %993 = vmatpush1.bf16.msra.mxu0 %v649
    %994 = vmatprep.subr.bf16.mxu0 %v642
    %995 = vmatpush1.bf16.msra.mxu0 %v641
    %996 = vmatprep.subr.bf16.mxu0 %v762
    %997 = vmatpush2.bf16.msra.mxu0 %v761
    %998 = vmatprep.subr.bf16.mxu0 %v754
    %999 = vmatpush2.bf16.msra.mxu0 %v753
    %1000 = vmatprep.subr.bf16.mxu0 %v746
    %1001 = vmatpush2.bf16.msra.mxu0 %v745
    %1002 = vmatprep.subr.bf16.mxu0 %v738
    %1003 = vmatpush2.bf16.msra.mxu0 %v737
    %1004 = vmatprep.subr.bf16.mxu0 %v730
    %1005 = vmatpush2.bf16.msra.mxu0 %v729
    %1006 = vmatprep.subr.bf16.mxu0 %v722
    %1007 = vmatpush2.bf16.msra.mxu0 %v721
    %1008 = vmatprep.subr.bf16.mxu0 %v714
    %1009 = vmatpush2.bf16.msra.mxu0 %v713
    %1010 = vmatprep.subr.bf16.mxu0 %v706
    %1011 = vmatpush2.bf16.msra.mxu0 %v705
    %1012 = vmatprep.mubr.bf16.mxu0 %v380
    %1013 = vmatmul.mubr.bf16.gmra.mxu0 %v379
    %v1014 = vpop.f32.mrf.mxu0
    %v1015 = vadd.f32 %v972, %v1014
    %v1016 = vpop.f32.mrf.mxu0
    %v1017 = vadd.f32 %v974, %v1016
    %v1018 = vpop.f32.mrf.mxu0
    %v1019 = vadd.f32 %v976, %v1018
    %v1020 = vpop.f32.mrf.mxu0
    %v1021 = vadd.f32 %v978, %v1020
    %1022 = vdwg.mxu0
    %1023 = vmatprep.subr.bf16.mxu0 %v572
    %1024 = vmatpush1.bf16.msra.mxu0 %v571
    %1025 = vmatprep.subr.bf16.mxu0 %v564
    %1026 = vmatpush1.bf16.msra.mxu0 %v563
    %1027 = vmatprep.subr.bf16.mxu0 %v556
    %1028 = vmatpush1.bf16.msra.mxu0 %v555
    %1029 = vmatprep.subr.bf16.mxu0 %v548
    %1030 = vmatpush1.bf16.msra.mxu0 %v547
    %1031 = vmatprep.subr.bf16.mxu0 %v540
    %1032 = vmatpush1.bf16.msra.mxu0 %v539
    %1033 = vmatprep.subr.bf16.mxu0 %v532
    %1034 = vmatpush1.bf16.msra.mxu0 %v531
    %1035 = vmatprep.subr.bf16.mxu0 %v524
    %1036 = vmatpush1.bf16.msra.mxu0 %v523
    %1037 = vmatprep.subr.bf16.mxu0 %v516
    %1038 = vmatpush1.bf16.msra.mxu0 %v515
    %1039 = vmatprep.subr.bf16.mxu0 %v636
    %1040 = vmatpush2.bf16.msra.mxu0 %v635
    %1041 = vmatprep.subr.bf16.mxu0 %v628
    %1042 = vmatpush2.bf16.msra.mxu0 %v627
    %1043 = vmatprep.subr.bf16.mxu0 %v620
    %1044 = vmatpush2.bf16.msra.mxu0 %v619
    %1045 = vmatprep.subr.bf16.mxu0 %v612
    %1046 = vmatpush2.bf16.msra.mxu0 %v611
    %1047 = vmatprep.subr.bf16.mxu0 %v604
    %1048 = vmatpush2.bf16.msra.mxu0 %v603
    %1049 = vmatprep.subr.bf16.mxu0 %v596
    %1050 = vmatpush2.bf16.msra.mxu0 %v595
    %1051 = vmatprep.subr.bf16.mxu0 %v588
    %1052 = vmatpush2.bf16.msra.mxu0 %v587
    %1053 = vmatprep.subr.bf16.mxu0 %v580
    %1054 = vmatpush2.bf16.msra.mxu0 %v579
    %1055 = vmatprep.mubr.bf16.mxu0 %v378
    %1056 = vmatmul.mubr.bf16.gmra.mxu0 %v377
    %v1057 = vpop.f32.mrf.mxu0
    %v1058 = vadd.f32 0.0, %v1057
    %v1059 = vpop.f32.mrf.mxu0
    %v1060 = vadd.f32 0.0, %v1059
    %v1061 = vpop.f32.mrf.mxu0
    %v1062 = vadd.f32 0.0, %v1061
    %v1063 = vpop.f32.mrf.mxu0
    %v1064 = vadd.f32 0.0, %v1063
    %1065 = vdwg.mxu0
    %1066 = vmatprep.subr.bf16.mxu0 %v700
    %1067 = vmatpush1.bf16.msra.mxu0 %v699
    %1068 = vmatprep.subr.bf16.mxu0 %v692
    %1069 = vmatpush1.bf16.msra.mxu0 %v691
    %1070 = vmatprep.subr.bf16.mxu0 %v684
    %1071 = vmatpush1.bf16.msra.mxu0 %v683
    %1072 = vmatprep.subr.bf16.mxu0 %v676
    %1073 = vmatpush1.bf16.msra.mxu0 %v675
    %1074 = vmatprep.subr.bf16.mxu0 %v668
    %1075 = vmatpush1.bf16.msra.mxu0 %v667
    %1076 = vmatprep.subr.bf16.mxu0 %v660
    %1077 = vmatpush1.bf16.msra.mxu0 %v659
    %1078 = vmatprep.subr.bf16.mxu0 %v652
    %1079 = vmatpush1.bf16.msra.mxu0 %v651
    %1080 = vmatprep.subr.bf16.mxu0 %v644
    %1081 = vmatpush1.bf16.msra.mxu0 %v643
    %1082 = vmatprep.subr.bf16.mxu0 %v764
    %1083 = vmatpush2.bf16.msra.mxu0 %v763
    %1084 = vmatprep.subr.bf16.mxu0 %v756
    %1085 = vmatpush2.bf16.msra.mxu0 %v755
    %1086 = vmatprep.subr.bf16.mxu0 %v748
    %1087 = vmatpush2.bf16.msra.mxu0 %v747
    %1088 = vmatprep.subr.bf16.mxu0 %v740
    %1089 = vmatpush2.bf16.msra.mxu0 %v739
    %1090 = vmatprep.subr.bf16.mxu0 %v732
    %1091 = vmatpush2.bf16.msra.mxu0 %v731
    %1092 = vmatprep.subr.bf16.mxu0 %v724
    %1093 = vmatpush2.bf16.msra.mxu0 %v723
    %1094 = vmatprep.subr.bf16.mxu0 %v716
    %1095 = vmatpush2.bf16.msra.mxu0 %v715
    %1096 = vmatprep.subr.bf16.mxu0 %v708
    %1097 = vmatpush2.bf16.msra.mxu0 %v707
    %1098 = vmatprep.mubr.bf16.mxu0 %v380
    %1099 = vmatmul.mubr.bf16.gmra.mxu0 %v379
    %v1100 = vpop.f32.mrf.mxu0
    %v1101 = vadd.f32 %v1058, %v1100
    %v1102 = vpop.f32.mrf.mxu0
    %v1103 = vadd.f32 %v1060, %v1102
    %v1104 = vpop.f32.mrf.mxu0
    %v1105 = vadd.f32 %v1062, %v1104
    %v1106 = vpop.f32.mrf.mxu0
    %v1107 = vadd.f32 %v1064, %v1106
    %1108 = vdwg.mxu0
    %v1109 = vld [vmem:[#allocation11] sm:$0xff]
    %v1111 = vlaneseq
    %v1112 = vshrl.u32 %v1111, 7
    %v1113 = vsub.s32 0, %v1112
    %v1114 = vrot.slane %v1109, %v1113
    %v1115 = vlaneseq
    %v1116 = vshrl.u32 %v1115, 7
    %v1117 = vsub.s32 1, %v1116
    %v1118 = vrot.slane %v1109, %v1117
    %v1119 = vlaneseq
    %v1120 = vshrl.u32 %v1119, 7
    %v1121 = vsub.s32 2, %v1120
    %v1122 = vrot.slane %v1109, %v1121
    %v1123 = vlaneseq
    %v1124 = vshrl.u32 %v1123, 7
    %v1125 = vsub.s32 3, %v1124
    %v1126 = vrot.slane %v1109, %v1125
    %v1127 = vlaneseq
    %v1128 = vshrl.u32 %v1127, 7
    %v1129 = vsub.s32 4, %v1128
    %v1130 = vrot.slane %v1109, %v1129
    %v1131 = vlaneseq
    %v1132 = vshrl.u32 %v1131, 7
    %v1133 = vsub.s32 5, %v1132
    %v1134 = vrot.slane %v1109, %v1133
    %v1135 = vlaneseq
    %v1136 = vshrl.u32 %v1135, 7
    %v1137 = vsub.s32 6, %v1136
    %v1138 = vrot.slane %v1109, %v1137
    %v1139 = vlaneseq
    %v1140 = vshrl.u32 %v1139, 7
    %v1141 = vsub.s32 7, %v1140
    %v1142 = vrot.slane %v1109, %v1141
    %v1151 = vmul.f32 %v843, %v1114
    %v1152 = vmul.f32 %v845, %v1118
    %v1153 = vmul.f32 %v929, %v1122
    %v1154 = vmul.f32 %v931, %v1126
    %v1155 = vmul.f32 %v1015, %v1130
    %v1156 = vmul.f32 %v1017, %v1134
    %v1157 = vmul.f32 %v1101, %v1138
    %v1158 = vmul.f32 %v1103, %v1142
    %v1159 = vmul.f32 %v847, %v1114
    %v1160 = vmul.f32 %v849, %v1118
    %v1161 = vmul.f32 %v933, %v1122
    %v1162 = vmul.f32 %v935, %v1126
    %v1163 = vmul.f32 %v1019, %v1130
    %v1164 = vmul.f32 %v1021, %v1134
    %v1165 = vmul.f32 %v1105, %v1138
    %v1166 = vmul.f32 %v1107, %v1142
    %v1167 = vld [vmem:[#allocation13] sm:$0xff]
    %v1169 = vlaneseq
    %v1170 = vshrl.u32 %v1169, 7
    %v1171 = vsub.s32 0, %v1170
    %v1172 = vrot.slane %v1167, %v1171
    %v1173 = vlaneseq
    %v1174 = vshrl.u32 %v1173, 7
    %v1175 = vsub.s32 1, %v1174
    %v1176 = vrot.slane %v1167, %v1175
    %v1177 = vlaneseq
    %v1178 = vshrl.u32 %v1177, 7
    %v1179 = vsub.s32 2, %v1178
    %v1180 = vrot.slane %v1167, %v1179
    %v1181 = vlaneseq
    %v1182 = vshrl.u32 %v1181, 7
    %v1183 = vsub.s32 3, %v1182
    %v1184 = vrot.slane %v1167, %v1183
    %v1185 = vlaneseq
    %v1186 = vshrl.u32 %v1185, 7
    %v1187 = vsub.s32 4, %v1186
    %v1188 = vrot.slane %v1167, %v1187
    %v1189 = vlaneseq
    %v1190 = vshrl.u32 %v1189, 7
    %v1191 = vsub.s32 5, %v1190
    %v1192 = vrot.slane %v1167, %v1191
    %v1193 = vlaneseq
    %v1194 = vshrl.u32 %v1193, 7
    %v1195 = vsub.s32 6, %v1194
    %v1196 = vrot.slane %v1167, %v1195
    %v1197 = vlaneseq
    %v1198 = vshrl.u32 %v1197, 7
    %v1199 = vsub.s32 7, %v1198
    %v1200 = vrot.slane %v1167, %v1199
    %v1209 = vadd.f32 %v1151, %v1172
    %v1210 = vadd.f32 %v1152, %v1176
    %v1211 = vadd.f32 %v1153, %v1180
    %v1212 = vadd.f32 %v1154, %v1184
    %v1213 = vadd.f32 %v1155, %v1188
    %v1214 = vadd.f32 %v1156, %v1192
    %v1215 = vadd.f32 %v1157, %v1196
    %v1216 = vadd.f32 %v1158, %v1200
    %v1217 = vadd.f32 %v1159, %v1172
    %v1218 = vadd.f32 %v1160, %v1176
    %v1219 = vadd.f32 %v1161, %v1180
    %v1220 = vadd.f32 %v1162, %v1184
    %v1221 = vadd.f32 %v1163, %v1188
    %v1222 = vadd.f32 %v1164, %v1192
    %v1223 = vadd.f32 %v1165, %v1196
    %v1224 = vadd.f32 %v1166, %v1200
    %v1225 = vmax.f32 %v1209, 0.0
    %v1226 = vmax.f32 %v1210, 0.0
    %v1227 = vmax.f32 %v1211, 0.0
    %v1228 = vmax.f32 %v1212, 0.0
    %v1229 = vmax.f32 %v1213, 0.0
    %v1230 = vmax.f32 %v1214, 0.0
    %v1231 = vmax.f32 %v1215, 0.0
    %v1232 = vmax.f32 %v1216, 0.0
    %v1233 = vmax.f32 %v1217, 0.0
    %v1234 = vmax.f32 %v1218, 0.0
    %v1235 = vmax.f32 %v1219, 0.0
    %v1236 = vmax.f32 %v1220, 0.0
    %v1237 = vmax.f32 %v1221, 0.0
    %v1238 = vmax.f32 %v1222, 0.0
    %v1239 = vmax.f32 %v1223, 0.0
    %v1240 = vmax.f32 %v1224, 0.0
    %v1241 = vpack.c.bf16 %v1233, %v1225
    %v1242 = vpack.c.bf16 %v1234, %v1226
    %v1243 = vpack.c.bf16 %v1235, %v1227
    %v1244 = vpack.c.bf16 %v1236, %v1228
    %v1245 = vpack.c.bf16 %v1237, %v1229
    %v1246 = vpack.c.bf16 %v1238, %v1230
    %v1247 = vpack.c.bf16 %v1239, %v1231
    %v1248 = vpack.c.bf16 %v1240, %v1232
    %v1249 = vld [vmem:[#allocation14] sm:$0xff]
    %v1250 = vld [vmem:[#allocation14 + $0x8] sm:$0xff]
    %v1251 = vld [vmem:[#allocation14 + $0x10] sm:$0xff]
    %v1252 = vld [vmem:[#allocation14 + $0x18] sm:$0xff]
    %v1253 = vld [vmem:[#allocation14 + $0x20] sm:$0xff]
    %v1254 = vld [vmem:[#allocation14 + $0x28] sm:$0xff]
    %v1255 = vld [vmem:[#allocation14 + $0x30] sm:$0xff]
    %v1256 = vld [vmem:[#allocation14 + $0x38] sm:$0xff]
    %v1257 = vld [vmem:[#allocation14 + $0x40] sm:$0xff]
    %v1258 = vld [vmem:[#allocation14 + $0x48] sm:$0xff]
    %v1259 = vld [vmem:[#allocation14 + $0x50] sm:$0xff]
    %v1260 = vld [vmem:[#allocation14 + $0x58] sm:$0xff]
    %v1261 = vld [vmem:[#allocation14 + $0x60] sm:$0xff]
    %v1262 = vld [vmem:[#allocation14 + $0x68] sm:$0xff]
    %v1263 = vld [vmem:[#allocation14 + $0x70] sm:$0xff]
    %v1264 = vld [vmem:[#allocation14 + $0x78] sm:$0xff]
    %v1265 = vld [vmem:[#allocation14 + $0x80] sm:$0xff]
    %v1266 = vld [vmem:[#allocation14 + $0x88] sm:$0xff]
    %v1267 = vld [vmem:[#allocation14 + $0x90] sm:$0xff]
    %v1268 = vld [vmem:[#allocation14 + $0x98] sm:$0xff]
    %v1269 = vld [vmem:[#allocation14 + $0xa0] sm:$0xff]
    %v1270 = vld [vmem:[#allocation14 + $0xa8] sm:$0xff]
    %v1271 = vld [vmem:[#allocation14 + $0xb0] sm:$0xff]
    %v1272 = vld [vmem:[#allocation14 + $0xb8] sm:$0xff]
    %v1273 = vld [vmem:[#allocation14 + $0xc0] sm:$0xff]
    %v1274 = vld [vmem:[#allocation14 + $0xc8] sm:$0xff]
    %v1275 = vld [vmem:[#allocation14 + $0xd0] sm:$0xff]
    %v1276 = vld [vmem:[#allocation14 + $0xd8] sm:$0xff]
    %v1277 = vld [vmem:[#allocation14 + $0xe0] sm:$0xff]
    %v1278 = vld [vmem:[#allocation14 + $0xe8] sm:$0xff]
    %v1279 = vld [vmem:[#allocation14 + $0xf0] sm:$0xff]
    %v1280 = vld [vmem:[#allocation14 + $0xf8] sm:$0xff]
    %v1281 = vld [vmem:[#allocation14 + $0x100] sm:$0xff]
    %v1282 = vld [vmem:[#allocation14 + $0x108] sm:$0xff]
    %v1283 = vld [vmem:[#allocation14 + $0x110] sm:$0xff]
    %v1284 = vld [vmem:[#allocation14 + $0x118] sm:$0xff]
    %v1285 = vld [vmem:[#allocation14 + $0x120] sm:$0xff]
    %v1286 = vld [vmem:[#allocation14 + $0x128] sm:$0xff]
    %v1287 = vld [vmem:[#allocation14 + $0x130] sm:$0xff]
    %v1288 = vld [vmem:[#allocation14 + $0x138] sm:$0xff]
    %v1289 = vld [vmem:[#allocation14 + $0x140] sm:$0xff]
    %v1290 = vld [vmem:[#allocation14 + $0x148] sm:$0xff]
    %v1291 = vld [vmem:[#allocation14 + $0x150] sm:$0xff]
    %v1292 = vld [vmem:[#allocation14 + $0x158] sm:$0xff]
    %v1293 = vld [vmem:[#allocation14 + $0x160] sm:$0xff]
    %v1294 = vld [vmem:[#allocation14 + $0x168] sm:$0xff]
    %v1295 = vld [vmem:[#allocation14 + $0x170] sm:$0xff]
    %v1296 = vld [vmem:[#allocation14 + $0x178] sm:$0xff]
    %v1297 = vld [vmem:[#allocation14 + $0x180] sm:$0xff]
    %v1298 = vld [vmem:[#allocation14 + $0x188] sm:$0xff]
    %v1299 = vld [vmem:[#allocation14 + $0x190] sm:$0xff]
    %v1300 = vld [vmem:[#allocation14 + $0x198] sm:$0xff]
    %v1301 = vld [vmem:[#allocation14 + $0x1a0] sm:$0xff]
    %v1302 = vld [vmem:[#allocation14 + $0x1a8] sm:$0xff]
    %v1303 = vld [vmem:[#allocation14 + $0x1b0] sm:$0xff]
    %v1304 = vld [vmem:[#allocation14 + $0x1b8] sm:$0xff]
    %v1305 = vld [vmem:[#allocation14 + $0x1c0] sm:$0xff]
    %v1306 = vld [vmem:[#allocation14 + $0x1c8] sm:$0xff]
    %v1307 = vld [vmem:[#allocation14 + $0x1d0] sm:$0xff]
    %v1308 = vld [vmem:[#allocation14 + $0x1d8] sm:$0xff]
    %v1309 = vld [vmem:[#allocation14 + $0x1e0] sm:$0xff]
    %v1310 = vld [vmem:[#allocation14 + $0x1e8] sm:$0xff]
    %v1311 = vld [vmem:[#allocation14 + $0x1f0] sm:$0xff]
    %v1312 = vld [vmem:[#allocation14 + $0x1f8] sm:$0xff]
    %v1313 = vld [vmem:[#allocation14 + $0x200] sm:$0xff]
    %v1314 = vld [vmem:[#allocation14 + $0x208] sm:$0xff]
    %v1315 = vld [vmem:[#allocation14 + $0x210] sm:$0xff]
    %v1316 = vld [vmem:[#allocation14 + $0x218] sm:$0xff]
    %v1317 = vld [vmem:[#allocation14 + $0x220] sm:$0xff]
    %v1318 = vld [vmem:[#allocation14 + $0x228] sm:$0xff]
    %v1319 = vld [vmem:[#allocation14 + $0x230] sm:$0xff]
    %v1320 = vld [vmem:[#allocation14 + $0x238] sm:$0xff]
    %v1321 = vld [vmem:[#allocation14 + $0x240] sm:$0xff]
    %v1322 = vld [vmem:[#allocation14 + $0x248] sm:$0xff]
    %v1323 = vld [vmem:[#allocation14 + $0x250] sm:$0xff]
    %v1324 = vld [vmem:[#allocation14 + $0x258] sm:$0xff]
    %v1325 = vld [vmem:[#allocation14 + $0x260] sm:$0xff]
    %v1326 = vld [vmem:[#allocation14 + $0x268] sm:$0xff]
    %v1327 = vld [vmem:[#allocation14 + $0x270] sm:$0xff]
    %v1328 = vld [vmem:[#allocation14 + $0x278] sm:$0xff]
    %v1329 = vld [vmem:[#allocation14 + $0x280] sm:$0xff]
    %v1330 = vld [vmem:[#allocation14 + $0x288] sm:$0xff]
    %v1331 = vld [vmem:[#allocation14 + $0x290] sm:$0xff]
    %v1332 = vld [vmem:[#allocation14 + $0x298] sm:$0xff]
    %v1333 = vld [vmem:[#allocation14 + $0x2a0] sm:$0xff]
    %v1334 = vld [vmem:[#allocation14 + $0x2a8] sm:$0xff]
    %v1335 = vld [vmem:[#allocation14 + $0x2b0] sm:$0xff]
    %v1336 = vld [vmem:[#allocation14 + $0x2b8] sm:$0xff]
    %v1337 = vld [vmem:[#allocation14 + $0x2c0] sm:$0xff]
    %v1338 = vld [vmem:[#allocation14 + $0x2c8] sm:$0xff]
    %v1339 = vld [vmem:[#allocation14 + $0x2d0] sm:$0xff]
    %v1340 = vld [vmem:[#allocation14 + $0x2d8] sm:$0xff]
    %v1341 = vld [vmem:[#allocation14 + $0x2e0] sm:$0xff]
    %v1342 = vld [vmem:[#allocation14 + $0x2e8] sm:$0xff]
    %v1343 = vld [vmem:[#allocation14 + $0x2f0] sm:$0xff]
    %v1344 = vld [vmem:[#allocation14 + $0x2f8] sm:$0xff]
    %v1345 = vld [vmem:[#allocation14 + $0x300] sm:$0xff]
    %v1346 = vld [vmem:[#allocation14 + $0x308] sm:$0xff]
    %v1347 = vld [vmem:[#allocation14 + $0x310] sm:$0xff]
    %v1348 = vld [vmem:[#allocation14 + $0x318] sm:$0xff]
    %v1349 = vld [vmem:[#allocation14 + $0x320] sm:$0xff]
    %v1350 = vld [vmem:[#allocation14 + $0x328] sm:$0xff]
    %v1351 = vld [vmem:[#allocation14 + $0x330] sm:$0xff]
    %v1352 = vld [vmem:[#allocation14 + $0x338] sm:$0xff]
    %v1353 = vld [vmem:[#allocation14 + $0x340] sm:$0xff]
    %v1354 = vld [vmem:[#allocation14 + $0x348] sm:$0xff]
    %v1355 = vld [vmem:[#allocation14 + $0x350] sm:$0xff]
    %v1356 = vld [vmem:[#allocation14 + $0x358] sm:$0xff]
    %v1357 = vld [vmem:[#allocation14 + $0x360] sm:$0xff]
    %v1358 = vld [vmem:[#allocation14 + $0x368] sm:$0xff]
    %v1359 = vld [vmem:[#allocation14 + $0x370] sm:$0xff]
    %v1360 = vld [vmem:[#allocation14 + $0x378] sm:$0xff]
    %v1361 = vld [vmem:[#allocation14 + $0x380] sm:$0xff]
    %v1362 = vld [vmem:[#allocation14 + $0x388] sm:$0xff]
    %v1363 = vld [vmem:[#allocation14 + $0x390] sm:$0xff]
    %v1364 = vld [vmem:[#allocation14 + $0x398] sm:$0xff]
    %v1365 = vld [vmem:[#allocation14 + $0x3a0] sm:$0xff]
    %v1366 = vld [vmem:[#allocation14 + $0x3a8] sm:$0xff]
    %v1367 = vld [vmem:[#allocation14 + $0x3b0] sm:$0xff]
    %v1368 = vld [vmem:[#allocation14 + $0x3b8] sm:$0xff]
    %v1369 = vld [vmem:[#allocation14 + $0x3c0] sm:$0xff]
    %v1370 = vld [vmem:[#allocation14 + $0x3c8] sm:$0xff]
    %v1371 = vld [vmem:[#allocation14 + $0x3d0] sm:$0xff]
    %v1372 = vld [vmem:[#allocation14 + $0x3d8] sm:$0xff]
    %v1373 = vld [vmem:[#allocation14 + $0x3e0] sm:$0xff]
    %v1374 = vld [vmem:[#allocation14 + $0x3e8] sm:$0xff]
    %v1375 = vld [vmem:[#allocation14 + $0x3f0] sm:$0xff]
    %v1376 = vld [vmem:[#allocation14 + $0x3f8] sm:$0xff]
    %v1377 = vld [vmem:[#allocation14 + $0x400] sm:$0xff]
    %v1378 = vld [vmem:[#allocation14 + $0x408] sm:$0xff]
    %v1379 = vld [vmem:[#allocation14 + $0x410] sm:$0xff]
    %v1380 = vld [vmem:[#allocation14 + $0x418] sm:$0xff]
    %v1381 = vld [vmem:[#allocation14 + $0x420] sm:$0xff]
    %v1382 = vld [vmem:[#allocation14 + $0x428] sm:$0xff]
    %v1383 = vld [vmem:[#allocation14 + $0x430] sm:$0xff]
    %v1384 = vld [vmem:[#allocation14 + $0x438] sm:$0xff]
    %v1385 = vld [vmem:[#allocation14 + $0x440] sm:$0xff]
    %v1386 = vld [vmem:[#allocation14 + $0x448] sm:$0xff]
    %v1387 = vld [vmem:[#allocation14 + $0x450] sm:$0xff]
    %v1388 = vld [vmem:[#allocation14 + $0x458] sm:$0xff]
    %v1389 = vld [vmem:[#allocation14 + $0x460] sm:$0xff]
    %v1390 = vld [vmem:[#allocation14 + $0x468] sm:$0xff]
    %v1391 = vld [vmem:[#allocation14 + $0x470] sm:$0xff]
    %v1392 = vld [vmem:[#allocation14 + $0x478] sm:$0xff]
    %v1393 = vld [vmem:[#allocation14 + $0x480] sm:$0xff]
    %v1394 = vld [vmem:[#allocation14 + $0x488] sm:$0xff]
    %v1395 = vld [vmem:[#allocation14 + $0x490] sm:$0xff]
    %v1396 = vld [vmem:[#allocation14 + $0x498] sm:$0xff]
    %v1397 = vld [vmem:[#allocation14 + $0x4a0] sm:$0xff]
    %v1398 = vld [vmem:[#allocation14 + $0x4a8] sm:$0xff]
    %v1399 = vld [vmem:[#allocation14 + $0x4b0] sm:$0xff]
    %v1400 = vld [vmem:[#allocation14 + $0x4b8] sm:$0xff]
    %v1401 = vld [vmem:[#allocation14 + $0x4c0] sm:$0xff]
    %v1402 = vld [vmem:[#allocation14 + $0x4c8] sm:$0xff]
    %v1403 = vld [vmem:[#allocation14 + $0x4d0] sm:$0xff]
    %v1404 = vld [vmem:[#allocation14 + $0x4d8] sm:$0xff]
    %v1405 = vld [vmem:[#allocation14 + $0x4e0] sm:$0xff]
    %v1406 = vld [vmem:[#allocation14 + $0x4e8] sm:$0xff]
    %v1407 = vld [vmem:[#allocation14 + $0x4f0] sm:$0xff]
    %v1408 = vld [vmem:[#allocation14 + $0x4f8] sm:$0xff]
    %v1409 = vld [vmem:[#allocation14 + $0x500] sm:$0xff]
    %v1410 = vld [vmem:[#allocation14 + $0x508] sm:$0xff]
    %v1411 = vld [vmem:[#allocation14 + $0x510] sm:$0xff]
    %v1412 = vld [vmem:[#allocation14 + $0x518] sm:$0xff]
    %v1413 = vld [vmem:[#allocation14 + $0x520] sm:$0xff]
    %v1414 = vld [vmem:[#allocation14 + $0x528] sm:$0xff]
    %v1415 = vld [vmem:[#allocation14 + $0x530] sm:$0xff]
    %v1416 = vld [vmem:[#allocation14 + $0x538] sm:$0xff]
    %v1417 = vld [vmem:[#allocation14 + $0x540] sm:$0xff]
    %v1418 = vld [vmem:[#allocation14 + $0x548] sm:$0xff]
    %v1419 = vld [vmem:[#allocation14 + $0x550] sm:$0xff]
    %v1420 = vld [vmem:[#allocation14 + $0x558] sm:$0xff]
    %v1421 = vld [vmem:[#allocation14 + $0x560] sm:$0xff]
    %v1422 = vld [vmem:[#allocation14 + $0x568] sm:$0xff]
    %v1423 = vld [vmem:[#allocation14 + $0x570] sm:$0xff]
    %v1424 = vld [vmem:[#allocation14 + $0x578] sm:$0xff]
    %v1425 = vld [vmem:[#allocation14 + $0x580] sm:$0xff]
    %v1426 = vld [vmem:[#allocation14 + $0x588] sm:$0xff]
    %v1427 = vld [vmem:[#allocation14 + $0x590] sm:$0xff]
    %v1428 = vld [vmem:[#allocation14 + $0x598] sm:$0xff]
    %v1429 = vld [vmem:[#allocation14 + $0x5a0] sm:$0xff]
    %v1430 = vld [vmem:[#allocation14 + $0x5a8] sm:$0xff]
    %v1431 = vld [vmem:[#allocation14 + $0x5b0] sm:$0xff]
    %v1432 = vld [vmem:[#allocation14 + $0x5b8] sm:$0xff]
    %v1433 = vld [vmem:[#allocation14 + $0x5c0] sm:$0xff]
    %v1434 = vld [vmem:[#allocation14 + $0x5c8] sm:$0xff]
    %v1435 = vld [vmem:[#allocation14 + $0x5d0] sm:$0xff]
    %v1436 = vld [vmem:[#allocation14 + $0x5d8] sm:$0xff]
    %v1437 = vld [vmem:[#allocation14 + $0x5e0] sm:$0xff]
    %v1438 = vld [vmem:[#allocation14 + $0x5e8] sm:$0xff]
    %v1439 = vld [vmem:[#allocation14 + $0x5f0] sm:$0xff]
    %v1440 = vld [vmem:[#allocation14 + $0x5f8] sm:$0xff]
    %v1441 = vld [vmem:[#allocation14 + $0x600] sm:$0xff]
    %v1442 = vld [vmem:[#allocation14 + $0x608] sm:$0xff]
    %v1443 = vld [vmem:[#allocation14 + $0x610] sm:$0xff]
    %v1444 = vld [vmem:[#allocation14 + $0x618] sm:$0xff]
    %v1445 = vld [vmem:[#allocation14 + $0x620] sm:$0xff]
    %v1446 = vld [vmem:[#allocation14 + $0x628] sm:$0xff]
    %v1447 = vld [vmem:[#allocation14 + $0x630] sm:$0xff]
    %v1448 = vld [vmem:[#allocation14 + $0x638] sm:$0xff]
    %v1449 = vld [vmem:[#allocation14 + $0x640] sm:$0xff]
    %v1450 = vld [vmem:[#allocation14 + $0x648] sm:$0xff]
    %v1451 = vld [vmem:[#allocation14 + $0x650] sm:$0xff]
    %v1452 = vld [vmem:[#allocation14 + $0x658] sm:$0xff]
    %v1453 = vld [vmem:[#allocation14 + $0x660] sm:$0xff]
    %v1454 = vld [vmem:[#allocation14 + $0x668] sm:$0xff]
    %v1455 = vld [vmem:[#allocation14 + $0x670] sm:$0xff]
    %v1456 = vld [vmem:[#allocation14 + $0x678] sm:$0xff]
    %v1457 = vld [vmem:[#allocation14 + $0x680] sm:$0xff]
    %v1458 = vld [vmem:[#allocation14 + $0x688] sm:$0xff]
    %v1459 = vld [vmem:[#allocation14 + $0x690] sm:$0xff]
    %v1460 = vld [vmem:[#allocation14 + $0x698] sm:$0xff]
    %v1461 = vld [vmem:[#allocation14 + $0x6a0] sm:$0xff]
    %v1462 = vld [vmem:[#allocation14 + $0x6a8] sm:$0xff]
    %v1463 = vld [vmem:[#allocation14 + $0x6b0] sm:$0xff]
    %v1464 = vld [vmem:[#allocation14 + $0x6b8] sm:$0xff]
    %v1465 = vld [vmem:[#allocation14 + $0x6c0] sm:$0xff]
    %v1466 = vld [vmem:[#allocation14 + $0x6c8] sm:$0xff]
    %v1467 = vld [vmem:[#allocation14 + $0x6d0] sm:$0xff]
    %v1468 = vld [vmem:[#allocation14 + $0x6d8] sm:$0xff]
    %v1469 = vld [vmem:[#allocation14 + $0x6e0] sm:$0xff]
    %v1470 = vld [vmem:[#allocation14 + $0x6e8] sm:$0xff]
    %v1471 = vld [vmem:[#allocation14 + $0x6f0] sm:$0xff]
    %v1472 = vld [vmem:[#allocation14 + $0x6f8] sm:$0xff]
    %v1473 = vld [vmem:[#allocation14 + $0x700] sm:$0xff]
    %v1474 = vld [vmem:[#allocation14 + $0x708] sm:$0xff]
    %v1475 = vld [vmem:[#allocation14 + $0x710] sm:$0xff]
    %v1476 = vld [vmem:[#allocation14 + $0x718] sm:$0xff]
    %v1477 = vld [vmem:[#allocation14 + $0x720] sm:$0xff]
    %v1478 = vld [vmem:[#allocation14 + $0x728] sm:$0xff]
    %v1479 = vld [vmem:[#allocation14 + $0x730] sm:$0xff]
    %v1480 = vld [vmem:[#allocation14 + $0x738] sm:$0xff]
    %v1481 = vld [vmem:[#allocation14 + $0x740] sm:$0xff]
    %v1482 = vld [vmem:[#allocation14 + $0x748] sm:$0xff]
    %v1483 = vld [vmem:[#allocation14 + $0x750] sm:$0xff]
    %v1484 = vld [vmem:[#allocation14 + $0x758] sm:$0xff]
    %v1485 = vld [vmem:[#allocation14 + $0x760] sm:$0xff]
    %v1486 = vld [vmem:[#allocation14 + $0x768] sm:$0xff]
    %v1487 = vld [vmem:[#allocation14 + $0x770] sm:$0xff]
    %v1488 = vld [vmem:[#allocation14 + $0x778] sm:$0xff]
    %v1489 = vld [vmem:[#allocation14 + $0x780] sm:$0xff]
    %v1490 = vld [vmem:[#allocation14 + $0x788] sm:$0xff]
    %v1491 = vld [vmem:[#allocation14 + $0x790] sm:$0xff]
    %v1492 = vld [vmem:[#allocation14 + $0x798] sm:$0xff]
    %v1493 = vld [vmem:[#allocation14 + $0x7a0] sm:$0xff]
    %v1494 = vld [vmem:[#allocation14 + $0x7a8] sm:$0xff]
    %v1495 = vld [vmem:[#allocation14 + $0x7b0] sm:$0xff]
    %v1496 = vld [vmem:[#allocation14 + $0x7b8] sm:$0xff]
    %v1497 = vld [vmem:[#allocation14 + $0x7c0] sm:$0xff]
    %v1498 = vld [vmem:[#allocation14 + $0x7c8] sm:$0xff]
    %v1499 = vld [vmem:[#allocation14 + $0x7d0] sm:$0xff]
    %v1500 = vld [vmem:[#allocation14 + $0x7d8] sm:$0xff]
    %v1501 = vld [vmem:[#allocation14 + $0x7e0] sm:$0xff]
    %v1502 = vld [vmem:[#allocation14 + $0x7e8] sm:$0xff]
    %v1503 = vld [vmem:[#allocation14 + $0x7f0] sm:$0xff]
    %v1504 = vld [vmem:[#allocation14 + $0x7f8] sm:$0xff]
    %v1505 = vld [vmem:[#allocation14 + $0x800] sm:$0xff]
    %v1506 = vld [vmem:[#allocation14 + $0x808] sm:$0xff]
    %v1507 = vld [vmem:[#allocation14 + $0x810] sm:$0xff]
    %v1508 = vld [vmem:[#allocation14 + $0x818] sm:$0xff]
    %v1509 = vld [vmem:[#allocation14 + $0x820] sm:$0xff]
    %v1510 = vld [vmem:[#allocation14 + $0x828] sm:$0xff]
    %v1511 = vld [vmem:[#allocation14 + $0x830] sm:$0xff]
    %v1512 = vld [vmem:[#allocation14 + $0x838] sm:$0xff]
    %v1513 = vld [vmem:[#allocation14 + $0x840] sm:$0xff]
    %v1514 = vld [vmem:[#allocation14 + $0x848] sm:$0xff]
    %v1515 = vld [vmem:[#allocation14 + $0x850] sm:$0xff]
    %v1516 = vld [vmem:[#allocation14 + $0x858] sm:$0xff]
    %v1517 = vld [vmem:[#allocation14 + $0x860] sm:$0xff]
    %v1518 = vld [vmem:[#allocation14 + $0x868] sm:$0xff]
    %v1519 = vld [vmem:[#allocation14 + $0x870] sm:$0xff]
    %v1520 = vld [vmem:[#allocation14 + $0x878] sm:$0xff]
    %v1521 = vld [vmem:[#allocation14 + $0x880] sm:$0xff]
    %v1522 = vld [vmem:[#allocation14 + $0x888] sm:$0xff]
    %v1523 = vld [vmem:[#allocation14 + $0x890] sm:$0xff]
    %v1524 = vld [vmem:[#allocation14 + $0x898] sm:$0xff]
    %v1525 = vld [vmem:[#allocation14 + $0x8a0] sm:$0xff]
    %v1526 = vld [vmem:[#allocation14 + $0x8a8] sm:$0xff]
    %v1527 = vld [vmem:[#allocation14 + $0x8b0] sm:$0xff]
    %v1528 = vld [vmem:[#allocation14 + $0x8b8] sm:$0xff]
    %v1529 = vld [vmem:[#allocation14 + $0x8c0] sm:$0xff]
    %v1530 = vld [vmem:[#allocation14 + $0x8c8] sm:$0xff]
    %v1531 = vld [vmem:[#allocation14 + $0x8d0] sm:$0xff]
    %v1532 = vld [vmem:[#allocation14 + $0x8d8] sm:$0xff]
    %v1533 = vld [vmem:[#allocation14 + $0x8e0] sm:$0xff]
    %v1534 = vld [vmem:[#allocation14 + $0x8e8] sm:$0xff]
    %v1535 = vld [vmem:[#allocation14 + $0x8f0] sm:$0xff]
    %v1536 = vld [vmem:[#allocation14 + $0x8f8] sm:$0xff]
    %v1537 = vld [vmem:[#allocation14 + $0x900] sm:$0xff]
    %v1538 = vld [vmem:[#allocation14 + $0x908] sm:$0xff]
    %v1539 = vld [vmem:[#allocation14 + $0x910] sm:$0xff]
    %v1540 = vld [vmem:[#allocation14 + $0x918] sm:$0xff]
    %v1541 = vld [vmem:[#allocation14 + $0x920] sm:$0xff]
    %v1542 = vld [vmem:[#allocation14 + $0x928] sm:$0xff]
    %v1543 = vld [vmem:[#allocation14 + $0x930] sm:$0xff]
    %v1544 = vld [vmem:[#allocation14 + $0x938] sm:$0xff]
    %v1545 = vld [vmem:[#allocation14 + $0x940] sm:$0xff]
    %v1546 = vld [vmem:[#allocation14 + $0x948] sm:$0xff]
    %v1547 = vld [vmem:[#allocation14 + $0x950] sm:$0xff]
    %v1548 = vld [vmem:[#allocation14 + $0x958] sm:$0xff]
    %v1549 = vld [vmem:[#allocation14 + $0x960] sm:$0xff]
    %v1550 = vld [vmem:[#allocation14 + $0x968] sm:$0xff]
    %v1551 = vld [vmem:[#allocation14 + $0x970] sm:$0xff]
    %v1552 = vld [vmem:[#allocation14 + $0x978] sm:$0xff]
    %v1553 = vld [vmem:[#allocation14 + $0x980] sm:$0xff]
    %v1554 = vld [vmem:[#allocation14 + $0x988] sm:$0xff]
    %v1555 = vld [vmem:[#allocation14 + $0x990] sm:$0xff]
    %v1556 = vld [vmem:[#allocation14 + $0x998] sm:$0xff]
    %v1557 = vld [vmem:[#allocation14 + $0x9a0] sm:$0xff]
    %v1558 = vld [vmem:[#allocation14 + $0x9a8] sm:$0xff]
    %v1559 = vld [vmem:[#allocation14 + $0x9b0] sm:$0xff]
    %v1560 = vld [vmem:[#allocation14 + $0x9b8] sm:$0xff]
    %v1561 = vld [vmem:[#allocation14 + $0x9c0] sm:$0xff]
    %v1562 = vld [vmem:[#allocation14 + $0x9c8] sm:$0xff]
    %v1563 = vld [vmem:[#allocation14 + $0x9d0] sm:$0xff]
    %v1564 = vld [vmem:[#allocation14 + $0x9d8] sm:$0xff]
    %v1565 = vld [vmem:[#allocation14 + $0x9e0] sm:$0xff]
    %v1566 = vld [vmem:[#allocation14 + $0x9e8] sm:$0xff]
    %v1567 = vld [vmem:[#allocation14 + $0x9f0] sm:$0xff]
    %v1568 = vld [vmem:[#allocation14 + $0x9f8] sm:$0xff]
    %v1569 = vld [vmem:[#allocation14 + $0xa00] sm:$0xff]
    %v1570 = vld [vmem:[#allocation14 + $0xa08] sm:$0xff]
    %v1571 = vld [vmem:[#allocation14 + $0xa10] sm:$0xff]
    %v1572 = vld [vmem:[#allocation14 + $0xa18] sm:$0xff]
    %v1573 = vld [vmem:[#allocation14 + $0xa20] sm:$0xff]
    %v1574 = vld [vmem:[#allocation14 + $0xa28] sm:$0xff]
    %v1575 = vld [vmem:[#allocation14 + $0xa30] sm:$0xff]
    %v1576 = vld [vmem:[#allocation14 + $0xa38] sm:$0xff]
    %v1577 = vld [vmem:[#allocation14 + $0xa40] sm:$0xff]
    %v1578 = vld [vmem:[#allocation14 + $0xa48] sm:$0xff]
    %v1579 = vld [vmem:[#allocation14 + $0xa50] sm:$0xff]
    %v1580 = vld [vmem:[#allocation14 + $0xa58] sm:$0xff]
    %v1581 = vld [vmem:[#allocation14 + $0xa60] sm:$0xff]
    %v1582 = vld [vmem:[#allocation14 + $0xa68] sm:$0xff]
    %v1583 = vld [vmem:[#allocation14 + $0xa70] sm:$0xff]
    %v1584 = vld [vmem:[#allocation14 + $0xa78] sm:$0xff]
    %v1585 = vld [vmem:[#allocation14 + $0xa80] sm:$0xff]
    %v1586 = vld [vmem:[#allocation14 + $0xa88] sm:$0xff]
    %v1587 = vld [vmem:[#allocation14 + $0xa90] sm:$0xff]
    %v1588 = vld [vmem:[#allocation14 + $0xa98] sm:$0xff]
    %v1589 = vld [vmem:[#allocation14 + $0xaa0] sm:$0xff]
    %v1590 = vld [vmem:[#allocation14 + $0xaa8] sm:$0xff]
    %v1591 = vld [vmem:[#allocation14 + $0xab0] sm:$0xff]
    %v1592 = vld [vmem:[#allocation14 + $0xab8] sm:$0xff]
    %v1593 = vld [vmem:[#allocation14 + $0xac0] sm:$0xff]
    %v1594 = vld [vmem:[#allocation14 + $0xac8] sm:$0xff]
    %v1595 = vld [vmem:[#allocation14 + $0xad0] sm:$0xff]
    %v1596 = vld [vmem:[#allocation14 + $0xad8] sm:$0xff]
    %v1597 = vld [vmem:[#allocation14 + $0xae0] sm:$0xff]
    %v1598 = vld [vmem:[#allocation14 + $0xae8] sm:$0xff]
    %v1599 = vld [vmem:[#allocation14 + $0xaf0] sm:$0xff]
    %v1600 = vld [vmem:[#allocation14 + $0xaf8] sm:$0xff]
    %v1601 = vld [vmem:[#allocation14 + $0xb00] sm:$0xff]
    %v1602 = vld [vmem:[#allocation14 + $0xb08] sm:$0xff]
    %v1603 = vld [vmem:[#allocation14 + $0xb10] sm:$0xff]
    %v1604 = vld [vmem:[#allocation14 + $0xb18] sm:$0xff]
    %v1605 = vld [vmem:[#allocation14 + $0xb20] sm:$0xff]
    %v1606 = vld [vmem:[#allocation14 + $0xb28] sm:$0xff]
    %v1607 = vld [vmem:[#allocation14 + $0xb30] sm:$0xff]
    %v1608 = vld [vmem:[#allocation14 + $0xb38] sm:$0xff]
    %v1609 = vld [vmem:[#allocation14 + $0xb40] sm:$0xff]
    %v1610 = vld [vmem:[#allocation14 + $0xb48] sm:$0xff]
    %v1611 = vld [vmem:[#allocation14 + $0xb50] sm:$0xff]
    %v1612 = vld [vmem:[#allocation14 + $0xb58] sm:$0xff]
    %v1613 = vld [vmem:[#allocation14 + $0xb60] sm:$0xff]
    %v1614 = vld [vmem:[#allocation14 + $0xb68] sm:$0xff]
    %v1615 = vld [vmem:[#allocation14 + $0xb70] sm:$0xff]
    %v1616 = vld [vmem:[#allocation14 + $0xb78] sm:$0xff]
    %v1617 = vld [vmem:[#allocation14 + $0xb80] sm:$0xff]
    %v1618 = vld [vmem:[#allocation14 + $0xb88] sm:$0xff]
    %v1619 = vld [vmem:[#allocation14 + $0xb90] sm:$0xff]
    %v1620 = vld [vmem:[#allocation14 + $0xb98] sm:$0xff]
    %v1621 = vld [vmem:[#allocation14 + $0xba0] sm:$0xff]
    %v1622 = vld [vmem:[#allocation14 + $0xba8] sm:$0xff]
    %v1623 = vld [vmem:[#allocation14 + $0xbb0] sm:$0xff]
    %v1624 = vld [vmem:[#allocation14 + $0xbb8] sm:$0xff]
    %v1625 = vld [vmem:[#allocation14 + $0xbc0] sm:$0xff]
    %v1626 = vld [vmem:[#allocation14 + $0xbc8] sm:$0xff]
    %v1627 = vld [vmem:[#allocation14 + $0xbd0] sm:$0xff]
    %v1628 = vld [vmem:[#allocation14 + $0xbd8] sm:$0xff]
    %v1629 = vld [vmem:[#allocation14 + $0xbe0] sm:$0xff]
    %v1630 = vld [vmem:[#allocation14 + $0xbe8] sm:$0xff]
    %v1631 = vld [vmem:[#allocation14 + $0xbf0] sm:$0xff]
    %v1632 = vld [vmem:[#allocation14 + $0xbf8] sm:$0xff]
    %v1633 = vld [vmem:[#allocation14 + $0xc00] sm:$0xff]
    %v1634 = vld [vmem:[#allocation14 + $0xc08] sm:$0xff]
    %v1635 = vld [vmem:[#allocation14 + $0xc10] sm:$0xff]
    %v1636 = vld [vmem:[#allocation14 + $0xc18] sm:$0xff]
    %v1637 = vld [vmem:[#allocation14 + $0xc20] sm:$0xff]
    %v1638 = vld [vmem:[#allocation14 + $0xc28] sm:$0xff]
    %v1639 = vld [vmem:[#allocation14 + $0xc30] sm:$0xff]
    %v1640 = vld [vmem:[#allocation14 + $0xc38] sm:$0xff]
    %v1641 = vld [vmem:[#allocation14 + $0xc40] sm:$0xff]
    %v1642 = vld [vmem:[#allocation14 + $0xc48] sm:$0xff]
    %v1643 = vld [vmem:[#allocation14 + $0xc50] sm:$0xff]
    %v1644 = vld [vmem:[#allocation14 + $0xc58] sm:$0xff]
    %v1645 = vld [vmem:[#allocation14 + $0xc60] sm:$0xff]
    %v1646 = vld [vmem:[#allocation14 + $0xc68] sm:$0xff]
    %v1647 = vld [vmem:[#allocation14 + $0xc70] sm:$0xff]
    %v1648 = vld [vmem:[#allocation14 + $0xc78] sm:$0xff]
    %v1649 = vld [vmem:[#allocation14 + $0xc80] sm:$0xff]
    %v1650 = vld [vmem:[#allocation14 + $0xc88] sm:$0xff]
    %v1651 = vld [vmem:[#allocation14 + $0xc90] sm:$0xff]
    %v1652 = vld [vmem:[#allocation14 + $0xc98] sm:$0xff]
    %v1653 = vld [vmem:[#allocation14 + $0xca0] sm:$0xff]
    %v1654 = vld [vmem:[#allocation14 + $0xca8] sm:$0xff]
    %v1655 = vld [vmem:[#allocation14 + $0xcb0] sm:$0xff]
    %v1656 = vld [vmem:[#allocation14 + $0xcb8] sm:$0xff]
    %v1657 = vld [vmem:[#allocation14 + $0xcc0] sm:$0xff]
    %v1658 = vld [vmem:[#allocation14 + $0xcc8] sm:$0xff]
    %v1659 = vld [vmem:[#allocation14 + $0xcd0] sm:$0xff]
    %v1660 = vld [vmem:[#allocation14 + $0xcd8] sm:$0xff]
    %v1661 = vld [vmem:[#allocation14 + $0xce0] sm:$0xff]
    %v1662 = vld [vmem:[#allocation14 + $0xce8] sm:$0xff]
    %v1663 = vld [vmem:[#allocation14 + $0xcf0] sm:$0xff]
    %v1664 = vld [vmem:[#allocation14 + $0xcf8] sm:$0xff]
    %v1665 = vld [vmem:[#allocation14 + $0xd00] sm:$0xff]
    %v1666 = vld [vmem:[#allocation14 + $0xd08] sm:$0xff]
    %v1667 = vld [vmem:[#allocation14 + $0xd10] sm:$0xff]
    %v1668 = vld [vmem:[#allocation14 + $0xd18] sm:$0xff]
    %v1669 = vld [vmem:[#allocation14 + $0xd20] sm:$0xff]
    %v1670 = vld [vmem:[#allocation14 + $0xd28] sm:$0xff]
    %v1671 = vld [vmem:[#allocation14 + $0xd30] sm:$0xff]
    %v1672 = vld [vmem:[#allocation14 + $0xd38] sm:$0xff]
    %v1673 = vld [vmem:[#allocation14 + $0xd40] sm:$0xff]
    %v1674 = vld [vmem:[#allocation14 + $0xd48] sm:$0xff]
    %v1675 = vld [vmem:[#allocation14 + $0xd50] sm:$0xff]
    %v1676 = vld [vmem:[#allocation14 + $0xd58] sm:$0xff]
    %v1677 = vld [vmem:[#allocation14 + $0xd60] sm:$0xff]
    %v1678 = vld [vmem:[#allocation14 + $0xd68] sm:$0xff]
    %v1679 = vld [vmem:[#allocation14 + $0xd70] sm:$0xff]
    %v1680 = vld [vmem:[#allocation14 + $0xd78] sm:$0xff]
    %v1681 = vld [vmem:[#allocation14 + $0xd80] sm:$0xff]
    %v1682 = vld [vmem:[#allocation14 + $0xd88] sm:$0xff]
    %v1683 = vld [vmem:[#allocation14 + $0xd90] sm:$0xff]
    %v1684 = vld [vmem:[#allocation14 + $0xd98] sm:$0xff]
    %v1685 = vld [vmem:[#allocation14 + $0xda0] sm:$0xff]
    %v1686 = vld [vmem:[#allocation14 + $0xda8] sm:$0xff]
    %v1687 = vld [vmem:[#allocation14 + $0xdb0] sm:$0xff]
    %v1688 = vld [vmem:[#allocation14 + $0xdb8] sm:$0xff]
    %v1689 = vld [vmem:[#allocation14 + $0xdc0] sm:$0xff]
    %v1690 = vld [vmem:[#allocation14 + $0xdc8] sm:$0xff]
    %v1691 = vld [vmem:[#allocation14 + $0xdd0] sm:$0xff]
    %v1692 = vld [vmem:[#allocation14 + $0xdd8] sm:$0xff]
    %v1693 = vld [vmem:[#allocation14 + $0xde0] sm:$0xff]
    %v1694 = vld [vmem:[#allocation14 + $0xde8] sm:$0xff]
    %v1695 = vld [vmem:[#allocation14 + $0xdf0] sm:$0xff]
    %v1696 = vld [vmem:[#allocation14 + $0xdf8] sm:$0xff]
    %v1697 = vld [vmem:[#allocation14 + $0xe00] sm:$0xff]
    %v1698 = vld [vmem:[#allocation14 + $0xe08] sm:$0xff]
    %v1699 = vld [vmem:[#allocation14 + $0xe10] sm:$0xff]
    %v1700 = vld [vmem:[#allocation14 + $0xe18] sm:$0xff]
    %v1701 = vld [vmem:[#allocation14 + $0xe20] sm:$0xff]
    %v1702 = vld [vmem:[#allocation14 + $0xe28] sm:$0xff]
    %v1703 = vld [vmem:[#allocation14 + $0xe30] sm:$0xff]
    %v1704 = vld [vmem:[#allocation14 + $0xe38] sm:$0xff]
    %v1705 = vld [vmem:[#allocation14 + $0xe40] sm:$0xff]
    %v1706 = vld [vmem:[#allocation14 + $0xe48] sm:$0xff]
    %v1707 = vld [vmem:[#allocation14 + $0xe50] sm:$0xff]
    %v1708 = vld [vmem:[#allocation14 + $0xe58] sm:$0xff]
    %v1709 = vld [vmem:[#allocation14 + $0xe60] sm:$0xff]
    %v1710 = vld [vmem:[#allocation14 + $0xe68] sm:$0xff]
    %v1711 = vld [vmem:[#allocation14 + $0xe70] sm:$0xff]
    %v1712 = vld [vmem:[#allocation14 + $0xe78] sm:$0xff]
    %v1713 = vld [vmem:[#allocation14 + $0xe80] sm:$0xff]
    %v1714 = vld [vmem:[#allocation14 + $0xe88] sm:$0xff]
    %v1715 = vld [vmem:[#allocation14 + $0xe90] sm:$0xff]
    %v1716 = vld [vmem:[#allocation14 + $0xe98] sm:$0xff]
    %v1717 = vld [vmem:[#allocation14 + $0xea0] sm:$0xff]
    %v1718 = vld [vmem:[#allocation14 + $0xea8] sm:$0xff]
    %v1719 = vld [vmem:[#allocation14 + $0xeb0] sm:$0xff]
    %v1720 = vld [vmem:[#allocation14 + $0xeb8] sm:$0xff]
    %v1721 = vld [vmem:[#allocation14 + $0xec0] sm:$0xff]
    %v1722 = vld [vmem:[#allocation14 + $0xec8] sm:$0xff]
    %v1723 = vld [vmem:[#allocation14 + $0xed0] sm:$0xff]
    %v1724 = vld [vmem:[#allocation14 + $0xed8] sm:$0xff]
    %v1725 = vld [vmem:[#allocation14 + $0xee0] sm:$0xff]
    %v1726 = vld [vmem:[#allocation14 + $0xee8] sm:$0xff]
    %v1727 = vld [vmem:[#allocation14 + $0xef0] sm:$0xff]
    %v1728 = vld [vmem:[#allocation14 + $0xef8] sm:$0xff]
    %v1729 = vld [vmem:[#allocation14 + $0xf00] sm:$0xff]
    %v1730 = vld [vmem:[#allocation14 + $0xf08] sm:$0xff]
    %v1731 = vld [vmem:[#allocation14 + $0xf10] sm:$0xff]
    %v1732 = vld [vmem:[#allocation14 + $0xf18] sm:$0xff]
    %v1733 = vld [vmem:[#allocation14 + $0xf20] sm:$0xff]
    %v1734 = vld [vmem:[#allocation14 + $0xf28] sm:$0xff]
    %v1735 = vld [vmem:[#allocation14 + $0xf30] sm:$0xff]
    %v1736 = vld [vmem:[#allocation14 + $0xf38] sm:$0xff]
    %v1737 = vld [vmem:[#allocation14 + $0xf40] sm:$0xff]
    %v1738 = vld [vmem:[#allocation14 + $0xf48] sm:$0xff]
    %v1739 = vld [vmem:[#allocation14 + $0xf50] sm:$0xff]
    %v1740 = vld [vmem:[#allocation14 + $0xf58] sm:$0xff]
    %v1741 = vld [vmem:[#allocation14 + $0xf60] sm:$0xff]
    %v1742 = vld [vmem:[#allocation14 + $0xf68] sm:$0xff]
    %v1743 = vld [vmem:[#allocation14 + $0xf70] sm:$0xff]
    %v1744 = vld [vmem:[#allocation14 + $0xf78] sm:$0xff]
    %v1745 = vld [vmem:[#allocation14 + $0xf80] sm:$0xff]
    %v1746 = vld [vmem:[#allocation14 + $0xf88] sm:$0xff]
    %v1747 = vld [vmem:[#allocation14 + $0xf90] sm:$0xff]
    %v1748 = vld [vmem:[#allocation14 + $0xf98] sm:$0xff]
    %v1749 = vld [vmem:[#allocation14 + $0xfa0] sm:$0xff]
    %v1750 = vld [vmem:[#allocation14 + $0xfa8] sm:$0xff]
    %v1751 = vld [vmem:[#allocation14 + $0xfb0] sm:$0xff]
    %v1752 = vld [vmem:[#allocation14 + $0xfb8] sm:$0xff]
    %v1753 = vld [vmem:[#allocation14 + $0xfc0] sm:$0xff]
    %v1754 = vld [vmem:[#allocation14 + $0xfc8] sm:$0xff]
    %v1755 = vld [vmem:[#allocation14 + $0xfd0] sm:$0xff]
    %v1756 = vld [vmem:[#allocation14 + $0xfd8] sm:$0xff]
    %v1757 = vld [vmem:[#allocation14 + $0xfe0] sm:$0xff]
    %v1758 = vld [vmem:[#allocation14 + $0xfe8] sm:$0xff]
    %v1759 = vld [vmem:[#allocation14 + $0xff0] sm:$0xff]
    %v1760 = vld [vmem:[#allocation14 + $0xff8] sm:$0xff]
    %v1761 = vunpack.c.l.s8.bf16 %v1249
    %v1762 = vunpack.c.l.s8.bf16 %v1250
    %v1763 = vunpack.c.l.s8.bf16 %v1251
    %v1764 = vunpack.c.l.s8.bf16 %v1252
    %v1765 = vunpack.c.l.s8.bf16 %v1253
    %v1766 = vunpack.c.l.s8.bf16 %v1254
    %v1767 = vunpack.c.l.s8.bf16 %v1255
    %v1768 = vunpack.c.l.s8.bf16 %v1256
    %v1769 = vunpack.c.l.s8.bf16 %v1257
    %v1770 = vunpack.c.l.s8.bf16 %v1258
    %v1771 = vunpack.c.l.s8.bf16 %v1259
    %v1772 = vunpack.c.l.s8.bf16 %v1260
    %v1773 = vunpack.c.l.s8.bf16 %v1261
    %v1774 = vunpack.c.l.s8.bf16 %v1262
    %v1775 = vunpack.c.l.s8.bf16 %v1263
    %v1776 = vunpack.c.l.s8.bf16 %v1264
    %v1777 = vunpack.c.h.s8.bf16 %v1249
    %v1778 = vunpack.c.h.s8.bf16 %v1250
    %v1779 = vunpack.c.h.s8.bf16 %v1251
    %v1780 = vunpack.c.h.s8.bf16 %v1252
    %v1781 = vunpack.c.h.s8.bf16 %v1253
    %v1782 = vunpack.c.h.s8.bf16 %v1254
    %v1783 = vunpack.c.h.s8.bf16 %v1255
    %v1784 = vunpack.c.h.s8.bf16 %v1256
    %v1785 = vunpack.c.h.s8.bf16 %v1257
    %v1786 = vunpack.c.h.s8.bf16 %v1258
    %v1787 = vunpack.c.h.s8.bf16 %v1259
    %v1788 = vunpack.c.h.s8.bf16 %v1260
    %v1789 = vunpack.c.h.s8.bf16 %v1261
    %v1790 = vunpack.c.h.s8.bf16 %v1262
    %v1791 = vunpack.c.h.s8.bf16 %v1263
    %v1792 = vunpack.c.h.s8.bf16 %v1264
    %v1793 = vunpack.c.l.s8.bf16 %v1265
    %v1794 = vunpack.c.l.s8.bf16 %v1266
    %v1795 = vunpack.c.l.s8.bf16 %v1267
    %v1796 = vunpack.c.l.s8.bf16 %v1268
    %v1797 = vunpack.c.l.s8.bf16 %v1269
    %v1798 = vunpack.c.l.s8.bf16 %v1270
    %v1799 = vunpack.c.l.s8.bf16 %v1271
    %v1800 = vunpack.c.l.s8.bf16 %v1272
    %v1801 = vunpack.c.l.s8.bf16 %v1273
    %v1802 = vunpack.c.l.s8.bf16 %v1274
    %v1803 = vunpack.c.l.s8.bf16 %v1275
    %v1804 = vunpack.c.l.s8.bf16 %v1276
    %v1805 = vunpack.c.l.s8.bf16 %v1277
    %v1806 = vunpack.c.l.s8.bf16 %v1278
    %v1807 = vunpack.c.l.s8.bf16 %v1279
    %v1808 = vunpack.c.l.s8.bf16 %v1280
    %v1809 = vunpack.c.h.s8.bf16 %v1265
    %v1810 = vunpack.c.h.s8.bf16 %v1266
    %v1811 = vunpack.c.h.s8.bf16 %v1267
    %v1812 = vunpack.c.h.s8.bf16 %v1268
    %v1813 = vunpack.c.h.s8.bf16 %v1269
    %v1814 = vunpack.c.h.s8.bf16 %v1270
    %v1815 = vunpack.c.h.s8.bf16 %v1271
    %v1816 = vunpack.c.h.s8.bf16 %v1272
    %v1817 = vunpack.c.h.s8.bf16 %v1273
    %v1818 = vunpack.c.h.s8.bf16 %v1274
    %v1819 = vunpack.c.h.s8.bf16 %v1275
    %v1820 = vunpack.c.h.s8.bf16 %v1276
    %v1821 = vunpack.c.h.s8.bf16 %v1277
    %v1822 = vunpack.c.h.s8.bf16 %v1278
    %v1823 = vunpack.c.h.s8.bf16 %v1279
    %v1824 = vunpack.c.h.s8.bf16 %v1280
    %v1825 = vunpack.c.l.s8.bf16 %v1281
    %v1826 = vunpack.c.l.s8.bf16 %v1282
    %v1827 = vunpack.c.l.s8.bf16 %v1283
    %v1828 = vunpack.c.l.s8.bf16 %v1284
    %v1829 = vunpack.c.l.s8.bf16 %v1285
    %v1830 = vunpack.c.l.s8.bf16 %v1286
    %v1831 = vunpack.c.l.s8.bf16 %v1287
    %v1832 = vunpack.c.l.s8.bf16 %v1288
    %v1833 = vunpack.c.l.s8.bf16 %v1289
    %v1834 = vunpack.c.l.s8.bf16 %v1290
    %v1835 = vunpack.c.l.s8.bf16 %v1291
    %v1836 = vunpack.c.l.s8.bf16 %v1292
    %v1837 = vunpack.c.l.s8.bf16 %v1293
    %v1838 = vunpack.c.l.s8.bf16 %v1294
    %v1839 = vunpack.c.l.s8.bf16 %v1295
    %v1840 = vunpack.c.l.s8.bf16 %v1296
    %v1841 = vunpack.c.h.s8.bf16 %v1281
    %v1842 = vunpack.c.h.s8.bf16 %v1282
    %v1843 = vunpack.c.h.s8.bf16 %v1283
    %v1844 = vunpack.c.h.s8.bf16 %v1284
    %v1845 = vunpack.c.h.s8.bf16 %v1285
    %v1846 = vunpack.c.h.s8.bf16 %v1286
    %v1847 = vunpack.c.h.s8.bf16 %v1287
    %v1848 = vunpack.c.h.s8.bf16 %v1288
    %v1849 = vunpack.c.h.s8.bf16 %v1289
    %v1850 = vunpack.c.h.s8.bf16 %v1290
    %v1851 = vunpack.c.h.s8.bf16 %v1291
    %v1852 = vunpack.c.h.s8.bf16 %v1292
    %v1853 = vunpack.c.h.s8.bf16 %v1293
    %v1854 = vunpack.c.h.s8.bf16 %v1294
    %v1855 = vunpack.c.h.s8.bf16 %v1295
    %v1856 = vunpack.c.h.s8.bf16 %v1296
    %v1857 = vunpack.c.l.s8.bf16 %v1297
    %v1858 = vunpack.c.l.s8.bf16 %v1298
    %v1859 = vunpack.c.l.s8.bf16 %v1299
    %v1860 = vunpack.c.l.s8.bf16 %v1300
    %v1861 = vunpack.c.l.s8.bf16 %v1301
    %v1862 = vunpack.c.l.s8.bf16 %v1302
    %v1863 = vunpack.c.l.s8.bf16 %v1303
    %v1864 = vunpack.c.l.s8.bf16 %v1304
    %v1865 = vunpack.c.l.s8.bf16 %v1305
    %v1866 = vunpack.c.l.s8.bf16 %v1306
    %v1867 = vunpack.c.l.s8.bf16 %v1307
    %v1868 = vunpack.c.l.s8.bf16 %v1308
    %v1869 = vunpack.c.l.s8.bf16 %v1309
    %v1870 = vunpack.c.l.s8.bf16 %v1310
    %v1871 = vunpack.c.l.s8.bf16 %v1311
    %v1872 = vunpack.c.l.s8.bf16 %v1312
    %v1873 = vunpack.c.h.s8.bf16 %v1297
    %v1874 = vunpack.c.h.s8.bf16 %v1298
    %v1875 = vunpack.c.h.s8.bf16 %v1299
    %v1876 = vunpack.c.h.s8.bf16 %v1300
    %v1877 = vunpack.c.h.s8.bf16 %v1301
    %v1878 = vunpack.c.h.s8.bf16 %v1302
    %v1879 = vunpack.c.h.s8.bf16 %v1303
    %v1880 = vunpack.c.h.s8.bf16 %v1304
    %v1881 = vunpack.c.h.s8.bf16 %v1305
    %v1882 = vunpack.c.h.s8.bf16 %v1306
    %v1883 = vunpack.c.h.s8.bf16 %v1307
    %v1884 = vunpack.c.h.s8.bf16 %v1308
    %v1885 = vunpack.c.h.s8.bf16 %v1309
    %v1886 = vunpack.c.h.s8.bf16 %v1310
    %v1887 = vunpack.c.h.s8.bf16 %v1311
    %v1888 = vunpack.c.h.s8.bf16 %v1312
    %v1889 = vunpack.c.l.s8.bf16 %v1313
    %v1890 = vunpack.c.l.s8.bf16 %v1314
    %v1891 = vunpack.c.l.s8.bf16 %v1315
    %v1892 = vunpack.c.l.s8.bf16 %v1316
    %v1893 = vunpack.c.l.s8.bf16 %v1317
    %v1894 = vunpack.c.l.s8.bf16 %v1318
    %v1895 = vunpack.c.l.s8.bf16 %v1319
    %v1896 = vunpack.c.l.s8.bf16 %v1320
    %v1897 = vunpack.c.l.s8.bf16 %v1321
    %v1898 = vunpack.c.l.s8.bf16 %v1322
    %v1899 = vunpack.c.l.s8.bf16 %v1323
    %v1900 = vunpack.c.l.s8.bf16 %v1324
    %v1901 = vunpack.c.l.s8.bf16 %v1325
    %v1902 = vunpack.c.l.s8.bf16 %v1326
    %v1903 = vunpack.c.l.s8.bf16 %v1327
    %v1904 = vunpack.c.l.s8.bf16 %v1328
    %v1905 = vunpack.c.h.s8.bf16 %v1313
    %v1906 = vunpack.c.h.s8.bf16 %v1314
    %v1907 = vunpack.c.h.s8.bf16 %v1315
    %v1908 = vunpack.c.h.s8.bf16 %v1316
    %v1909 = vunpack.c.h.s8.bf16 %v1317
    %v1910 = vunpack.c.h.s8.bf16 %v1318
    %v1911 = vunpack.c.h.s8.bf16 %v1319
    %v1912 = vunpack.c.h.s8.bf16 %v1320
    %v1913 = vunpack.c.h.s8.bf16 %v1321
    %v1914 = vunpack.c.h.s8.bf16 %v1322
    %v1915 = vunpack.c.h.s8.bf16 %v1323
    %v1916 = vunpack.c.h.s8.bf16 %v1324
    %v1917 = vunpack.c.h.s8.bf16 %v1325
    %v1918 = vunpack.c.h.s8.bf16 %v1326
    %v1919 = vunpack.c.h.s8.bf16 %v1327
    %v1920 = vunpack.c.h.s8.bf16 %v1328
    %v1921 = vunpack.c.l.s8.bf16 %v1329
    %v1922 = vunpack.c.l.s8.bf16 %v1330
    %v1923 = vunpack.c.l.s8.bf16 %v1331
    %v1924 = vunpack.c.l.s8.bf16 %v1332
    %v1925 = vunpack.c.l.s8.bf16 %v1333
    %v1926 = vunpack.c.l.s8.bf16 %v1334
    %v1927 = vunpack.c.l.s8.bf16 %v1335
    %v1928 = vunpack.c.l.s8.bf16 %v1336
    %v1929 = vunpack.c.l.s8.bf16 %v1337
    %v1930 = vunpack.c.l.s8.bf16 %v1338
    %v1931 = vunpack.c.l.s8.bf16 %v1339
    %v1932 = vunpack.c.l.s8.bf16 %v1340
    %v1933 = vunpack.c.l.s8.bf16 %v1341
    %v1934 = vunpack.c.l.s8.bf16 %v1342
    %v1935 = vunpack.c.l.s8.bf16 %v1343
    %v1936 = vunpack.c.l.s8.bf16 %v1344
    %v1937 = vunpack.c.h.s8.bf16 %v1329
    %v1938 = vunpack.c.h.s8.bf16 %v1330
    %v1939 = vunpack.c.h.s8.bf16 %v1331
    %v1940 = vunpack.c.h.s8.bf16 %v1332
    %v1941 = vunpack.c.h.s8.bf16 %v1333
    %v1942 = vunpack.c.h.s8.bf16 %v1334
    %v1943 = vunpack.c.h.s8.bf16 %v1335
    %v1944 = vunpack.c.h.s8.bf16 %v1336
    %v1945 = vunpack.c.h.s8.bf16 %v1337
    %v1946 = vunpack.c.h.s8.bf16 %v1338
    %v1947 = vunpack.c.h.s8.bf16 %v1339
    %v1948 = vunpack.c.h.s8.bf16 %v1340
    %v1949 = vunpack.c.h.s8.bf16 %v1341
    %v1950 = vunpack.c.h.s8.bf16 %v1342
    %v1951 = vunpack.c.h.s8.bf16 %v1343
    %v1952 = vunpack.c.h.s8.bf16 %v1344
    %v1953 = vunpack.c.l.s8.bf16 %v1345
    %v1954 = vunpack.c.l.s8.bf16 %v1346
    %v1955 = vunpack.c.l.s8.bf16 %v1347
    %v1956 = vunpack.c.l.s8.bf16 %v1348
    %v1957 = vunpack.c.l.s8.bf16 %v1349
    %v1958 = vunpack.c.l.s8.bf16 %v1350
    %v1959 = vunpack.c.l.s8.bf16 %v1351
    %v1960 = vunpack.c.l.s8.bf16 %v1352
    %v1961 = vunpack.c.l.s8.bf16 %v1353
    %v1962 = vunpack.c.l.s8.bf16 %v1354
    %v1963 = vunpack.c.l.s8.bf16 %v1355
    %v1964 = vunpack.c.l.s8.bf16 %v1356
    %v1965 = vunpack.c.l.s8.bf16 %v1357
    %v1966 = vunpack.c.l.s8.bf16 %v1358
    %v1967 = vunpack.c.l.s8.bf16 %v1359
    %v1968 = vunpack.c.l.s8.bf16 %v1360
    %v1969 = vunpack.c.h.s8.bf16 %v1345
    %v1970 = vunpack.c.h.s8.bf16 %v1346
    %v1971 = vunpack.c.h.s8.bf16 %v1347
    %v1972 = vunpack.c.h.s8.bf16 %v1348
    %v1973 = vunpack.c.h.s8.bf16 %v1349
    %v1974 = vunpack.c.h.s8.bf16 %v1350
    %v1975 = vunpack.c.h.s8.bf16 %v1351
    %v1976 = vunpack.c.h.s8.bf16 %v1352
    %v1977 = vunpack.c.h.s8.bf16 %v1353
    %v1978 = vunpack.c.h.s8.bf16 %v1354
    %v1979 = vunpack.c.h.s8.bf16 %v1355
    %v1980 = vunpack.c.h.s8.bf16 %v1356
    %v1981 = vunpack.c.h.s8.bf16 %v1357
    %v1982 = vunpack.c.h.s8.bf16 %v1358
    %v1983 = vunpack.c.h.s8.bf16 %v1359
    %v1984 = vunpack.c.h.s8.bf16 %v1360
    %v1985 = vunpack.c.l.s8.bf16 %v1361
    %v1986 = vunpack.c.l.s8.bf16 %v1362
    %v1987 = vunpack.c.l.s8.bf16 %v1363
    %v1988 = vunpack.c.l.s8.bf16 %v1364
    %v1989 = vunpack.c.l.s8.bf16 %v1365
    %v1990 = vunpack.c.l.s8.bf16 %v1366
    %v1991 = vunpack.c.l.s8.bf16 %v1367
    %v1992 = vunpack.c.l.s8.bf16 %v1368
    %v1993 = vunpack.c.l.s8.bf16 %v1369
    %v1994 = vunpack.c.l.s8.bf16 %v1370
    %v1995 = vunpack.c.l.s8.bf16 %v1371
    %v1996 = vunpack.c.l.s8.bf16 %v1372
    %v1997 = vunpack.c.l.s8.bf16 %v1373
    %v1998 = vunpack.c.l.s8.bf16 %v1374
    %v1999 = vunpack.c.l.s8.bf16 %v1375
    %v2000 = vunpack.c.l.s8.bf16 %v1376
    %v2001 = vunpack.c.h.s8.bf16 %v1361
    %v2002 = vunpack.c.h.s8.bf16 %v1362
    %v2003 = vunpack.c.h.s8.bf16 %v1363
    %v2004 = vunpack.c.h.s8.bf16 %v1364
    %v2005 = vunpack.c.h.s8.bf16 %v1365
    %v2006 = vunpack.c.h.s8.bf16 %v1366
    %v2007 = vunpack.c.h.s8.bf16 %v1367
    %v2008 = vunpack.c.h.s8.bf16 %v1368
    %v2009 = vunpack.c.h.s8.bf16 %v1369
    %v2010 = vunpack.c.h.s8.bf16 %v1370
    %v2011 = vunpack.c.h.s8.bf16 %v1371
    %v2012 = vunpack.c.h.s8.bf16 %v1372
    %v2013 = vunpack.c.h.s8.bf16 %v1373
    %v2014 = vunpack.c.h.s8.bf16 %v1374
    %v2015 = vunpack.c.h.s8.bf16 %v1375
    %v2016 = vunpack.c.h.s8.bf16 %v1376
    %v2017 = vunpack.c.l.s8.bf16 %v1377
    %v2018 = vunpack.c.l.s8.bf16 %v1378
    %v2019 = vunpack.c.l.s8.bf16 %v1379
    %v2020 = vunpack.c.l.s8.bf16 %v1380
    %v2021 = vunpack.c.l.s8.bf16 %v1381
    %v2022 = vunpack.c.l.s8.bf16 %v1382
    %v2023 = vunpack.c.l.s8.bf16 %v1383
    %v2024 = vunpack.c.l.s8.bf16 %v1384
    %v2025 = vunpack.c.l.s8.bf16 %v1385
    %v2026 = vunpack.c.l.s8.bf16 %v1386
    %v2027 = vunpack.c.l.s8.bf16 %v1387
    %v2028 = vunpack.c.l.s8.bf16 %v1388
    %v2029 = vunpack.c.l.s8.bf16 %v1389
    %v2030 = vunpack.c.l.s8.bf16 %v1390
    %v2031 = vunpack.c.l.s8.bf16 %v1391
    %v2032 = vunpack.c.l.s8.bf16 %v1392
    %v2033 = vunpack.c.h.s8.bf16 %v1377
    %v2034 = vunpack.c.h.s8.bf16 %v1378
    %v2035 = vunpack.c.h.s8.bf16 %v1379
    %v2036 = vunpack.c.h.s8.bf16 %v1380
    %v2037 = vunpack.c.h.s8.bf16 %v1381
    %v2038 = vunpack.c.h.s8.bf16 %v1382
    %v2039 = vunpack.c.h.s8.bf16 %v1383
    %v2040 = vunpack.c.h.s8.bf16 %v1384
    %v2041 = vunpack.c.h.s8.bf16 %v1385
    %v2042 = vunpack.c.h.s8.bf16 %v1386
    %v2043 = vunpack.c.h.s8.bf16 %v1387
    %v2044 = vunpack.c.h.s8.bf16 %v1388
    %v2045 = vunpack.c.h.s8.bf16 %v1389
    %v2046 = vunpack.c.h.s8.bf16 %v1390
    %v2047 = vunpack.c.h.s8.bf16 %v1391
    %v2048 = vunpack.c.h.s8.bf16 %v1392
    %v2049 = vunpack.c.l.s8.bf16 %v1393
    %v2050 = vunpack.c.l.s8.bf16 %v1394
    %v2051 = vunpack.c.l.s8.bf16 %v1395
    %v2052 = vunpack.c.l.s8.bf16 %v1396
    %v2053 = vunpack.c.l.s8.bf16 %v1397
    %v2054 = vunpack.c.l.s8.bf16 %v1398
    %v2055 = vunpack.c.l.s8.bf16 %v1399
    %v2056 = vunpack.c.l.s8.bf16 %v1400
    %v2057 = vunpack.c.l.s8.bf16 %v1401
    %v2058 = vunpack.c.l.s8.bf16 %v1402
    %v2059 = vunpack.c.l.s8.bf16 %v1403
    %v2060 = vunpack.c.l.s8.bf16 %v1404
    %v2061 = vunpack.c.l.s8.bf16 %v1405
    %v2062 = vunpack.c.l.s8.bf16 %v1406
    %v2063 = vunpack.c.l.s8.bf16 %v1407
    %v2064 = vunpack.c.l.s8.bf16 %v1408
    %v2065 = vunpack.c.h.s8.bf16 %v1393
    %v2066 = vunpack.c.h.s8.bf16 %v1394
    %v2067 = vunpack.c.h.s8.bf16 %v1395
    %v2068 = vunpack.c.h.s8.bf16 %v1396
    %v2069 = vunpack.c.h.s8.bf16 %v1397
    %v2070 = vunpack.c.h.s8.bf16 %v1398
    %v2071 = vunpack.c.h.s8.bf16 %v1399
    %v2072 = vunpack.c.h.s8.bf16 %v1400
    %v2073 = vunpack.c.h.s8.bf16 %v1401
    %v2074 = vunpack.c.h.s8.bf16 %v1402
    %v2075 = vunpack.c.h.s8.bf16 %v1403
    %v2076 = vunpack.c.h.s8.bf16 %v1404
    %v2077 = vunpack.c.h.s8.bf16 %v1405
    %v2078 = vunpack.c.h.s8.bf16 %v1406
    %v2079 = vunpack.c.h.s8.bf16 %v1407
    %v2080 = vunpack.c.h.s8.bf16 %v1408
    %v2081 = vunpack.c.l.s8.bf16 %v1409
    %v2082 = vunpack.c.l.s8.bf16 %v1410
    %v2083 = vunpack.c.l.s8.bf16 %v1411
    %v2084 = vunpack.c.l.s8.bf16 %v1412
    %v2085 = vunpack.c.l.s8.bf16 %v1413
    %v2086 = vunpack.c.l.s8.bf16 %v1414
    %v2087 = vunpack.c.l.s8.bf16 %v1415
    %v2088 = vunpack.c.l.s8.bf16 %v1416
    %v2089 = vunpack.c.l.s8.bf16 %v1417
    %v2090 = vunpack.c.l.s8.bf16 %v1418
    %v2091 = vunpack.c.l.s8.bf16 %v1419
    %v2092 = vunpack.c.l.s8.bf16 %v1420
    %v2093 = vunpack.c.l.s8.bf16 %v1421
    %v2094 = vunpack.c.l.s8.bf16 %v1422
    %v2095 = vunpack.c.l.s8.bf16 %v1423
    %v2096 = vunpack.c.l.s8.bf16 %v1424
    %v2097 = vunpack.c.h.s8.bf16 %v1409
    %v2098 = vunpack.c.h.s8.bf16 %v1410
    %v2099 = vunpack.c.h.s8.bf16 %v1411
    %v2100 = vunpack.c.h.s8.bf16 %v1412
    %v2101 = vunpack.c.h.s8.bf16 %v1413
    %v2102 = vunpack.c.h.s8.bf16 %v1414
    %v2103 = vunpack.c.h.s8.bf16 %v1415
    %v2104 = vunpack.c.h.s8.bf16 %v1416
    %v2105 = vunpack.c.h.s8.bf16 %v1417
    %v2106 = vunpack.c.h.s8.bf16 %v1418
    %v2107 = vunpack.c.h.s8.bf16 %v1419
    %v2108 = vunpack.c.h.s8.bf16 %v1420
    %v2109 = vunpack.c.h.s8.bf16 %v1421
    %v2110 = vunpack.c.h.s8.bf16 %v1422
    %v2111 = vunpack.c.h.s8.bf16 %v1423
    %v2112 = vunpack.c.h.s8.bf16 %v1424
    %v2113 = vunpack.c.l.s8.bf16 %v1425
    %v2114 = vunpack.c.l.s8.bf16 %v1426
    %v2115 = vunpack.c.l.s8.bf16 %v1427
    %v2116 = vunpack.c.l.s8.bf16 %v1428
    %v2117 = vunpack.c.l.s8.bf16 %v1429
    %v2118 = vunpack.c.l.s8.bf16 %v1430
    %v2119 = vunpack.c.l.s8.bf16 %v1431
    %v2120 = vunpack.c.l.s8.bf16 %v1432
    %v2121 = vunpack.c.l.s8.bf16 %v1433
    %v2122 = vunpack.c.l.s8.bf16 %v1434
    %v2123 = vunpack.c.l.s8.bf16 %v1435
    %v2124 = vunpack.c.l.s8.bf16 %v1436
    %v2125 = vunpack.c.l.s8.bf16 %v1437
    %v2126 = vunpack.c.l.s8.bf16 %v1438
    %v2127 = vunpack.c.l.s8.bf16 %v1439
    %v2128 = vunpack.c.l.s8.bf16 %v1440
    %v2129 = vunpack.c.h.s8.bf16 %v1425
    %v2130 = vunpack.c.h.s8.bf16 %v1426
    %v2131 = vunpack.c.h.s8.bf16 %v1427
    %v2132 = vunpack.c.h.s8.bf16 %v1428
    %v2133 = vunpack.c.h.s8.bf16 %v1429
    %v2134 = vunpack.c.h.s8.bf16 %v1430
    %v2135 = vunpack.c.h.s8.bf16 %v1431
    %v2136 = vunpack.c.h.s8.bf16 %v1432
    %v2137 = vunpack.c.h.s8.bf16 %v1433
    %v2138 = vunpack.c.h.s8.bf16 %v1434
    %v2139 = vunpack.c.h.s8.bf16 %v1435
    %v2140 = vunpack.c.h.s8.bf16 %v1436
    %v2141 = vunpack.c.h.s8.bf16 %v1437
    %v2142 = vunpack.c.h.s8.bf16 %v1438
    %v2143 = vunpack.c.h.s8.bf16 %v1439
    %v2144 = vunpack.c.h.s8.bf16 %v1440
    %v2145 = vunpack.c.l.s8.bf16 %v1441
    %v2146 = vunpack.c.l.s8.bf16 %v1442
    %v2147 = vunpack.c.l.s8.bf16 %v1443
    %v2148 = vunpack.c.l.s8.bf16 %v1444
    %v2149 = vunpack.c.l.s8.bf16 %v1445
    %v2150 = vunpack.c.l.s8.bf16 %v1446
    %v2151 = vunpack.c.l.s8.bf16 %v1447
    %v2152 = vunpack.c.l.s8.bf16 %v1448
    %v2153 = vunpack.c.l.s8.bf16 %v1449
    %v2154 = vunpack.c.l.s8.bf16 %v1450
    %v2155 = vunpack.c.l.s8.bf16 %v1451
    %v2156 = vunpack.c.l.s8.bf16 %v1452
    %v2157 = vunpack.c.l.s8.bf16 %v1453
    %v2158 = vunpack.c.l.s8.bf16 %v1454
    %v2159 = vunpack.c.l.s8.bf16 %v1455
    %v2160 = vunpack.c.l.s8.bf16 %v1456
    %v2161 = vunpack.c.h.s8.bf16 %v1441
    %v2162 = vunpack.c.h.s8.bf16 %v1442
    %v2163 = vunpack.c.h.s8.bf16 %v1443
    %v2164 = vunpack.c.h.s8.bf16 %v1444
    %v2165 = vunpack.c.h.s8.bf16 %v1445
    %v2166 = vunpack.c.h.s8.bf16 %v1446
    %v2167 = vunpack.c.h.s8.bf16 %v1447
    %v2168 = vunpack.c.h.s8.bf16 %v1448
    %v2169 = vunpack.c.h.s8.bf16 %v1449
    %v2170 = vunpack.c.h.s8.bf16 %v1450
    %v2171 = vunpack.c.h.s8.bf16 %v1451
    %v2172 = vunpack.c.h.s8.bf16 %v1452
    %v2173 = vunpack.c.h.s8.bf16 %v1453
    %v2174 = vunpack.c.h.s8.bf16 %v1454
    %v2175 = vunpack.c.h.s8.bf16 %v1455
    %v2176 = vunpack.c.h.s8.bf16 %v1456
    %v2177 = vunpack.c.l.s8.bf16 %v1457
    %v2178 = vunpack.c.l.s8.bf16 %v1458
    %v2179 = vunpack.c.l.s8.bf16 %v1459
    %v2180 = vunpack.c.l.s8.bf16 %v1460
    %v2181 = vunpack.c.l.s8.bf16 %v1461
    %v2182 = vunpack.c.l.s8.bf16 %v1462
    %v2183 = vunpack.c.l.s8.bf16 %v1463
    %v2184 = vunpack.c.l.s8.bf16 %v1464
    %v2185 = vunpack.c.l.s8.bf16 %v1465
    %v2186 = vunpack.c.l.s8.bf16 %v1466
    %v2187 = vunpack.c.l.s8.bf16 %v1467
    %v2188 = vunpack.c.l.s8.bf16 %v1468
    %v2189 = vunpack.c.l.s8.bf16 %v1469
    %v2190 = vunpack.c.l.s8.bf16 %v1470
    %v2191 = vunpack.c.l.s8.bf16 %v1471
    %v2192 = vunpack.c.l.s8.bf16 %v1472
    %v2193 = vunpack.c.h.s8.bf16 %v1457
    %v2194 = vunpack.c.h.s8.bf16 %v1458
    %v2195 = vunpack.c.h.s8.bf16 %v1459
    %v2196 = vunpack.c.h.s8.bf16 %v1460
    %v2197 = vunpack.c.h.s8.bf16 %v1461
    %v2198 = vunpack.c.h.s8.bf16 %v1462
    %v2199 = vunpack.c.h.s8.bf16 %v1463
    %v2200 = vunpack.c.h.s8.bf16 %v1464
    %v2201 = vunpack.c.h.s8.bf16 %v1465
    %v2202 = vunpack.c.h.s8.bf16 %v1466
    %v2203 = vunpack.c.h.s8.bf16 %v1467
    %v2204 = vunpack.c.h.s8.bf16 %v1468
    %v2205 = vunpack.c.h.s8.bf16 %v1469
    %v2206 = vunpack.c.h.s8.bf16 %v1470
    %v2207 = vunpack.c.h.s8.bf16 %v1471
    %v2208 = vunpack.c.h.s8.bf16 %v1472
    %v2209 = vunpack.c.l.s8.bf16 %v1473
    %v2210 = vunpack.c.l.s8.bf16 %v1474
    %v2211 = vunpack.c.l.s8.bf16 %v1475
    %v2212 = vunpack.c.l.s8.bf16 %v1476
    %v2213 = vunpack.c.l.s8.bf16 %v1477
    %v2214 = vunpack.c.l.s8.bf16 %v1478
    %v2215 = vunpack.c.l.s8.bf16 %v1479
    %v2216 = vunpack.c.l.s8.bf16 %v1480
    %v2217 = vunpack.c.l.s8.bf16 %v1481
    %v2218 = vunpack.c.l.s8.bf16 %v1482
    %v2219 = vunpack.c.l.s8.bf16 %v1483
    %v2220 = vunpack.c.l.s8.bf16 %v1484
    %v2221 = vunpack.c.l.s8.bf16 %v1485
    %v2222 = vunpack.c.l.s8.bf16 %v1486
    %v2223 = vunpack.c.l.s8.bf16 %v1487
    %v2224 = vunpack.c.l.s8.bf16 %v1488
    %v2225 = vunpack.c.h.s8.bf16 %v1473
    %v2226 = vunpack.c.h.s8.bf16 %v1474
    %v2227 = vunpack.c.h.s8.bf16 %v1475
    %v2228 = vunpack.c.h.s8.bf16 %v1476
    %v2229 = vunpack.c.h.s8.bf16 %v1477
    %v2230 = vunpack.c.h.s8.bf16 %v1478
    %v2231 = vunpack.c.h.s8.bf16 %v1479
    %v2232 = vunpack.c.h.s8.bf16 %v1480
    %v2233 = vunpack.c.h.s8.bf16 %v1481
    %v2234 = vunpack.c.h.s8.bf16 %v1482
    %v2235 = vunpack.c.h.s8.bf16 %v1483
    %v2236 = vunpack.c.h.s8.bf16 %v1484
    %v2237 = vunpack.c.h.s8.bf16 %v1485
    %v2238 = vunpack.c.h.s8.bf16 %v1486
    %v2239 = vunpack.c.h.s8.bf16 %v1487
    %v2240 = vunpack.c.h.s8.bf16 %v1488
    %v2241 = vunpack.c.l.s8.bf16 %v1489
    %v2242 = vunpack.c.l.s8.bf16 %v1490
    %v2243 = vunpack.c.l.s8.bf16 %v1491
    %v2244 = vunpack.c.l.s8.bf16 %v1492
    %v2245 = vunpack.c.l.s8.bf16 %v1493
    %v2246 = vunpack.c.l.s8.bf16 %v1494
    %v2247 = vunpack.c.l.s8.bf16 %v1495
    %v2248 = vunpack.c.l.s8.bf16 %v1496
    %v2249 = vunpack.c.l.s8.bf16 %v1497
    %v2250 = vunpack.c.l.s8.bf16 %v1498
    %v2251 = vunpack.c.l.s8.bf16 %v1499
    %v2252 = vunpack.c.l.s8.bf16 %v1500
    %v2253 = vunpack.c.l.s8.bf16 %v1501
    %v2254 = vunpack.c.l.s8.bf16 %v1502
    %v2255 = vunpack.c.l.s8.bf16 %v1503
    %v2256 = vunpack.c.l.s8.bf16 %v1504
    %v2257 = vunpack.c.h.s8.bf16 %v1489
    %v2258 = vunpack.c.h.s8.bf16 %v1490
    %v2259 = vunpack.c.h.s8.bf16 %v1491
    %v2260 = vunpack.c.h.s8.bf16 %v1492
    %v2261 = vunpack.c.h.s8.bf16 %v1493
    %v2262 = vunpack.c.h.s8.bf16 %v1494
    %v2263 = vunpack.c.h.s8.bf16 %v1495
    %v2264 = vunpack.c.h.s8.bf16 %v1496
    %v2265 = vunpack.c.h.s8.bf16 %v1497
    %v2266 = vunpack.c.h.s8.bf16 %v1498
    %v2267 = vunpack.c.h.s8.bf16 %v1499
    %v2268 = vunpack.c.h.s8.bf16 %v1500
    %v2269 = vunpack.c.h.s8.bf16 %v1501
    %v2270 = vunpack.c.h.s8.bf16 %v1502
    %v2271 = vunpack.c.h.s8.bf16 %v1503
    %v2272 = vunpack.c.h.s8.bf16 %v1504
    %v2273 = vunpack.c.l.s8.bf16 %v1505
    %v2274 = vunpack.c.l.s8.bf16 %v1506
    %v2275 = vunpack.c.l.s8.bf16 %v1507
    %v2276 = vunpack.c.l.s8.bf16 %v1508
    %v2277 = vunpack.c.l.s8.bf16 %v1509
    %v2278 = vunpack.c.l.s8.bf16 %v1510
    %v2279 = vunpack.c.l.s8.bf16 %v1511
    %v2280 = vunpack.c.l.s8.bf16 %v1512
    %v2281 = vunpack.c.l.s8.bf16 %v1513
    %v2282 = vunpack.c.l.s8.bf16 %v1514
    %v2283 = vunpack.c.l.s8.bf16 %v1515
    %v2284 = vunpack.c.l.s8.bf16 %v1516
    %v2285 = vunpack.c.l.s8.bf16 %v1517
    %v2286 = vunpack.c.l.s8.bf16 %v1518
    %v2287 = vunpack.c.l.s8.bf16 %v1519
    %v2288 = vunpack.c.l.s8.bf16 %v1520
    %v2289 = vunpack.c.h.s8.bf16 %v1505
    %v2290 = vunpack.c.h.s8.bf16 %v1506
    %v2291 = vunpack.c.h.s8.bf16 %v1507
    %v2292 = vunpack.c.h.s8.bf16 %v1508
    %v2293 = vunpack.c.h.s8.bf16 %v1509
    %v2294 = vunpack.c.h.s8.bf16 %v1510
    %v2295 = vunpack.c.h.s8.bf16 %v1511
    %v2296 = vunpack.c.h.s8.bf16 %v1512
    %v2297 = vunpack.c.h.s8.bf16 %v1513
    %v2298 = vunpack.c.h.s8.bf16 %v1514
    %v2299 = vunpack.c.h.s8.bf16 %v1515
    %v2300 = vunpack.c.h.s8.bf16 %v1516
    %v2301 = vunpack.c.h.s8.bf16 %v1517
    %v2302 = vunpack.c.h.s8.bf16 %v1518
    %v2303 = vunpack.c.h.s8.bf16 %v1519
    %v2304 = vunpack.c.h.s8.bf16 %v1520
    %v2305 = vunpack.c.l.s8.bf16 %v1521
    %v2306 = vunpack.c.l.s8.bf16 %v1522
    %v2307 = vunpack.c.l.s8.bf16 %v1523
    %v2308 = vunpack.c.l.s8.bf16 %v1524
    %v2309 = vunpack.c.l.s8.bf16 %v1525
    %v2310 = vunpack.c.l.s8.bf16 %v1526
    %v2311 = vunpack.c.l.s8.bf16 %v1527
    %v2312 = vunpack.c.l.s8.bf16 %v1528
    %v2313 = vunpack.c.l.s8.bf16 %v1529
    %v2314 = vunpack.c.l.s8.bf16 %v1530
    %v2315 = vunpack.c.l.s8.bf16 %v1531
    %v2316 = vunpack.c.l.s8.bf16 %v1532
    %v2317 = vunpack.c.l.s8.bf16 %v1533
    %v2318 = vunpack.c.l.s8.bf16 %v1534
    %v2319 = vunpack.c.l.s8.bf16 %v1535
    %v2320 = vunpack.c.l.s8.bf16 %v1536
    %v2321 = vunpack.c.h.s8.bf16 %v1521
    %v2322 = vunpack.c.h.s8.bf16 %v1522
    %v2323 = vunpack.c.h.s8.bf16 %v1523
    %v2324 = vunpack.c.h.s8.bf16 %v1524
    %v2325 = vunpack.c.h.s8.bf16 %v1525
    %v2326 = vunpack.c.h.s8.bf16 %v1526
    %v2327 = vunpack.c.h.s8.bf16 %v1527
    %v2328 = vunpack.c.h.s8.bf16 %v1528
    %v2329 = vunpack.c.h.s8.bf16 %v1529
    %v2330 = vunpack.c.h.s8.bf16 %v1530
    %v2331 = vunpack.c.h.s8.bf16 %v1531
    %v2332 = vunpack.c.h.s8.bf16 %v1532
    %v2333 = vunpack.c.h.s8.bf16 %v1533
    %v2334 = vunpack.c.h.s8.bf16 %v1534
    %v2335 = vunpack.c.h.s8.bf16 %v1535
    %v2336 = vunpack.c.h.s8.bf16 %v1536
    %v2337 = vunpack.c.l.s8.bf16 %v1537
    %v2338 = vunpack.c.l.s8.bf16 %v1538
    %v2339 = vunpack.c.l.s8.bf16 %v1539
    %v2340 = vunpack.c.l.s8.bf16 %v1540
    %v2341 = vunpack.c.l.s8.bf16 %v1541
    %v2342 = vunpack.c.l.s8.bf16 %v1542
    %v2343 = vunpack.c.l.s8.bf16 %v1543
    %v2344 = vunpack.c.l.s8.bf16 %v1544
    %v2345 = vunpack.c.l.s8.bf16 %v1545
    %v2346 = vunpack.c.l.s8.bf16 %v1546
    %v2347 = vunpack.c.l.s8.bf16 %v1547
    %v2348 = vunpack.c.l.s8.bf16 %v1548
    %v2349 = vunpack.c.l.s8.bf16 %v1549
    %v2350 = vunpack.c.l.s8.bf16 %v1550
    %v2351 = vunpack.c.l.s8.bf16 %v1551
    %v2352 = vunpack.c.l.s8.bf16 %v1552
    %v2353 = vunpack.c.h.s8.bf16 %v1537
    %v2354 = vunpack.c.h.s8.bf16 %v1538
    %v2355 = vunpack.c.h.s8.bf16 %v1539
    %v2356 = vunpack.c.h.s8.bf16 %v1540
    %v2357 = vunpack.c.h.s8.bf16 %v1541
    %v2358 = vunpack.c.h.s8.bf16 %v1542
    %v2359 = vunpack.c.h.s8.bf16 %v1543
    %v2360 = vunpack.c.h.s8.bf16 %v1544
    %v2361 = vunpack.c.h.s8.bf16 %v1545
    %v2362 = vunpack.c.h.s8.bf16 %v1546
    %v2363 = vunpack.c.h.s8.bf16 %v1547
    %v2364 = vunpack.c.h.s8.bf16 %v1548
    %v2365 = vunpack.c.h.s8.bf16 %v1549
    %v2366 = vunpack.c.h.s8.bf16 %v1550
    %v2367 = vunpack.c.h.s8.bf16 %v1551
    %v2368 = vunpack.c.h.s8.bf16 %v1552
    %v2369 = vunpack.c.l.s8.bf16 %v1553
    %v2370 = vunpack.c.l.s8.bf16 %v1554
    %v2371 = vunpack.c.l.s8.bf16 %v1555
    %v2372 = vunpack.c.l.s8.bf16 %v1556
    %v2373 = vunpack.c.l.s8.bf16 %v1557
    %v2374 = vunpack.c.l.s8.bf16 %v1558
    %v2375 = vunpack.c.l.s8.bf16 %v1559
    %v2376 = vunpack.c.l.s8.bf16 %v1560
    %v2377 = vunpack.c.l.s8.bf16 %v1561
    %v2378 = vunpack.c.l.s8.bf16 %v1562
    %v2379 = vunpack.c.l.s8.bf16 %v1563
    %v2380 = vunpack.c.l.s8.bf16 %v1564
    %v2381 = vunpack.c.l.s8.bf16 %v1565
    %v2382 = vunpack.c.l.s8.bf16 %v1566
    %v2383 = vunpack.c.l.s8.bf16 %v1567
    %v2384 = vunpack.c.l.s8.bf16 %v1568
    %v2385 = vunpack.c.h.s8.bf16 %v1553
    %v2386 = vunpack.c.h.s8.bf16 %v1554
    %v2387 = vunpack.c.h.s8.bf16 %v1555
    %v2388 = vunpack.c.h.s8.bf16 %v1556
    %v2389 = vunpack.c.h.s8.bf16 %v1557
    %v2390 = vunpack.c.h.s8.bf16 %v1558
    %v2391 = vunpack.c.h.s8.bf16 %v1559
    %v2392 = vunpack.c.h.s8.bf16 %v1560
    %v2393 = vunpack.c.h.s8.bf16 %v1561
    %v2394 = vunpack.c.h.s8.bf16 %v1562
    %v2395 = vunpack.c.h.s8.bf16 %v1563
    %v2396 = vunpack.c.h.s8.bf16 %v1564
    %v2397 = vunpack.c.h.s8.bf16 %v1565
    %v2398 = vunpack.c.h.s8.bf16 %v1566
    %v2399 = vunpack.c.h.s8.bf16 %v1567
    %v2400 = vunpack.c.h.s8.bf16 %v1568
    %v2401 = vunpack.c.l.s8.bf16 %v1569
    %v2402 = vunpack.c.l.s8.bf16 %v1570
    %v2403 = vunpack.c.l.s8.bf16 %v1571
    %v2404 = vunpack.c.l.s8.bf16 %v1572
    %v2405 = vunpack.c.l.s8.bf16 %v1573
    %v2406 = vunpack.c.l.s8.bf16 %v1574
    %v2407 = vunpack.c.l.s8.bf16 %v1575
    %v2408 = vunpack.c.l.s8.bf16 %v1576
    %v2409 = vunpack.c.l.s8.bf16 %v1577
    %v2410 = vunpack.c.l.s8.bf16 %v1578
    %v2411 = vunpack.c.l.s8.bf16 %v1579
    %v2412 = vunpack.c.l.s8.bf16 %v1580
    %v2413 = vunpack.c.l.s8.bf16 %v1581
    %v2414 = vunpack.c.l.s8.bf16 %v1582
    %v2415 = vunpack.c.l.s8.bf16 %v1583
    %v2416 = vunpack.c.l.s8.bf16 %v1584
    %v2417 = vunpack.c.h.s8.bf16 %v1569
    %v2418 = vunpack.c.h.s8.bf16 %v1570
    %v2419 = vunpack.c.h.s8.bf16 %v1571
    %v2420 = vunpack.c.h.s8.bf16 %v1572
    %v2421 = vunpack.c.h.s8.bf16 %v1573
    %v2422 = vunpack.c.h.s8.bf16 %v1574
    %v2423 = vunpack.c.h.s8.bf16 %v1575
    %v2424 = vunpack.c.h.s8.bf16 %v1576
    %v2425 = vunpack.c.h.s8.bf16 %v1577
    %v2426 = vunpack.c.h.s8.bf16 %v1578
    %v2427 = vunpack.c.h.s8.bf16 %v1579
    %v2428 = vunpack.c.h.s8.bf16 %v1580
    %v2429 = vunpack.c.h.s8.bf16 %v1581
    %v2430 = vunpack.c.h.s8.bf16 %v1582
    %v2431 = vunpack.c.h.s8.bf16 %v1583
    %v2432 = vunpack.c.h.s8.bf16 %v1584
    %v2433 = vunpack.c.l.s8.bf16 %v1585
    %v2434 = vunpack.c.l.s8.bf16 %v1586
    %v2435 = vunpack.c.l.s8.bf16 %v1587
    %v2436 = vunpack.c.l.s8.bf16 %v1588
    %v2437 = vunpack.c.l.s8.bf16 %v1589
    %v2438 = vunpack.c.l.s8.bf16 %v1590
    %v2439 = vunpack.c.l.s8.bf16 %v1591
    %v2440 = vunpack.c.l.s8.bf16 %v1592
    %v2441 = vunpack.c.l.s8.bf16 %v1593
    %v2442 = vunpack.c.l.s8.bf16 %v1594
    %v2443 = vunpack.c.l.s8.bf16 %v1595
    %v2444 = vunpack.c.l.s8.bf16 %v1596
    %v2445 = vunpack.c.l.s8.bf16 %v1597
    %v2446 = vunpack.c.l.s8.bf16 %v1598
    %v2447 = vunpack.c.l.s8.bf16 %v1599
    %v2448 = vunpack.c.l.s8.bf16 %v1600
    %v2449 = vunpack.c.h.s8.bf16 %v1585
    %v2450 = vunpack.c.h.s8.bf16 %v1586
    %v2451 = vunpack.c.h.s8.bf16 %v1587
    %v2452 = vunpack.c.h.s8.bf16 %v1588
    %v2453 = vunpack.c.h.s8.bf16 %v1589
    %v2454 = vunpack.c.h.s8.bf16 %v1590
    %v2455 = vunpack.c.h.s8.bf16 %v1591
    %v2456 = vunpack.c.h.s8.bf16 %v1592
    %v2457 = vunpack.c.h.s8.bf16 %v1593
    %v2458 = vunpack.c.h.s8.bf16 %v1594
    %v2459 = vunpack.c.h.s8.bf16 %v1595
    %v2460 = vunpack.c.h.s8.bf16 %v1596
    %v2461 = vunpack.c.h.s8.bf16 %v1597
    %v2462 = vunpack.c.h.s8.bf16 %v1598
    %v2463 = vunpack.c.h.s8.bf16 %v1599
    %v2464 = vunpack.c.h.s8.bf16 %v1600
    %v2465 = vunpack.c.l.s8.bf16 %v1601
    %v2466 = vunpack.c.l.s8.bf16 %v1602
    %v2467 = vunpack.c.l.s8.bf16 %v1603
    %v2468 = vunpack.c.l.s8.bf16 %v1604
    %v2469 = vunpack.c.l.s8.bf16 %v1605
    %v2470 = vunpack.c.l.s8.bf16 %v1606
    %v2471 = vunpack.c.l.s8.bf16 %v1607
    %v2472 = vunpack.c.l.s8.bf16 %v1608
    %v2473 = vunpack.c.l.s8.bf16 %v1609
    %v2474 = vunpack.c.l.s8.bf16 %v1610
    %v2475 = vunpack.c.l.s8.bf16 %v1611
    %v2476 = vunpack.c.l.s8.bf16 %v1612
    %v2477 = vunpack.c.l.s8.bf16 %v1613
    %v2478 = vunpack.c.l.s8.bf16 %v1614
    %v2479 = vunpack.c.l.s8.bf16 %v1615
    %v2480 = vunpack.c.l.s8.bf16 %v1616
    %v2481 = vunpack.c.h.s8.bf16 %v1601
    %v2482 = vunpack.c.h.s8.bf16 %v1602
    %v2483 = vunpack.c.h.s8.bf16 %v1603
    %v2484 = vunpack.c.h.s8.bf16 %v1604
    %v2485 = vunpack.c.h.s8.bf16 %v1605
    %v2486 = vunpack.c.h.s8.bf16 %v1606
    %v2487 = vunpack.c.h.s8.bf16 %v1607
    %v2488 = vunpack.c.h.s8.bf16 %v1608
    %v2489 = vunpack.c.h.s8.bf16 %v1609
    %v2490 = vunpack.c.h.s8.bf16 %v1610
    %v2491 = vunpack.c.h.s8.bf16 %v1611
    %v2492 = vunpack.c.h.s8.bf16 %v1612
    %v2493 = vunpack.c.h.s8.bf16 %v1613
    %v2494 = vunpack.c.h.s8.bf16 %v1614
    %v2495 = vunpack.c.h.s8.bf16 %v1615
    %v2496 = vunpack.c.h.s8.bf16 %v1616
    %v2497 = vunpack.c.l.s8.bf16 %v1617
    %v2498 = vunpack.c.l.s8.bf16 %v1618
    %v2499 = vunpack.c.l.s8.bf16 %v1619
    %v2500 = vunpack.c.l.s8.bf16 %v1620
    %v2501 = vunpack.c.l.s8.bf16 %v1621
    %v2502 = vunpack.c.l.s8.bf16 %v1622
    %v2503 = vunpack.c.l.s8.bf16 %v1623
    %v2504 = vunpack.c.l.s8.bf16 %v1624
    %v2505 = vunpack.c.l.s8.bf16 %v1625
    %v2506 = vunpack.c.l.s8.bf16 %v1626
    %v2507 = vunpack.c.l.s8.bf16 %v1627
    %v2508 = vunpack.c.l.s8.bf16 %v1628
    %v2509 = vunpack.c.l.s8.bf16 %v1629
    %v2510 = vunpack.c.l.s8.bf16 %v1630
    %v2511 = vunpack.c.l.s8.bf16 %v1631
    %v2512 = vunpack.c.l.s8.bf16 %v1632
    %v2513 = vunpack.c.h.s8.bf16 %v1617
    %v2514 = vunpack.c.h.s8.bf16 %v1618
    %v2515 = vunpack.c.h.s8.bf16 %v1619
    %v2516 = vunpack.c.h.s8.bf16 %v1620
    %v2517 = vunpack.c.h.s8.bf16 %v1621
    %v2518 = vunpack.c.h.s8.bf16 %v1622
    %v2519 = vunpack.c.h.s8.bf16 %v1623
    %v2520 = vunpack.c.h.s8.bf16 %v1624
    %v2521 = vunpack.c.h.s8.bf16 %v1625
    %v2522 = vunpack.c.h.s8.bf16 %v1626
    %v2523 = vunpack.c.h.s8.bf16 %v1627
    %v2524 = vunpack.c.h.s8.bf16 %v1628
    %v2525 = vunpack.c.h.s8.bf16 %v1629
    %v2526 = vunpack.c.h.s8.bf16 %v1630
    %v2527 = vunpack.c.h.s8.bf16 %v1631
    %v2528 = vunpack.c.h.s8.bf16 %v1632
    %v2529 = vunpack.c.l.s8.bf16 %v1633
    %v2530 = vunpack.c.l.s8.bf16 %v1634
    %v2531 = vunpack.c.l.s8.bf16 %v1635
    %v2532 = vunpack.c.l.s8.bf16 %v1636
    %v2533 = vunpack.c.l.s8.bf16 %v1637
    %v2534 = vunpack.c.l.s8.bf16 %v1638
    %v2535 = vunpack.c.l.s8.bf16 %v1639
    %v2536 = vunpack.c.l.s8.bf16 %v1640
    %v2537 = vunpack.c.l.s8.bf16 %v1641
    %v2538 = vunpack.c.l.s8.bf16 %v1642
    %v2539 = vunpack.c.l.s8.bf16 %v1643
    %v2540 = vunpack.c.l.s8.bf16 %v1644
    %v2541 = vunpack.c.l.s8.bf16 %v1645
    %v2542 = vunpack.c.l.s8.bf16 %v1646
    %v2543 = vunpack.c.l.s8.bf16 %v1647
    %v2544 = vunpack.c.l.s8.bf16 %v1648
    %v2545 = vunpack.c.h.s8.bf16 %v1633
    %v2546 = vunpack.c.h.s8.bf16 %v1634
    %v2547 = vunpack.c.h.s8.bf16 %v1635
    %v2548 = vunpack.c.h.s8.bf16 %v1636
    %v2549 = vunpack.c.h.s8.bf16 %v1637
    %v2550 = vunpack.c.h.s8.bf16 %v1638
    %v2551 = vunpack.c.h.s8.bf16 %v1639
    %v2552 = vunpack.c.h.s8.bf16 %v1640
    %v2553 = vunpack.c.h.s8.bf16 %v1641
    %v2554 = vunpack.c.h.s8.bf16 %v1642
    %v2555 = vunpack.c.h.s8.bf16 %v1643
    %v2556 = vunpack.c.h.s8.bf16 %v1644
    %v2557 = vunpack.c.h.s8.bf16 %v1645
    %v2558 = vunpack.c.h.s8.bf16 %v1646
    %v2559 = vunpack.c.h.s8.bf16 %v1647
    %v2560 = vunpack.c.h.s8.bf16 %v1648
    %v2561 = vunpack.c.l.s8.bf16 %v1649
    %v2562 = vunpack.c.l.s8.bf16 %v1650
    %v2563 = vunpack.c.l.s8.bf16 %v1651
    %v2564 = vunpack.c.l.s8.bf16 %v1652
    %v2565 = vunpack.c.l.s8.bf16 %v1653
    %v2566 = vunpack.c.l.s8.bf16 %v1654
    %v2567 = vunpack.c.l.s8.bf16 %v1655
    %v2568 = vunpack.c.l.s8.bf16 %v1656
    %v2569 = vunpack.c.l.s8.bf16 %v1657
    %v2570 = vunpack.c.l.s8.bf16 %v1658
    %v2571 = vunpack.c.l.s8.bf16 %v1659
    %v2572 = vunpack.c.l.s8.bf16 %v1660
    %v2573 = vunpack.c.l.s8.bf16 %v1661
    %v2574 = vunpack.c.l.s8.bf16 %v1662
    %v2575 = vunpack.c.l.s8.bf16 %v1663
    %v2576 = vunpack.c.l.s8.bf16 %v1664
    %v2577 = vunpack.c.h.s8.bf16 %v1649
    %v2578 = vunpack.c.h.s8.bf16 %v1650
    %v2579 = vunpack.c.h.s8.bf16 %v1651
    %v2580 = vunpack.c.h.s8.bf16 %v1652
    %v2581 = vunpack.c.h.s8.bf16 %v1653
    %v2582 = vunpack.c.h.s8.bf16 %v1654
    %v2583 = vunpack.c.h.s8.bf16 %v1655
    %v2584 = vunpack.c.h.s8.bf16 %v1656
    %v2585 = vunpack.c.h.s8.bf16 %v1657
    %v2586 = vunpack.c.h.s8.bf16 %v1658
    %v2587 = vunpack.c.h.s8.bf16 %v1659
    %v2588 = vunpack.c.h.s8.bf16 %v1660
    %v2589 = vunpack.c.h.s8.bf16 %v1661
    %v2590 = vunpack.c.h.s8.bf16 %v1662
    %v2591 = vunpack.c.h.s8.bf16 %v1663
    %v2592 = vunpack.c.h.s8.bf16 %v1664
    %v2593 = vunpack.c.l.s8.bf16 %v1665
    %v2594 = vunpack.c.l.s8.bf16 %v1666
    %v2595 = vunpack.c.l.s8.bf16 %v1667
    %v2596 = vunpack.c.l.s8.bf16 %v1668
    %v2597 = vunpack.c.l.s8.bf16 %v1669
    %v2598 = vunpack.c.l.s8.bf16 %v1670
    %v2599 = vunpack.c.l.s8.bf16 %v1671
    %v2600 = vunpack.c.l.s8.bf16 %v1672
    %v2601 = vunpack.c.l.s8.bf16 %v1673
    %v2602 = vunpack.c.l.s8.bf16 %v1674
    %v2603 = vunpack.c.l.s8.bf16 %v1675
    %v2604 = vunpack.c.l.s8.bf16 %v1676
    %v2605 = vunpack.c.l.s8.bf16 %v1677
    %v2606 = vunpack.c.l.s8.bf16 %v1678
    %v2607 = vunpack.c.l.s8.bf16 %v1679
    %v2608 = vunpack.c.l.s8.bf16 %v1680
    %v2609 = vunpack.c.h.s8.bf16 %v1665
    %v2610 = vunpack.c.h.s8.bf16 %v1666
    %v2611 = vunpack.c.h.s8.bf16 %v1667
    %v2612 = vunpack.c.h.s8.bf16 %v1668
    %v2613 = vunpack.c.h.s8.bf16 %v1669
    %v2614 = vunpack.c.h.s8.bf16 %v1670
    %v2615 = vunpack.c.h.s8.bf16 %v1671
    %v2616 = vunpack.c.h.s8.bf16 %v1672
    %v2617 = vunpack.c.h.s8.bf16 %v1673
    %v2618 = vunpack.c.h.s8.bf16 %v1674
    %v2619 = vunpack.c.h.s8.bf16 %v1675
    %v2620 = vunpack.c.h.s8.bf16 %v1676
    %v2621 = vunpack.c.h.s8.bf16 %v1677
    %v2622 = vunpack.c.h.s8.bf16 %v1678
    %v2623 = vunpack.c.h.s8.bf16 %v1679
    %v2624 = vunpack.c.h.s8.bf16 %v1680
    %v2625 = vunpack.c.l.s8.bf16 %v1681
    %v2626 = vunpack.c.l.s8.bf16 %v1682
    %v2627 = vunpack.c.l.s8.bf16 %v1683
    %v2628 = vunpack.c.l.s8.bf16 %v1684
    %v2629 = vunpack.c.l.s8.bf16 %v1685
    %v2630 = vunpack.c.l.s8.bf16 %v1686
    %v2631 = vunpack.c.l.s8.bf16 %v1687
    %v2632 = vunpack.c.l.s8.bf16 %v1688
    %v2633 = vunpack.c.l.s8.bf16 %v1689
    %v2634 = vunpack.c.l.s8.bf16 %v1690
    %v2635 = vunpack.c.l.s8.bf16 %v1691
    %v2636 = vunpack.c.l.s8.bf16 %v1692
    %v2637 = vunpack.c.l.s8.bf16 %v1693
    %v2638 = vunpack.c.l.s8.bf16 %v1694
    %v2639 = vunpack.c.l.s8.bf16 %v1695
    %v2640 = vunpack.c.l.s8.bf16 %v1696
    %v2641 = vunpack.c.h.s8.bf16 %v1681
    %v2642 = vunpack.c.h.s8.bf16 %v1682
    %v2643 = vunpack.c.h.s8.bf16 %v1683
    %v2644 = vunpack.c.h.s8.bf16 %v1684
    %v2645 = vunpack.c.h.s8.bf16 %v1685
    %v2646 = vunpack.c.h.s8.bf16 %v1686
    %v2647 = vunpack.c.h.s8.bf16 %v1687
    %v2648 = vunpack.c.h.s8.bf16 %v1688
    %v2649 = vunpack.c.h.s8.bf16 %v1689
    %v2650 = vunpack.c.h.s8.bf16 %v1690
    %v2651 = vunpack.c.h.s8.bf16 %v1691
    %v2652 = vunpack.c.h.s8.bf16 %v1692
    %v2653 = vunpack.c.h.s8.bf16 %v1693
    %v2654 = vunpack.c.h.s8.bf16 %v1694
    %v2655 = vunpack.c.h.s8.bf16 %v1695
    %v2656 = vunpack.c.h.s8.bf16 %v1696
    %v2657 = vunpack.c.l.s8.bf16 %v1697
    %v2658 = vunpack.c.l.s8.bf16 %v1698
    %v2659 = vunpack.c.l.s8.bf16 %v1699
    %v2660 = vunpack.c.l.s8.bf16 %v1700
    %v2661 = vunpack.c.l.s8.bf16 %v1701
    %v2662 = vunpack.c.l.s8.bf16 %v1702
    %v2663 = vunpack.c.l.s8.bf16 %v1703
    %v2664 = vunpack.c.l.s8.bf16 %v1704
    %v2665 = vunpack.c.l.s8.bf16 %v1705
    %v2666 = vunpack.c.l.s8.bf16 %v1706
    %v2667 = vunpack.c.l.s8.bf16 %v1707
    %v2668 = vunpack.c.l.s8.bf16 %v1708
    %v2669 = vunpack.c.l.s8.bf16 %v1709
    %v2670 = vunpack.c.l.s8.bf16 %v1710
    %v2671 = vunpack.c.l.s8.bf16 %v1711
    %v2672 = vunpack.c.l.s8.bf16 %v1712
    %v2673 = vunpack.c.h.s8.bf16 %v1697
    %v2674 = vunpack.c.h.s8.bf16 %v1698
    %v2675 = vunpack.c.h.s8.bf16 %v1699
    %v2676 = vunpack.c.h.s8.bf16 %v1700
    %v2677 = vunpack.c.h.s8.bf16 %v1701
    %v2678 = vunpack.c.h.s8.bf16 %v1702
    %v2679 = vunpack.c.h.s8.bf16 %v1703
    %v2680 = vunpack.c.h.s8.bf16 %v1704
    %v2681 = vunpack.c.h.s8.bf16 %v1705
    %v2682 = vunpack.c.h.s8.bf16 %v1706
    %v2683 = vunpack.c.h.s8.bf16 %v1707
    %v2684 = vunpack.c.h.s8.bf16 %v1708
    %v2685 = vunpack.c.h.s8.bf16 %v1709
    %v2686 = vunpack.c.h.s8.bf16 %v1710
    %v2687 = vunpack.c.h.s8.bf16 %v1711
    %v2688 = vunpack.c.h.s8.bf16 %v1712
    %v2689 = vunpack.c.l.s8.bf16 %v1713
    %v2690 = vunpack.c.l.s8.bf16 %v1714
    %v2691 = vunpack.c.l.s8.bf16 %v1715
    %v2692 = vunpack.c.l.s8.bf16 %v1716
    %v2693 = vunpack.c.l.s8.bf16 %v1717
    %v2694 = vunpack.c.l.s8.bf16 %v1718
    %v2695 = vunpack.c.l.s8.bf16 %v1719
    %v2696 = vunpack.c.l.s8.bf16 %v1720
    %v2697 = vunpack.c.l.s8.bf16 %v1721
    %v2698 = vunpack.c.l.s8.bf16 %v1722
    %v2699 = vunpack.c.l.s8.bf16 %v1723
    %v2700 = vunpack.c.l.s8.bf16 %v1724
    %v2701 = vunpack.c.l.s8.bf16 %v1725
    %v2702 = vunpack.c.l.s8.bf16 %v1726
    %v2703 = vunpack.c.l.s8.bf16 %v1727
    %v2704 = vunpack.c.l.s8.bf16 %v1728
    %v2705 = vunpack.c.h.s8.bf16 %v1713
    %v2706 = vunpack.c.h.s8.bf16 %v1714
    %v2707 = vunpack.c.h.s8.bf16 %v1715
    %v2708 = vunpack.c.h.s8.bf16 %v1716
    %v2709 = vunpack.c.h.s8.bf16 %v1717
    %v2710 = vunpack.c.h.s8.bf16 %v1718
    %v2711 = vunpack.c.h.s8.bf16 %v1719
    %v2712 = vunpack.c.h.s8.bf16 %v1720
    %v2713 = vunpack.c.h.s8.bf16 %v1721
    %v2714 = vunpack.c.h.s8.bf16 %v1722
    %v2715 = vunpack.c.h.s8.bf16 %v1723
    %v2716 = vunpack.c.h.s8.bf16 %v1724
    %v2717 = vunpack.c.h.s8.bf16 %v1725
    %v2718 = vunpack.c.h.s8.bf16 %v1726
    %v2719 = vunpack.c.h.s8.bf16 %v1727
    %v2720 = vunpack.c.h.s8.bf16 %v1728
    %v2721 = vunpack.c.l.s8.bf16 %v1729
    %v2722 = vunpack.c.l.s8.bf16 %v1730
    %v2723 = vunpack.c.l.s8.bf16 %v1731
    %v2724 = vunpack.c.l.s8.bf16 %v1732
    %v2725 = vunpack.c.l.s8.bf16 %v1733
    %v2726 = vunpack.c.l.s8.bf16 %v1734
    %v2727 = vunpack.c.l.s8.bf16 %v1735
    %v2728 = vunpack.c.l.s8.bf16 %v1736
    %v2729 = vunpack.c.l.s8.bf16 %v1737
    %v2730 = vunpack.c.l.s8.bf16 %v1738
    %v2731 = vunpack.c.l.s8.bf16 %v1739
    %v2732 = vunpack.c.l.s8.bf16 %v1740
    %v2733 = vunpack.c.l.s8.bf16 %v1741
    %v2734 = vunpack.c.l.s8.bf16 %v1742
    %v2735 = vunpack.c.l.s8.bf16 %v1743
    %v2736 = vunpack.c.l.s8.bf16 %v1744
    %v2737 = vunpack.c.h.s8.bf16 %v1729
    %v2738 = vunpack.c.h.s8.bf16 %v1730
    %v2739 = vunpack.c.h.s8.bf16 %v1731
    %v2740 = vunpack.c.h.s8.bf16 %v1732
    %v2741 = vunpack.c.h.s8.bf16 %v1733
    %v2742 = vunpack.c.h.s8.bf16 %v1734
    %v2743 = vunpack.c.h.s8.bf16 %v1735
    %v2744 = vunpack.c.h.s8.bf16 %v1736
    %v2745 = vunpack.c.h.s8.bf16 %v1737
    %v2746 = vunpack.c.h.s8.bf16 %v1738
    %v2747 = vunpack.c.h.s8.bf16 %v1739
    %v2748 = vunpack.c.h.s8.bf16 %v1740
    %v2749 = vunpack.c.h.s8.bf16 %v1741
    %v2750 = vunpack.c.h.s8.bf16 %v1742
    %v2751 = vunpack.c.h.s8.bf16 %v1743
    %v2752 = vunpack.c.h.s8.bf16 %v1744
    %v2753 = vunpack.c.l.s8.bf16 %v1745
    %v2754 = vunpack.c.l.s8.bf16 %v1746
    %v2755 = vunpack.c.l.s8.bf16 %v1747
    %v2756 = vunpack.c.l.s8.bf16 %v1748
    %v2757 = vunpack.c.l.s8.bf16 %v1749
    %v2758 = vunpack.c.l.s8.bf16 %v1750
    %v2759 = vunpack.c.l.s8.bf16 %v1751
    %v2760 = vunpack.c.l.s8.bf16 %v1752
    %v2761 = vunpack.c.l.s8.bf16 %v1753
    %v2762 = vunpack.c.l.s8.bf16 %v1754
    %v2763 = vunpack.c.l.s8.bf16 %v1755
    %v2764 = vunpack.c.l.s8.bf16 %v1756
    %v2765 = vunpack.c.l.s8.bf16 %v1757
    %v2766 = vunpack.c.l.s8.bf16 %v1758
    %v2767 = vunpack.c.l.s8.bf16 %v1759
    %v2768 = vunpack.c.l.s8.bf16 %v1760
    %v2769 = vunpack.c.h.s8.bf16 %v1745
    %v2770 = vunpack.c.h.s8.bf16 %v1746
    %v2771 = vunpack.c.h.s8.bf16 %v1747
    %v2772 = vunpack.c.h.s8.bf16 %v1748
    %v2773 = vunpack.c.h.s8.bf16 %v1749
    %v2774 = vunpack.c.h.s8.bf16 %v1750
    %v2775 = vunpack.c.h.s8.bf16 %v1751
    %v2776 = vunpack.c.h.s8.bf16 %v1752
    %v2777 = vunpack.c.h.s8.bf16 %v1753
    %v2778 = vunpack.c.h.s8.bf16 %v1754
    %v2779 = vunpack.c.h.s8.bf16 %v1755
    %v2780 = vunpack.c.h.s8.bf16 %v1756
    %v2781 = vunpack.c.h.s8.bf16 %v1757
    %v2782 = vunpack.c.h.s8.bf16 %v1758
    %v2783 = vunpack.c.h.s8.bf16 %v1759
    %v2784 = vunpack.c.h.s8.bf16 %v1760
    %2785 = vmatprep.subr.bf16.mxu0 %v1874
    %2786 = vmatpush1.bf16.msra.mxu0 %v1873
    %2787 = vmatprep.subr.bf16.mxu0 %v1858
    %2788 = vmatpush1.bf16.msra.mxu0 %v1857
    %2789 = vmatprep.subr.bf16.mxu0 %v1842
    %2790 = vmatpush1.bf16.msra.mxu0 %v1841
    %2791 = vmatprep.subr.bf16.mxu0 %v1826
    %2792 = vmatpush1.bf16.msra.mxu0 %v1825
    %2793 = vmatprep.subr.bf16.mxu0 %v1810
    %2794 = vmatpush1.bf16.msra.mxu0 %v1809
    %2795 = vmatprep.subr.bf16.mxu0 %v1794
    %2796 = vmatpush1.bf16.msra.mxu0 %v1793
    %2797 = vmatprep.subr.bf16.mxu0 %v1778
    %2798 = vmatpush1.bf16.msra.mxu0 %v1777
    %2799 = vmatprep.subr.bf16.mxu0 %v1762
    %2800 = vmatpush1.bf16.msra.mxu0 %v1761
    %2801 = vmatprep.subr.bf16.mxu0 %v2002
    %2802 = vmatpush2.bf16.msra.mxu0 %v2001
    %2803 = vmatprep.subr.bf16.mxu0 %v1986
    %2804 = vmatpush2.bf16.msra.mxu0 %v1985
    %2805 = vmatprep.subr.bf16.mxu0 %v1970
    %2806 = vmatpush2.bf16.msra.mxu0 %v1969
    %2807 = vmatprep.subr.bf16.mxu0 %v1954
    %2808 = vmatpush2.bf16.msra.mxu0 %v1953
    %2809 = vmatprep.subr.bf16.mxu0 %v1938
    %2810 = vmatpush2.bf16.msra.mxu0 %v1937
    %2811 = vmatprep.subr.bf16.mxu0 %v1922
    %2812 = vmatpush2.bf16.msra.mxu0 %v1921
    %2813 = vmatprep.subr.bf16.mxu0 %v1906
    %2814 = vmatpush2.bf16.msra.mxu0 %v1905
    %2815 = vmatprep.subr.bf16.mxu0 %v1890
    %2816 = vmatpush2.bf16.msra.mxu0 %v1889
    %2817 = vmatprep.mubr.bf16.mxu0 %v1242
    %2818 = vmatmul.mubr.bf16.gmra.mxu0 %v1241
    %v2819 = vpop.f32.mrf.mxu0
    %v2820 = vadd.f32 0.0, %v2819
    %v2821 = vpop.f32.mrf.mxu0
    %v2822 = vadd.f32 0.0, %v2821
    %v2823 = vpop.f32.mrf.mxu0
    %v2824 = vadd.f32 0.0, %v2823
    %v2825 = vpop.f32.mrf.mxu0
    %v2826 = vadd.f32 0.0, %v2825
    %2827 = vdwg.mxu0
    %2828 = vmatprep.subr.bf16.mxu0 %v2130
    %2829 = vmatpush1.bf16.msra.mxu0 %v2129
    %2830 = vmatprep.subr.bf16.mxu0 %v2114
    %2831 = vmatpush1.bf16.msra.mxu0 %v2113
    %2832 = vmatprep.subr.bf16.mxu0 %v2098
    %2833 = vmatpush1.bf16.msra.mxu0 %v2097
    %2834 = vmatprep.subr.bf16.mxu0 %v2082
    %2835 = vmatpush1.bf16.msra.mxu0 %v2081
    %2836 = vmatprep.subr.bf16.mxu0 %v2066
    %2837 = vmatpush1.bf16.msra.mxu0 %v2065
    %2838 = vmatprep.subr.bf16.mxu0 %v2050
    %2839 = vmatpush1.bf16.msra.mxu0 %v2049
    %2840 = vmatprep.subr.bf16.mxu0 %v2034
    %2841 = vmatpush1.bf16.msra.mxu0 %v2033
    %2842 = vmatprep.subr.bf16.mxu0 %v2018
    %2843 = vmatpush1.bf16.msra.mxu0 %v2017
    %2844 = vmatprep.subr.bf16.mxu0 %v2258
    %2845 = vmatpush2.bf16.msra.mxu0 %v2257
    %2846 = vmatprep.subr.bf16.mxu0 %v2242
    %2847 = vmatpush2.bf16.msra.mxu0 %v2241
    %2848 = vmatprep.subr.bf16.mxu0 %v2226
    %2849 = vmatpush2.bf16.msra.mxu0 %v2225
    %2850 = vmatprep.subr.bf16.mxu0 %v2210
    %2851 = vmatpush2.bf16.msra.mxu0 %v2209
    %2852 = vmatprep.subr.bf16.mxu0 %v2194
    %2853 = vmatpush2.bf16.msra.mxu0 %v2193
    %2854 = vmatprep.subr.bf16.mxu0 %v2178
    %2855 = vmatpush2.bf16.msra.mxu0 %v2177
    %2856 = vmatprep.subr.bf16.mxu0 %v2162
    %2857 = vmatpush2.bf16.msra.mxu0 %v2161
    %2858 = vmatprep.subr.bf16.mxu0 %v2146
    %2859 = vmatpush2.bf16.msra.mxu0 %v2145
    %2860 = vmatprep.mubr.bf16.mxu0 %v1244
    %2861 = vmatmul.mubr.bf16.gmra.mxu0 %v1243
    %v2862 = vpop.f32.mrf.mxu0
    %v2863 = vadd.f32 %v2820, %v2862
    %v2864 = vpop.f32.mrf.mxu0
    %v2865 = vadd.f32 %v2822, %v2864
    %v2866 = vpop.f32.mrf.mxu0
    %v2867 = vadd.f32 %v2824, %v2866
    %v2868 = vpop.f32.mrf.mxu0
    %v2869 = vadd.f32 %v2826, %v2868
    %2870 = vdwg.mxu0
    %2871 = vmatprep.subr.bf16.mxu0 %v2386
    %2872 = vmatpush1.bf16.msra.mxu0 %v2385
    %2873 = vmatprep.subr.bf16.mxu0 %v2370
    %2874 = vmatpush1.bf16.msra.mxu0 %v2369
    %2875 = vmatprep.subr.bf16.mxu0 %v2354
    %2876 = vmatpush1.bf16.msra.mxu0 %v2353
    %2877 = vmatprep.subr.bf16.mxu0 %v2338
    %2878 = vmatpush1.bf16.msra.mxu0 %v2337
    %2879 = vmatprep.subr.bf16.mxu0 %v2322
    %2880 = vmatpush1.bf16.msra.mxu0 %v2321
    %2881 = vmatprep.subr.bf16.mxu0 %v2306
    %2882 = vmatpush1.bf16.msra.mxu0 %v2305
    %2883 = vmatprep.subr.bf16.mxu0 %v2290
    %2884 = vmatpush1.bf16.msra.mxu0 %v2289
    %2885 = vmatprep.subr.bf16.mxu0 %v2274
    %2886 = vmatpush1.bf16.msra.mxu0 %v2273
    %2887 = vmatprep.subr.bf16.mxu0 %v2514
    %2888 = vmatpush2.bf16.msra.mxu0 %v2513
    %2889 = vmatprep.subr.bf16.mxu0 %v2498
    %2890 = vmatpush2.bf16.msra.mxu0 %v2497
    %2891 = vmatprep.subr.bf16.mxu0 %v2482
    %2892 = vmatpush2.bf16.msra.mxu0 %v2481
    %2893 = vmatprep.subr.bf16.mxu0 %v2466
    %2894 = vmatpush2.bf16.msra.mxu0 %v2465
    %2895 = vmatprep.subr.bf16.mxu0 %v2450
    %2896 = vmatpush2.bf16.msra.mxu0 %v2449
    %2897 = vmatprep.subr.bf16.mxu0 %v2434
    %2898 = vmatpush2.bf16.msra.mxu0 %v2433
    %2899 = vmatprep.subr.bf16.mxu0 %v2418
    %2900 = vmatpush2.bf16.msra.mxu0 %v2417
    %2901 = vmatprep.subr.bf16.mxu0 %v2402
    %2902 = vmatpush2.bf16.msra.mxu0 %v2401
    %2903 = vmatprep.mubr.bf16.mxu0 %v1246
    %2904 = vmatmul.mubr.bf16.gmra.mxu0 %v1245
    %v2905 = vpop.f32.mrf.mxu0
    %v2906 = vadd.f32 %v2863, %v2905
    %v2907 = vpop.f32.mrf.mxu0
    %v2908 = vadd.f32 %v2865, %v2907
    %v2909 = vpop.f32.mrf.mxu0
    %v2910 = vadd.f32 %v2867, %v2909
    %v2911 = vpop.f32.mrf.mxu0
    %v2912 = vadd.f32 %v2869, %v2911
    %2913 = vdwg.mxu0
    %2914 = vmatprep.subr.bf16.mxu0 %v2642
    %2915 = vmatpush1.bf16.msra.mxu0 %v2641
    %2916 = vmatprep.subr.bf16.mxu0 %v2626
    %2917 = vmatpush1.bf16.msra.mxu0 %v2625
    %2918 = vmatprep.subr.bf16.mxu0 %v2610
    %2919 = vmatpush1.bf16.msra.mxu0 %v2609
    %2920 = vmatprep.subr.bf16.mxu0 %v2594
    %2921 = vmatpush1.bf16.msra.mxu0 %v2593
    %2922 = vmatprep.subr.bf16.mxu0 %v2578
    %2923 = vmatpush1.bf16.msra.mxu0 %v2577
    %2924 = vmatprep.subr.bf16.mxu0 %v2562
    %2925 = vmatpush1.bf16.msra.mxu0 %v2561
    %2926 = vmatprep.subr.bf16.mxu0 %v2546
    %2927 = vmatpush1.bf16.msra.mxu0 %v2545
    %2928 = vmatprep.subr.bf16.mxu0 %v2530
    %2929 = vmatpush1.bf16.msra.mxu0 %v2529
    %2930 = vmatprep.subr.bf16.mxu0 %v2770
    %2931 = vmatpush2.bf16.msra.mxu0 %v2769
    %2932 = vmatprep.subr.bf16.mxu0 %v2754
    %2933 = vmatpush2.bf16.msra.mxu0 %v2753
    %2934 = vmatprep.subr.bf16.mxu0 %v2738
    %2935 = vmatpush2.bf16.msra.mxu0 %v2737
    %2936 = vmatprep.subr.bf16.mxu0 %v2722
    %2937 = vmatpush2.bf16.msra.mxu0 %v2721
    %2938 = vmatprep.subr.bf16.mxu0 %v2706
    %2939 = vmatpush2.bf16.msra.mxu0 %v2705
    %2940 = vmatprep.subr.bf16.mxu0 %v2690
    %2941 = vmatpush2.bf16.msra.mxu0 %v2689
    %2942 = vmatprep.subr.bf16.mxu0 %v2674
    %2943 = vmatpush2.bf16.msra.mxu0 %v2673
    %2944 = vmatprep.subr.bf16.mxu0 %v2658
    %2945 = vmatpush2.bf16.msra.mxu0 %v2657
    %2946 = vmatprep.mubr.bf16.mxu0 %v1248
    %2947 = vmatmul.mubr.bf16.gmra.mxu0 %v1247
    %v2948 = vpop.f32.mrf.mxu0
    %v2949 = vadd.f32 %v2906, %v2948
    %v2950 = vpop.f32.mrf.mxu0
    %v2951 = vadd.f32 %v2908, %v2950
    %v2952 = vpop.f32.mrf.mxu0
    %v2953 = vadd.f32 %v2910, %v2952
    %v2954 = vpop.f32.mrf.mxu0
    %v2955 = vadd.f32 %v2912, %v2954
    %2956 = vdwg.mxu0
    %2957 = vmatprep.subr.bf16.mxu0 %v1876
    %2958 = vmatpush1.bf16.msra.mxu0 %v1875
    %2959 = vmatprep.subr.bf16.mxu0 %v1860
    %2960 = vmatpush1.bf16.msra.mxu0 %v1859
    %2961 = vmatprep.subr.bf16.mxu0 %v1844
    %2962 = vmatpush1.bf16.msra.mxu0 %v1843
    %2963 = vmatprep.subr.bf16.mxu0 %v1828
    %2964 = vmatpush1.bf16.msra.mxu0 %v1827
    %2965 = vmatprep.subr.bf16.mxu0 %v1812
    %2966 = vmatpush1.bf16.msra.mxu0 %v1811
    %2967 = vmatprep.subr.bf16.mxu0 %v1796
    %2968 = vmatpush1.bf16.msra.mxu0 %v1795
    %2969 = vmatprep.subr.bf16.mxu0 %v1780
    %2970 = vmatpush1.bf16.msra.mxu0 %v1779
    %2971 = vmatprep.subr.bf16.mxu0 %v1764
    %2972 = vmatpush1.bf16.msra.mxu0 %v1763
    %2973 = vmatprep.subr.bf16.mxu0 %v2004
    %2974 = vmatpush2.bf16.msra.mxu0 %v2003
    %2975 = vmatprep.subr.bf16.mxu0 %v1988
    %2976 = vmatpush2.bf16.msra.mxu0 %v1987
    %2977 = vmatprep.subr.bf16.mxu0 %v1972
    %2978 = vmatpush2.bf16.msra.mxu0 %v1971
    %2979 = vmatprep.subr.bf16.mxu0 %v1956
    %2980 = vmatpush2.bf16.msra.mxu0 %v1955
    %2981 = vmatprep.subr.bf16.mxu0 %v1940
    %2982 = vmatpush2.bf16.msra.mxu0 %v1939
    %2983 = vmatprep.subr.bf16.mxu0 %v1924
    %2984 = vmatpush2.bf16.msra.mxu0 %v1923
    %2985 = vmatprep.subr.bf16.mxu0 %v1908
    %2986 = vmatpush2.bf16.msra.mxu0 %v1907
    %2987 = vmatprep.subr.bf16.mxu0 %v1892
    %2988 = vmatpush2.bf16.msra.mxu0 %v1891
    %2989 = vmatprep.mubr.bf16.mxu0 %v1242
    %2990 = vmatmul.mubr.bf16.gmra.mxu0 %v1241
    %v2991 = vpop.f32.mrf.mxu0
    %v2992 = vadd.f32 0.0, %v2991
    %v2993 = vpop.f32.mrf.mxu0
    %v2994 = vadd.f32 0.0, %v2993
    %v2995 = vpop.f32.mrf.mxu0
    %v2996 = vadd.f32 0.0, %v2995
    %v2997 = vpop.f32.mrf.mxu0
    %v2998 = vadd.f32 0.0, %v2997
    %2999 = vdwg.mxu0
    %3000 = vmatprep.subr.bf16.mxu0 %v2132
    %3001 = vmatpush1.bf16.msra.mxu0 %v2131
    %3002 = vmatprep.subr.bf16.mxu0 %v2116
    %3003 = vmatpush1.bf16.msra.mxu0 %v2115
    %3004 = vmatprep.subr.bf16.mxu0 %v2100
    %3005 = vmatpush1.bf16.msra.mxu0 %v2099
    %3006 = vmatprep.subr.bf16.mxu0 %v2084
    %3007 = vmatpush1.bf16.msra.mxu0 %v2083
    %3008 = vmatprep.subr.bf16.mxu0 %v2068
    %3009 = vmatpush1.bf16.msra.mxu0 %v2067
    %3010 = vmatprep.subr.bf16.mxu0 %v2052
    %3011 = vmatpush1.bf16.msra.mxu0 %v2051
    %3012 = vmatprep.subr.bf16.mxu0 %v2036
    %3013 = vmatpush1.bf16.msra.mxu0 %v2035
    %3014 = vmatprep.subr.bf16.mxu0 %v2020
    %3015 = vmatpush1.bf16.msra.mxu0 %v2019
    %3016 = vmatprep.subr.bf16.mxu0 %v2260
    %3017 = vmatpush2.bf16.msra.mxu0 %v2259
    %3018 = vmatprep.subr.bf16.mxu0 %v2244
    %3019 = vmatpush2.bf16.msra.mxu0 %v2243
    %3020 = vmatprep.subr.bf16.mxu0 %v2228
    %3021 = vmatpush2.bf16.msra.mxu0 %v2227
    %3022 = vmatprep.subr.bf16.mxu0 %v2212
    %3023 = vmatpush2.bf16.msra.mxu0 %v2211
    %3024 = vmatprep.subr.bf16.mxu0 %v2196
    %3025 = vmatpush2.bf16.msra.mxu0 %v2195
    %3026 = vmatprep.subr.bf16.mxu0 %v2180
    %3027 = vmatpush2.bf16.msra.mxu0 %v2179
    %3028 = vmatprep.subr.bf16.mxu0 %v2164
    %3029 = vmatpush2.bf16.msra.mxu0 %v2163
    %3030 = vmatprep.subr.bf16.mxu0 %v2148
    %3031 = vmatpush2.bf16.msra.mxu0 %v2147
    %3032 = vmatprep.mubr.bf16.mxu0 %v1244
    %3033 = vmatmul.mubr.bf16.gmra.mxu0 %v1243
    %v3034 = vpop.f32.mrf.mxu0
    %v3035 = vadd.f32 %v2992, %v3034
    %v3036 = vpop.f32.mrf.mxu0
    %v3037 = vadd.f32 %v2994, %v3036
    %v3038 = vpop.f32.mrf.mxu0
    %v3039 = vadd.f32 %v2996, %v3038
    %v3040 = vpop.f32.mrf.mxu0
    %v3041 = vadd.f32 %v2998, %v3040
    %3042 = vdwg.mxu0
    %3043 = vmatprep.subr.bf16.mxu0 %v2388
    %3044 = vmatpush1.bf16.msra.mxu0 %v2387
    %3045 = vmatprep.subr.bf16.mxu0 %v2372
    %3046 = vmatpush1.bf16.msra.mxu0 %v2371
    %3047 = vmatprep.subr.bf16.mxu0 %v2356
    %3048 = vmatpush1.bf16.msra.mxu0 %v2355
    %3049 = vmatprep.subr.bf16.mxu0 %v2340
    %3050 = vmatpush1.bf16.msra.mxu0 %v2339
    %3051 = vmatprep.subr.bf16.mxu0 %v2324
    %3052 = vmatpush1.bf16.msra.mxu0 %v2323
    %3053 = vmatprep.subr.bf16.mxu0 %v2308
    %3054 = vmatpush1.bf16.msra.mxu0 %v2307
    %3055 = vmatprep.subr.bf16.mxu0 %v2292
    %3056 = vmatpush1.bf16.msra.mxu0 %v2291
    %3057 = vmatprep.subr.bf16.mxu0 %v2276
    %3058 = vmatpush1.bf16.msra.mxu0 %v2275
    %3059 = vmatprep.subr.bf16.mxu0 %v2516
    %3060 = vmatpush2.bf16.msra.mxu0 %v2515
    %3061 = vmatprep.subr.bf16.mxu0 %v2500
    %3062 = vmatpush2.bf16.msra.mxu0 %v2499
    %3063 = vmatprep.subr.bf16.mxu0 %v2484
    %3064 = vmatpush2.bf16.msra.mxu0 %v2483
    %3065 = vmatprep.subr.bf16.mxu0 %v2468
    %3066 = vmatpush2.bf16.msra.mxu0 %v2467
    %3067 = vmatprep.subr.bf16.mxu0 %v2452
    %3068 = vmatpush2.bf16.msra.mxu0 %v2451
    %3069 = vmatprep.subr.bf16.mxu0 %v2436
    %3070 = vmatpush2.bf16.msra.mxu0 %v2435
    %3071 = vmatprep.subr.bf16.mxu0 %v2420
    %3072 = vmatpush2.bf16.msra.mxu0 %v2419
    %3073 = vmatprep.subr.bf16.mxu0 %v2404
    %3074 = vmatpush2.bf16.msra.mxu0 %v2403
    %3075 = vmatprep.mubr.bf16.mxu0 %v1246
    %3076 = vmatmul.mubr.bf16.gmra.mxu0 %v1245
    %v3077 = vpop.f32.mrf.mxu0
    %v3078 = vadd.f32 %v3035, %v3077
    %v3079 = vpop.f32.mrf.mxu0
    %v3080 = vadd.f32 %v3037, %v3079
    %v3081 = vpop.f32.mrf.mxu0
    %v3082 = vadd.f32 %v3039, %v3081
    %v3083 = vpop.f32.mrf.mxu0
    %v3084 = vadd.f32 %v3041, %v3083
    %3085 = vdwg.mxu0
    %3086 = vmatprep.subr.bf16.mxu0 %v2644
    %3087 = vmatpush1.bf16.msra.mxu0 %v2643
    %3088 = vmatprep.subr.bf16.mxu0 %v2628
    %3089 = vmatpush1.bf16.msra.mxu0 %v2627
    %3090 = vmatprep.subr.bf16.mxu0 %v2612
    %3091 = vmatpush1.bf16.msra.mxu0 %v2611
    %3092 = vmatprep.subr.bf16.mxu0 %v2596
    %3093 = vmatpush1.bf16.msra.mxu0 %v2595
    %3094 = vmatprep.subr.bf16.mxu0 %v2580
    %3095 = vmatpush1.bf16.msra.mxu0 %v2579
    %3096 = vmatprep.subr.bf16.mxu0 %v2564
    %3097 = vmatpush1.bf16.msra.mxu0 %v2563
    %3098 = vmatprep.subr.bf16.mxu0 %v2548
    %3099 = vmatpush1.bf16.msra.mxu0 %v2547
    %3100 = vmatprep.subr.bf16.mxu0 %v2532
    %3101 = vmatpush1.bf16.msra.mxu0 %v2531
    %3102 = vmatprep.subr.bf16.mxu0 %v2772
    %3103 = vmatpush2.bf16.msra.mxu0 %v2771
    %3104 = vmatprep.subr.bf16.mxu0 %v2756
    %3105 = vmatpush2.bf16.msra.mxu0 %v2755
    %3106 = vmatprep.subr.bf16.mxu0 %v2740
    %3107 = vmatpush2.bf16.msra.mxu0 %v2739
    %3108 = vmatprep.subr.bf16.mxu0 %v2724
    %3109 = vmatpush2.bf16.msra.mxu0 %v2723
    %3110 = vmatprep.subr.bf16.mxu0 %v2708
    %3111 = vmatpush2.bf16.msra.mxu0 %v2707
    %3112 = vmatprep.subr.bf16.mxu0 %v2692
    %3113 = vmatpush2.bf16.msra.mxu0 %v2691
    %3114 = vmatprep.subr.bf16.mxu0 %v2676
    %3115 = vmatpush2.bf16.msra.mxu0 %v2675
    %3116 = vmatprep.subr.bf16.mxu0 %v2660
    %3117 = vmatpush2.bf16.msra.mxu0 %v2659
    %3118 = vmatprep.mubr.bf16.mxu0 %v1248
    %3119 = vmatmul.mubr.bf16.gmra.mxu0 %v1247
    %v3120 = vpop.f32.mrf.mxu0
    %v3121 = vadd.f32 %v3078, %v3120
    %v3122 = vpop.f32.mrf.mxu0
    %v3123 = vadd.f32 %v3080, %v3122
    %v3124 = vpop.f32.mrf.mxu0
    %v3125 = vadd.f32 %v3082, %v3124
    %v3126 = vpop.f32.mrf.mxu0
    %v3127 = vadd.f32 %v3084, %v3126
    %3128 = vdwg.mxu0
    %3129 = vmatprep.subr.bf16.mxu0 %v1878
    %3130 = vmatpush1.bf16.msra.mxu0 %v1877
    %3131 = vmatprep.subr.bf16.mxu0 %v1862
    %3132 = vmatpush1.bf16.msra.mxu0 %v1861
    %3133 = vmatprep.subr.bf16.mxu0 %v1846
    %3134 = vmatpush1.bf16.msra.mxu0 %v1845
    %3135 = vmatprep.subr.bf16.mxu0 %v1830
    %3136 = vmatpush1.bf16.msra.mxu0 %v1829
    %3137 = vmatprep.subr.bf16.mxu0 %v1814
    %3138 = vmatpush1.bf16.msra.mxu0 %v1813
    %3139 = vmatprep.subr.bf16.mxu0 %v1798
    %3140 = vmatpush1.bf16.msra.mxu0 %v1797
    %3141 = vmatprep.subr.bf16.mxu0 %v1782
    %3142 = vmatpush1.bf16.msra.mxu0 %v1781
    %3143 = vmatprep.subr.bf16.mxu0 %v1766
    %3144 = vmatpush1.bf16.msra.mxu0 %v1765
    %3145 = vmatprep.subr.bf16.mxu0 %v2006
    %3146 = vmatpush2.bf16.msra.mxu0 %v2005
    %3147 = vmatprep.subr.bf16.mxu0 %v1990
    %3148 = vmatpush2.bf16.msra.mxu0 %v1989
    %3149 = vmatprep.subr.bf16.mxu0 %v1974
    %3150 = vmatpush2.bf16.msra.mxu0 %v1973
    %3151 = vmatprep.subr.bf16.mxu0 %v1958
    %3152 = vmatpush2.bf16.msra.mxu0 %v1957
    %3153 = vmatprep.subr.bf16.mxu0 %v1942
    %3154 = vmatpush2.bf16.msra.mxu0 %v1941
    %3155 = vmatprep.subr.bf16.mxu0 %v1926
    %3156 = vmatpush2.bf16.msra.mxu0 %v1925
    %3157 = vmatprep.subr.bf16.mxu0 %v1910
    %3158 = vmatpush2.bf16.msra.mxu0 %v1909
    %3159 = vmatprep.subr.bf16.mxu0 %v1894
    %3160 = vmatpush2.bf16.msra.mxu0 %v1893
    %3161 = vmatprep.mubr.bf16.mxu0 %v1242
    %3162 = vmatmul.mubr.bf16.gmra.mxu0 %v1241
    %v3163 = vpop.f32.mrf.mxu0
    %v3164 = vadd.f32 0.0, %v3163
    %v3165 = vpop.f32.mrf.mxu0
    %v3166 = vadd.f32 0.0, %v3165
    %v3167 = vpop.f32.mrf.mxu0
    %v3168 = vadd.f32 0.0, %v3167
    %v3169 = vpop.f32.mrf.mxu0
    %v3170 = vadd.f32 0.0, %v3169
    %3171 = vdwg.mxu0
    %3172 = vmatprep.subr.bf16.mxu0 %v2134
    %3173 = vmatpush1.bf16.msra.mxu0 %v2133
    %3174 = vmatprep.subr.bf16.mxu0 %v2118
    %3175 = vmatpush1.bf16.msra.mxu0 %v2117
    %3176 = vmatprep.subr.bf16.mxu0 %v2102
    %3177 = vmatpush1.bf16.msra.mxu0 %v2101
    %3178 = vmatprep.subr.bf16.mxu0 %v2086
    %3179 = vmatpush1.bf16.msra.mxu0 %v2085
    %3180 = vmatprep.subr.bf16.mxu0 %v2070
    %3181 = vmatpush1.bf16.msra.mxu0 %v2069
    %3182 = vmatprep.subr.bf16.mxu0 %v2054
    %3183 = vmatpush1.bf16.msra.mxu0 %v2053
    %3184 = vmatprep.subr.bf16.mxu0 %v2038
    %3185 = vmatpush1.bf16.msra.mxu0 %v2037
    %3186 = vmatprep.subr.bf16.mxu0 %v2022
    %3187 = vmatpush1.bf16.msra.mxu0 %v2021
    %3188 = vmatprep.subr.bf16.mxu0 %v2262
    %3189 = vmatpush2.bf16.msra.mxu0 %v2261
    %3190 = vmatprep.subr.bf16.mxu0 %v2246
    %3191 = vmatpush2.bf16.msra.mxu0 %v2245
    %3192 = vmatprep.subr.bf16.mxu0 %v2230
    %3193 = vmatpush2.bf16.msra.mxu0 %v2229
    %3194 = vmatprep.subr.bf16.mxu0 %v2214
    %3195 = vmatpush2.bf16.msra.mxu0 %v2213
    %3196 = vmatprep.subr.bf16.mxu0 %v2198
    %3197 = vmatpush2.bf16.msra.mxu0 %v2197
    %3198 = vmatprep.subr.bf16.mxu0 %v2182
    %3199 = vmatpush2.bf16.msra.mxu0 %v2181
    %3200 = vmatprep.subr.bf16.mxu0 %v2166
    %3201 = vmatpush2.bf16.msra.mxu0 %v2165
    %3202 = vmatprep.subr.bf16.mxu0 %v2150
    %3203 = vmatpush2.bf16.msra.mxu0 %v2149
    %3204 = vmatprep.mubr.bf16.mxu0 %v1244
    %3205 = vmatmul.mubr.bf16.gmra.mxu0 %v1243
    %v3206 = vpop.f32.mrf.mxu0
    %v3207 = vadd.f32 %v3164, %v3206
    %v3208 = vpop.f32.mrf.mxu0
    %v3209 = vadd.f32 %v3166, %v3208
    %v3210 = vpop.f32.mrf.mxu0
    %v3211 = vadd.f32 %v3168, %v3210
    %v3212 = vpop.f32.mrf.mxu0
    %v3213 = vadd.f32 %v3170, %v3212
    %3214 = vdwg.mxu0
    %3215 = vmatprep.subr.bf16.mxu0 %v2390
    %3216 = vmatpush1.bf16.msra.mxu0 %v2389
    %3217 = vmatprep.subr.bf16.mxu0 %v2374
    %3218 = vmatpush1.bf16.msra.mxu0 %v2373
    %3219 = vmatprep.subr.bf16.mxu0 %v2358
    %3220 = vmatpush1.bf16.msra.mxu0 %v2357
    %3221 = vmatprep.subr.bf16.mxu0 %v2342
    %3222 = vmatpush1.bf16.msra.mxu0 %v2341
    %3223 = vmatprep.subr.bf16.mxu0 %v2326
    %3224 = vmatpush1.bf16.msra.mxu0 %v2325
    %3225 = vmatprep.subr.bf16.mxu0 %v2310
    %3226 = vmatpush1.bf16.msra.mxu0 %v2309
    %3227 = vmatprep.subr.bf16.mxu0 %v2294
    %3228 = vmatpush1.bf16.msra.mxu0 %v2293
    %3229 = vmatprep.subr.bf16.mxu0 %v2278
    %3230 = vmatpush1.bf16.msra.mxu0 %v2277
    %3231 = vmatprep.subr.bf16.mxu0 %v2518
    %3232 = vmatpush2.bf16.msra.mxu0 %v2517
    %3233 = vmatprep.subr.bf16.mxu0 %v2502
    %3234 = vmatpush2.bf16.msra.mxu0 %v2501
    %3235 = vmatprep.subr.bf16.mxu0 %v2486
    %3236 = vmatpush2.bf16.msra.mxu0 %v2485
    %3237 = vmatprep.subr.bf16.mxu0 %v2470
    %3238 = vmatpush2.bf16.msra.mxu0 %v2469
    %3239 = vmatprep.subr.bf16.mxu0 %v2454
    %3240 = vmatpush2.bf16.msra.mxu0 %v2453
    %3241 = vmatprep.subr.bf16.mxu0 %v2438
    %3242 = vmatpush2.bf16.msra.mxu0 %v2437
    %3243 = vmatprep.subr.bf16.mxu0 %v2422
    %3244 = vmatpush2.bf16.msra.mxu0 %v2421
    %3245 = vmatprep.subr.bf16.mxu0 %v2406
    %3246 = vmatpush2.bf16.msra.mxu0 %v2405
    %3247 = vmatprep.mubr.bf16.mxu0 %v1246
    %3248 = vmatmul.mubr.bf16.gmra.mxu0 %v1245
    %v3249 = vpop.f32.mrf.mxu0
    %v3250 = vadd.f32 %v3207, %v3249
    %v3251 = vpop.f32.mrf.mxu0
    %v3252 = vadd.f32 %v3209, %v3251
    %v3253 = vpop.f32.mrf.mxu0
    %v3254 = vadd.f32 %v3211, %v3253
    %v3255 = vpop.f32.mrf.mxu0
    %v3256 = vadd.f32 %v3213, %v3255
    %3257 = vdwg.mxu0
    %3258 = vmatprep.subr.bf16.mxu0 %v2646
    %3259 = vmatpush1.bf16.msra.mxu0 %v2645
    %3260 = vmatprep.subr.bf16.mxu0 %v2630
    %3261 = vmatpush1.bf16.msra.mxu0 %v2629
    %3262 = vmatprep.subr.bf16.mxu0 %v2614
    %3263 = vmatpush1.bf16.msra.mxu0 %v2613
    %3264 = vmatprep.subr.bf16.mxu0 %v2598
    %3265 = vmatpush1.bf16.msra.mxu0 %v2597
    %3266 = vmatprep.subr.bf16.mxu0 %v2582
    %3267 = vmatpush1.bf16.msra.mxu0 %v2581
    %3268 = vmatprep.subr.bf16.mxu0 %v2566
    %3269 = vmatpush1.bf16.msra.mxu0 %v2565
    %3270 = vmatprep.subr.bf16.mxu0 %v2550
    %3271 = vmatpush1.bf16.msra.mxu0 %v2549
    %3272 = vmatprep.subr.bf16.mxu0 %v2534
    %3273 = vmatpush1.bf16.msra.mxu0 %v2533
    %3274 = vmatprep.subr.bf16.mxu0 %v2774
    %3275 = vmatpush2.bf16.msra.mxu0 %v2773
    %3276 = vmatprep.subr.bf16.mxu0 %v2758
    %3277 = vmatpush2.bf16.msra.mxu0 %v2757
    %3278 = vmatprep.subr.bf16.mxu0 %v2742
    %3279 = vmatpush2.bf16.msra.mxu0 %v2741
    %3280 = vmatprep.subr.bf16.mxu0 %v2726
    %3281 = vmatpush2.bf16.msra.mxu0 %v2725
    %3282 = vmatprep.subr.bf16.mxu0 %v2710
    %3283 = vmatpush2.bf16.msra.mxu0 %v2709
    %3284 = vmatprep.subr.bf16.mxu0 %v2694
    %3285 = vmatpush2.bf16.msra.mxu0 %v2693
    %3286 = vmatprep.subr.bf16.mxu0 %v2678
    %3287 = vmatpush2.bf16.msra.mxu0 %v2677
    %3288 = vmatprep.subr.bf16.mxu0 %v2662
    %3289 = vmatpush2.bf16.msra.mxu0 %v2661
    %3290 = vmatprep.mubr.bf16.mxu0 %v1248
    %3291 = vmatmul.mubr.bf16.gmra.mxu0 %v1247
    %v3292 = vpop.f32.mrf.mxu0
    %v3293 = vadd.f32 %v3250, %v3292
    %v3294 = vpop.f32.mrf.mxu0
    %v3295 = vadd.f32 %v3252, %v3294
    %v3296 = vpop.f32.mrf.mxu0
    %v3297 = vadd.f32 %v3254, %v3296
    %v3298 = vpop.f32.mrf.mxu0
    %v3299 = vadd.f32 %v3256, %v3298
    %3300 = vdwg.mxu0
    %3301 = vmatprep.subr.bf16.mxu0 %v1880
    %3302 = vmatpush1.bf16.msra.mxu0 %v1879
    %3303 = vmatprep.subr.bf16.mxu0 %v1864
    %3304 = vmatpush1.bf16.msra.mxu0 %v1863
    %3305 = vmatprep.subr.bf16.mxu0 %v1848
    %3306 = vmatpush1.bf16.msra.mxu0 %v1847
    %3307 = vmatprep.subr.bf16.mxu0 %v1832
    %3308 = vmatpush1.bf16.msra.mxu0 %v1831
    %3309 = vmatprep.subr.bf16.mxu0 %v1816
    %3310 = vmatpush1.bf16.msra.mxu0 %v1815
    %3311 = vmatprep.subr.bf16.mxu0 %v1800
    %3312 = vmatpush1.bf16.msra.mxu0 %v1799
    %3313 = vmatprep.subr.bf16.mxu0 %v1784
    %3314 = vmatpush1.bf16.msra.mxu0 %v1783
    %3315 = vmatprep.subr.bf16.mxu0 %v1768
    %3316 = vmatpush1.bf16.msra.mxu0 %v1767
    %3317 = vmatprep.subr.bf16.mxu0 %v2008
    %3318 = vmatpush2.bf16.msra.mxu0 %v2007
    %3319 = vmatprep.subr.bf16.mxu0 %v1992
    %3320 = vmatpush2.bf16.msra.mxu0 %v1991
    %3321 = vmatprep.subr.bf16.mxu0 %v1976
    %3322 = vmatpush2.bf16.msra.mxu0 %v1975
    %3323 = vmatprep.subr.bf16.mxu0 %v1960
    %3324 = vmatpush2.bf16.msra.mxu0 %v1959
    %3325 = vmatprep.subr.bf16.mxu0 %v1944
    %3326 = vmatpush2.bf16.msra.mxu0 %v1943
    %3327 = vmatprep.subr.bf16.mxu0 %v1928
    %3328 = vmatpush2.bf16.msra.mxu0 %v1927
    %3329 = vmatprep.subr.bf16.mxu0 %v1912
    %3330 = vmatpush2.bf16.msra.mxu0 %v1911
    %3331 = vmatprep.subr.bf16.mxu0 %v1896
    %3332 = vmatpush2.bf16.msra.mxu0 %v1895
    %3333 = vmatprep.mubr.bf16.mxu0 %v1242
    %3334 = vmatmul.mubr.bf16.gmra.mxu0 %v1241
    %v3335 = vpop.f32.mrf.mxu0
    %v3336 = vadd.f32 0.0, %v3335
    %v3337 = vpop.f32.mrf.mxu0
    %v3338 = vadd.f32 0.0, %v3337
    %v3339 = vpop.f32.mrf.mxu0
    %v3340 = vadd.f32 0.0, %v3339
    %v3341 = vpop.f32.mrf.mxu0
    %v3342 = vadd.f32 0.0, %v3341
    %3343 = vdwg.mxu0
    %3344 = vmatprep.subr.bf16.mxu0 %v2136
    %3345 = vmatpush1.bf16.msra.mxu0 %v2135
    %3346 = vmatprep.subr.bf16.mxu0 %v2120
    %3347 = vmatpush1.bf16.msra.mxu0 %v2119
    %3348 = vmatprep.subr.bf16.mxu0 %v2104
    %3349 = vmatpush1.bf16.msra.mxu0 %v2103
    %3350 = vmatprep.subr.bf16.mxu0 %v2088
    %3351 = vmatpush1.bf16.msra.mxu0 %v2087
    %3352 = vmatprep.subr.bf16.mxu0 %v2072
    %3353 = vmatpush1.bf16.msra.mxu0 %v2071
    %3354 = vmatprep.subr.bf16.mxu0 %v2056
    %3355 = vmatpush1.bf16.msra.mxu0 %v2055
    %3356 = vmatprep.subr.bf16.mxu0 %v2040
    %3357 = vmatpush1.bf16.msra.mxu0 %v2039
    %3358 = vmatprep.subr.bf16.mxu0 %v2024
    %3359 = vmatpush1.bf16.msra.mxu0 %v2023
    %3360 = vmatprep.subr.bf16.mxu0 %v2264
    %3361 = vmatpush2.bf16.msra.mxu0 %v2263
    %3362 = vmatprep.subr.bf16.mxu0 %v2248
    %3363 = vmatpush2.bf16.msra.mxu0 %v2247
    %3364 = vmatprep.subr.bf16.mxu0 %v2232
    %3365 = vmatpush2.bf16.msra.mxu0 %v2231
    %3366 = vmatprep.subr.bf16.mxu0 %v2216
    %3367 = vmatpush2.bf16.msra.mxu0 %v2215
    %3368 = vmatprep.subr.bf16.mxu0 %v2200
    %3369 = vmatpush2.bf16.msra.mxu0 %v2199
    %3370 = vmatprep.subr.bf16.mxu0 %v2184
    %3371 = vmatpush2.bf16.msra.mxu0 %v2183
    %3372 = vmatprep.subr.bf16.mxu0 %v2168
    %3373 = vmatpush2.bf16.msra.mxu0 %v2167
    %3374 = vmatprep.subr.bf16.mxu0 %v2152
    %3375 = vmatpush2.bf16.msra.mxu0 %v2151
    %3376 = vmatprep.mubr.bf16.mxu0 %v1244
    %3377 = vmatmul.mubr.bf16.gmra.mxu0 %v1243
    %v3378 = vpop.f32.mrf.mxu0
    %v3379 = vadd.f32 %v3336, %v3378
    %v3380 = vpop.f32.mrf.mxu0
    %v3381 = vadd.f32 %v3338, %v3380
    %v3382 = vpop.f32.mrf.mxu0
    %v3383 = vadd.f32 %v3340, %v3382
    %v3384 = vpop.f32.mrf.mxu0
    %v3385 = vadd.f32 %v3342, %v3384
    %3386 = vdwg.mxu0
    %3387 = vmatprep.subr.bf16.mxu0 %v2392
    %3388 = vmatpush1.bf16.msra.mxu0 %v2391
    %3389 = vmatprep.subr.bf16.mxu0 %v2376
    %3390 = vmatpush1.bf16.msra.mxu0 %v2375
    %3391 = vmatprep.subr.bf16.mxu0 %v2360
    %3392 = vmatpush1.bf16.msra.mxu0 %v2359
    %3393 = vmatprep.subr.bf16.mxu0 %v2344
    %3394 = vmatpush1.bf16.msra.mxu0 %v2343
    %3395 = vmatprep.subr.bf16.mxu0 %v2328
    %3396 = vmatpush1.bf16.msra.mxu0 %v2327
    %3397 = vmatprep.subr.bf16.mxu0 %v2312
    %3398 = vmatpush1.bf16.msra.mxu0 %v2311
    %3399 = vmatprep.subr.bf16.mxu0 %v2296
    %3400 = vmatpush1.bf16.msra.mxu0 %v2295
    %3401 = vmatprep.subr.bf16.mxu0 %v2280
    %3402 = vmatpush1.bf16.msra.mxu0 %v2279
    %3403 = vmatprep.subr.bf16.mxu0 %v2520
    %3404 = vmatpush2.bf16.msra.mxu0 %v2519
    %3405 = vmatprep.subr.bf16.mxu0 %v2504
    %3406 = vmatpush2.bf16.msra.mxu0 %v2503
    %3407 = vmatprep.subr.bf16.mxu0 %v2488
    %3408 = vmatpush2.bf16.msra.mxu0 %v2487
    %3409 = vmatprep.subr.bf16.mxu0 %v2472
    %3410 = vmatpush2.bf16.msra.mxu0 %v2471
    %3411 = vmatprep.subr.bf16.mxu0 %v2456
    %3412 = vmatpush2.bf16.msra.mxu0 %v2455
    %3413 = vmatprep.subr.bf16.mxu0 %v2440
    %3414 = vmatpush2.bf16.msra.mxu0 %v2439
    %3415 = vmatprep.subr.bf16.mxu0 %v2424
    %3416 = vmatpush2.bf16.msra.mxu0 %v2423
    %3417 = vmatprep.subr.bf16.mxu0 %v2408
    %3418 = vmatpush2.bf16.msra.mxu0 %v2407
    %3419 = vmatprep.mubr.bf16.mxu0 %v1246
    %3420 = vmatmul.mubr.bf16.gmra.mxu0 %v1245
    %v3421 = vpop.f32.mrf.mxu0
    %v3422 = vadd.f32 %v3379, %v3421
    %v3423 = vpop.f32.mrf.mxu0
    %v3424 = vadd.f32 %v3381, %v3423
    %v3425 = vpop.f32.mrf.mxu0
    %v3426 = vadd.f32 %v3383, %v3425
    %v3427 = vpop.f32.mrf.mxu0
    %v3428 = vadd.f32 %v3385, %v3427
    %3429 = vdwg.mxu0
    %3430 = vmatprep.subr.bf16.mxu0 %v2648
    %3431 = vmatpush1.bf16.msra.mxu0 %v2647
    %3432 = vmatprep.subr.bf16.mxu0 %v2632
    %3433 = vmatpush1.bf16.msra.mxu0 %v2631
    %3434 = vmatprep.subr.bf16.mxu0 %v2616
    %3435 = vmatpush1.bf16.msra.mxu0 %v2615
    %3436 = vmatprep.subr.bf16.mxu0 %v2600
    %3437 = vmatpush1.bf16.msra.mxu0 %v2599
    %3438 = vmatprep.subr.bf16.mxu0 %v2584
    %3439 = vmatpush1.bf16.msra.mxu0 %v2583
    %3440 = vmatprep.subr.bf16.mxu0 %v2568
    %3441 = vmatpush1.bf16.msra.mxu0 %v2567
    %3442 = vmatprep.subr.bf16.mxu0 %v2552
    %3443 = vmatpush1.bf16.msra.mxu0 %v2551
    %3444 = vmatprep.subr.bf16.mxu0 %v2536
    %3445 = vmatpush1.bf16.msra.mxu0 %v2535
    %3446 = vmatprep.subr.bf16.mxu0 %v2776
    %3447 = vmatpush2.bf16.msra.mxu0 %v2775
    %3448 = vmatprep.subr.bf16.mxu0 %v2760
    %3449 = vmatpush2.bf16.msra.mxu0 %v2759
    %3450 = vmatprep.subr.bf16.mxu0 %v2744
    %3451 = vmatpush2.bf16.msra.mxu0 %v2743
    %3452 = vmatprep.subr.bf16.mxu0 %v2728
    %3453 = vmatpush2.bf16.msra.mxu0 %v2727
    %3454 = vmatprep.subr.bf16.mxu0 %v2712
    %3455 = vmatpush2.bf16.msra.mxu0 %v2711
    %3456 = vmatprep.subr.bf16.mxu0 %v2696
    %3457 = vmatpush2.bf16.msra.mxu0 %v2695
    %3458 = vmatprep.subr.bf16.mxu0 %v2680
    %3459 = vmatpush2.bf16.msra.mxu0 %v2679
    %3460 = vmatprep.subr.bf16.mxu0 %v2664
    %3461 = vmatpush2.bf16.msra.mxu0 %v2663
    %3462 = vmatprep.mubr.bf16.mxu0 %v1248
    %3463 = vmatmul.mubr.bf16.gmra.mxu0 %v1247
    %v3464 = vpop.f32.mrf.mxu0
    %v3465 = vadd.f32 %v3422, %v3464
    %v3466 = vpop.f32.mrf.mxu0
    %v3467 = vadd.f32 %v3424, %v3466
    %v3468 = vpop.f32.mrf.mxu0
    %v3469 = vadd.f32 %v3426, %v3468
    %v3470 = vpop.f32.mrf.mxu0
    %v3471 = vadd.f32 %v3428, %v3470
    %3472 = vdwg.mxu0
    %3473 = vmatprep.subr.bf16.mxu0 %v1882
    %3474 = vmatpush1.bf16.msra.mxu0 %v1881
    %3475 = vmatprep.subr.bf16.mxu0 %v1866
    %3476 = vmatpush1.bf16.msra.mxu0 %v1865
    %3477 = vmatprep.subr.bf16.mxu0 %v1850
    %3478 = vmatpush1.bf16.msra.mxu0 %v1849
    %3479 = vmatprep.subr.bf16.mxu0 %v1834
    %3480 = vmatpush1.bf16.msra.mxu0 %v1833
    %3481 = vmatprep.subr.bf16.mxu0 %v1818
    %3482 = vmatpush1.bf16.msra.mxu0 %v1817
    %3483 = vmatprep.subr.bf16.mxu0 %v1802
    %3484 = vmatpush1.bf16.msra.mxu0 %v1801
    %3485 = vmatprep.subr.bf16.mxu0 %v1786
    %3486 = vmatpush1.bf16.msra.mxu0 %v1785
    %3487 = vmatprep.subr.bf16.mxu0 %v1770
    %3488 = vmatpush1.bf16.msra.mxu0 %v1769
    %3489 = vmatprep.subr.bf16.mxu0 %v2010
    %3490 = vmatpush2.bf16.msra.mxu0 %v2009
    %3491 = vmatprep.subr.bf16.mxu0 %v1994
    %3492 = vmatpush2.bf16.msra.mxu0 %v1993
    %3493 = vmatprep.subr.bf16.mxu0 %v1978
    %3494 = vmatpush2.bf16.msra.mxu0 %v1977
    %3495 = vmatprep.subr.bf16.mxu0 %v1962
    %3496 = vmatpush2.bf16.msra.mxu0 %v1961
    %3497 = vmatprep.subr.bf16.mxu0 %v1946
    %3498 = vmatpush2.bf16.msra.mxu0 %v1945
    %3499 = vmatprep.subr.bf16.mxu0 %v1930
    %3500 = vmatpush2.bf16.msra.mxu0 %v1929
    %3501 = vmatprep.subr.bf16.mxu0 %v1914
    %3502 = vmatpush2.bf16.msra.mxu0 %v1913
    %3503 = vmatprep.subr.bf16.mxu0 %v1898
    %3504 = vmatpush2.bf16.msra.mxu0 %v1897
    %3505 = vmatprep.mubr.bf16.mxu0 %v1242
    %3506 = vmatmul.mubr.bf16.gmra.mxu0 %v1241
    %v3507 = vpop.f32.mrf.mxu0
    %v3508 = vadd.f32 0.0, %v3507
    %v3509 = vpop.f32.mrf.mxu0
    %v3510 = vadd.f32 0.0, %v3509
    %v3511 = vpop.f32.mrf.mxu0
    %v3512 = vadd.f32 0.0, %v3511
    %v3513 = vpop.f32.mrf.mxu0
    %v3514 = vadd.f32 0.0, %v3513
    %3515 = vdwg.mxu0
    %3516 = vmatprep.subr.bf16.mxu0 %v2138
    %3517 = vmatpush1.bf16.msra.mxu0 %v2137
    %3518 = vmatprep.subr.bf16.mxu0 %v2122
    %3519 = vmatpush1.bf16.msra.mxu0 %v2121
    %3520 = vmatprep.subr.bf16.mxu0 %v2106
    %3521 = vmatpush1.bf16.msra.mxu0 %v2105
    %3522 = vmatprep.subr.bf16.mxu0 %v2090
    %3523 = vmatpush1.bf16.msra.mxu0 %v2089
    %3524 = vmatprep.subr.bf16.mxu0 %v2074
    %3525 = vmatpush1.bf16.msra.mxu0 %v2073
    %3526 = vmatprep.subr.bf16.mxu0 %v2058
    %3527 = vmatpush1.bf16.msra.mxu0 %v2057
    %3528 = vmatprep.subr.bf16.mxu0 %v2042
    %3529 = vmatpush1.bf16.msra.mxu0 %v2041
    %3530 = vmatprep.subr.bf16.mxu0 %v2026
    %3531 = vmatpush1.bf16.msra.mxu0 %v2025
    %3532 = vmatprep.subr.bf16.mxu0 %v2266
    %3533 = vmatpush2.bf16.msra.mxu0 %v2265
    %3534 = vmatprep.subr.bf16.mxu0 %v2250
    %3535 = vmatpush2.bf16.msra.mxu0 %v2249
    %3536 = vmatprep.subr.bf16.mxu0 %v2234
    %3537 = vmatpush2.bf16.msra.mxu0 %v2233
    %3538 = vmatprep.subr.bf16.mxu0 %v2218
    %3539 = vmatpush2.bf16.msra.mxu0 %v2217
    %3540 = vmatprep.subr.bf16.mxu0 %v2202
    %3541 = vmatpush2.bf16.msra.mxu0 %v2201
    %3542 = vmatprep.subr.bf16.mxu0 %v2186
    %3543 = vmatpush2.bf16.msra.mxu0 %v2185
    %3544 = vmatprep.subr.bf16.mxu0 %v2170
    %3545 = vmatpush2.bf16.msra.mxu0 %v2169
    %3546 = vmatprep.subr.bf16.mxu0 %v2154
    %3547 = vmatpush2.bf16.msra.mxu0 %v2153
    %3548 = vmatprep.mubr.bf16.mxu0 %v1244
    %3549 = vmatmul.mubr.bf16.gmra.mxu0 %v1243
    %v3550 = vpop.f32.mrf.mxu0
    %v3551 = vadd.f32 %v3508, %v3550
    %v3552 = vpop.f32.mrf.mxu0
    %v3553 = vadd.f32 %v3510, %v3552
    %v3554 = vpop.f32.mrf.mxu0
    %v3555 = vadd.f32 %v3512, %v3554
    %v3556 = vpop.f32.mrf.mxu0
    %v3557 = vadd.f32 %v3514, %v3556
    %3558 = vdwg.mxu0
    %3559 = vmatprep.subr.bf16.mxu0 %v2394
    %3560 = vmatpush1.bf16.msra.mxu0 %v2393
    %3561 = vmatprep.subr.bf16.mxu0 %v2378
    %3562 = vmatpush1.bf16.msra.mxu0 %v2377
    %3563 = vmatprep.subr.bf16.mxu0 %v2362
    %3564 = vmatpush1.bf16.msra.mxu0 %v2361
    %3565 = vmatprep.subr.bf16.mxu0 %v2346
    %3566 = vmatpush1.bf16.msra.mxu0 %v2345
    %3567 = vmatprep.subr.bf16.mxu0 %v2330
    %3568 = vmatpush1.bf16.msra.mxu0 %v2329
    %3569 = vmatprep.subr.bf16.mxu0 %v2314
    %3570 = vmatpush1.bf16.msra.mxu0 %v2313
    %3571 = vmatprep.subr.bf16.mxu0 %v2298
    %3572 = vmatpush1.bf16.msra.mxu0 %v2297
    %3573 = vmatprep.subr.bf16.mxu0 %v2282
    %3574 = vmatpush1.bf16.msra.mxu0 %v2281
    %3575 = vmatprep.subr.bf16.mxu0 %v2522
    %3576 = vmatpush2.bf16.msra.mxu0 %v2521
    %3577 = vmatprep.subr.bf16.mxu0 %v2506
    %3578 = vmatpush2.bf16.msra.mxu0 %v2505
    %3579 = vmatprep.subr.bf16.mxu0 %v2490
    %3580 = vmatpush2.bf16.msra.mxu0 %v2489
    %3581 = vmatprep.subr.bf16.mxu0 %v2474
    %3582 = vmatpush2.bf16.msra.mxu0 %v2473
    %3583 = vmatprep.subr.bf16.mxu0 %v2458
    %3584 = vmatpush2.bf16.msra.mxu0 %v2457
    %3585 = vmatprep.subr.bf16.mxu0 %v2442
    %3586 = vmatpush2.bf16.msra.mxu0 %v2441
    %3587 = vmatprep.subr.bf16.mxu0 %v2426
    %3588 = vmatpush2.bf16.msra.mxu0 %v2425
    %3589 = vmatprep.subr.bf16.mxu0 %v2410
    %3590 = vmatpush2.bf16.msra.mxu0 %v2409
    %3591 = vmatprep.mubr.bf16.mxu0 %v1246
    %3592 = vmatmul.mubr.bf16.gmra.mxu0 %v1245
    %v3593 = vpop.f32.mrf.mxu0
    %v3594 = vadd.f32 %v3551, %v3593
    %v3595 = vpop.f32.mrf.mxu0
    %v3596 = vadd.f32 %v3553, %v3595
    %v3597 = vpop.f32.mrf.mxu0
    %v3598 = vadd.f32 %v3555, %v3597
    %v3599 = vpop.f32.mrf.mxu0
    %v3600 = vadd.f32 %v3557, %v3599
    %3601 = vdwg.mxu0
    %3602 = vmatprep.subr.bf16.mxu0 %v2650
    %3603 = vmatpush1.bf16.msra.mxu0 %v2649
    %3604 = vmatprep.subr.bf16.mxu0 %v2634
    %3605 = vmatpush1.bf16.msra.mxu0 %v2633
    %3606 = vmatprep.subr.bf16.mxu0 %v2618
    %3607 = vmatpush1.bf16.msra.mxu0 %v2617
    %3608 = vmatprep.subr.bf16.mxu0 %v2602
    %3609 = vmatpush1.bf16.msra.mxu0 %v2601
    %3610 = vmatprep.subr.bf16.mxu0 %v2586
    %3611 = vmatpush1.bf16.msra.mxu0 %v2585
    %3612 = vmatprep.subr.bf16.mxu0 %v2570
    %3613 = vmatpush1.bf16.msra.mxu0 %v2569
    %3614 = vmatprep.subr.bf16.mxu0 %v2554
    %3615 = vmatpush1.bf16.msra.mxu0 %v2553
    %3616 = vmatprep.subr.bf16.mxu0 %v2538
    %3617 = vmatpush1.bf16.msra.mxu0 %v2537
    %3618 = vmatprep.subr.bf16.mxu0 %v2778
    %3619 = vmatpush2.bf16.msra.mxu0 %v2777
    %3620 = vmatprep.subr.bf16.mxu0 %v2762
    %3621 = vmatpush2.bf16.msra.mxu0 %v2761
    %3622 = vmatprep.subr.bf16.mxu0 %v2746
    %3623 = vmatpush2.bf16.msra.mxu0 %v2745
    %3624 = vmatprep.subr.bf16.mxu0 %v2730
    %3625 = vmatpush2.bf16.msra.mxu0 %v2729
    %3626 = vmatprep.subr.bf16.mxu0 %v2714
    %3627 = vmatpush2.bf16.msra.mxu0 %v2713
    %3628 = vmatprep.subr.bf16.mxu0 %v2698
    %3629 = vmatpush2.bf16.msra.mxu0 %v2697
    %3630 = vmatprep.subr.bf16.mxu0 %v2682
    %3631 = vmatpush2.bf16.msra.mxu0 %v2681
    %3632 = vmatprep.subr.bf16.mxu0 %v2666
    %3633 = vmatpush2.bf16.msra.mxu0 %v2665
    %3634 = vmatprep.mubr.bf16.mxu0 %v1248
    %3635 = vmatmul.mubr.bf16.gmra.mxu0 %v1247
    %v3636 = vpop.f32.mrf.mxu0
    %v3637 = vadd.f32 %v3594, %v3636
    %v3638 = vpop.f32.mrf.mxu0
    %v3639 = vadd.f32 %v3596, %v3638
    %v3640 = vpop.f32.mrf.mxu0
    %v3641 = vadd.f32 %v3598, %v3640
    %v3642 = vpop.f32.mrf.mxu0
    %v3643 = vadd.f32 %v3600, %v3642
    %3644 = vdwg.mxu0
    %3645 = vmatprep.subr.bf16.mxu0 %v1884
    %3646 = vmatpush1.bf16.msra.mxu0 %v1883
    %3647 = vmatprep.subr.bf16.mxu0 %v1868
    %3648 = vmatpush1.bf16.msra.mxu0 %v1867
    %3649 = vmatprep.subr.bf16.mxu0 %v1852
    %3650 = vmatpush1.bf16.msra.mxu0 %v1851
    %3651 = vmatprep.subr.bf16.mxu0 %v1836
    %3652 = vmatpush1.bf16.msra.mxu0 %v1835
    %3653 = vmatprep.subr.bf16.mxu0 %v1820
    %3654 = vmatpush1.bf16.msra.mxu0 %v1819
    %3655 = vmatprep.subr.bf16.mxu0 %v1804
    %3656 = vmatpush1.bf16.msra.mxu0 %v1803
    %3657 = vmatprep.subr.bf16.mxu0 %v1788
    %3658 = vmatpush1.bf16.msra.mxu0 %v1787
    %3659 = vmatprep.subr.bf16.mxu0 %v1772
    %3660 = vmatpush1.bf16.msra.mxu0 %v1771
    %3661 = vmatprep.subr.bf16.mxu0 %v2012
    %3662 = vmatpush2.bf16.msra.mxu0 %v2011
    %3663 = vmatprep.subr.bf16.mxu0 %v1996
    %3664 = vmatpush2.bf16.msra.mxu0 %v1995
    %3665 = vmatprep.subr.bf16.mxu0 %v1980
    %3666 = vmatpush2.bf16.msra.mxu0 %v1979
    %3667 = vmatprep.subr.bf16.mxu0 %v1964
    %3668 = vmatpush2.bf16.msra.mxu0 %v1963
    %3669 = vmatprep.subr.bf16.mxu0 %v1948
    %3670 = vmatpush2.bf16.msra.mxu0 %v1947
    %3671 = vmatprep.subr.bf16.mxu0 %v1932
    %3672 = vmatpush2.bf16.msra.mxu0 %v1931
    %3673 = vmatprep.subr.bf16.mxu0 %v1916
    %3674 = vmatpush2.bf16.msra.mxu0 %v1915
    %3675 = vmatprep.subr.bf16.mxu0 %v1900
    %3676 = vmatpush2.bf16.msra.mxu0 %v1899
    %3677 = vmatprep.mubr.bf16.mxu0 %v1242
    %3678 = vmatmul.mubr.bf16.gmra.mxu0 %v1241
    %v3679 = vpop.f32.mrf.mxu0
    %v3680 = vadd.f32 0.0, %v3679
    %v3681 = vpop.f32.mrf.mxu0
    %v3682 = vadd.f32 0.0, %v3681
    %v3683 = vpop.f32.mrf.mxu0
    %v3684 = vadd.f32 0.0, %v3683
    %v3685 = vpop.f32.mrf.mxu0
    %v3686 = vadd.f32 0.0, %v3685
    %3687 = vdwg.mxu0
    %3688 = vmatprep.subr.bf16.mxu0 %v2140
    %3689 = vmatpush1.bf16.msra.mxu0 %v2139
    %3690 = vmatprep.subr.bf16.mxu0 %v2124
    %3691 = vmatpush1.bf16.msra.mxu0 %v2123
    %3692 = vmatprep.subr.bf16.mxu0 %v2108
    %3693 = vmatpush1.bf16.msra.mxu0 %v2107
    %3694 = vmatprep.subr.bf16.mxu0 %v2092
    %3695 = vmatpush1.bf16.msra.mxu0 %v2091
    %3696 = vmatprep.subr.bf16.mxu0 %v2076
    %3697 = vmatpush1.bf16.msra.mxu0 %v2075
    %3698 = vmatprep.subr.bf16.mxu0 %v2060
    %3699 = vmatpush1.bf16.msra.mxu0 %v2059
    %3700 = vmatprep.subr.bf16.mxu0 %v2044
    %3701 = vmatpush1.bf16.msra.mxu0 %v2043
    %3702 = vmatprep.subr.bf16.mxu0 %v2028
    %3703 = vmatpush1.bf16.msra.mxu0 %v2027
    %3704 = vmatprep.subr.bf16.mxu0 %v2268
    %3705 = vmatpush2.bf16.msra.mxu0 %v2267
    %3706 = vmatprep.subr.bf16.mxu0 %v2252
    %3707 = vmatpush2.bf16.msra.mxu0 %v2251
    %3708 = vmatprep.subr.bf16.mxu0 %v2236
    %3709 = vmatpush2.bf16.msra.mxu0 %v2235
    %3710 = vmatprep.subr.bf16.mxu0 %v2220
    %3711 = vmatpush2.bf16.msra.mxu0 %v2219
    %3712 = vmatprep.subr.bf16.mxu0 %v2204
    %3713 = vmatpush2.bf16.msra.mxu0 %v2203
    %3714 = vmatprep.subr.bf16.mxu0 %v2188
    %3715 = vmatpush2.bf16.msra.mxu0 %v2187
    %3716 = vmatprep.subr.bf16.mxu0 %v2172
    %3717 = vmatpush2.bf16.msra.mxu0 %v2171
    %3718 = vmatprep.subr.bf16.mxu0 %v2156
    %3719 = vmatpush2.bf16.msra.mxu0 %v2155
    %3720 = vmatprep.mubr.bf16.mxu0 %v1244
    %3721 = vmatmul.mubr.bf16.gmra.mxu0 %v1243
    %v3722 = vpop.f32.mrf.mxu0
    %v3723 = vadd.f32 %v3680, %v3722
    %v3724 = vpop.f32.mrf.mxu0
    %v3725 = vadd.f32 %v3682, %v3724
    %v3726 = vpop.f32.mrf.mxu0
    %v3727 = vadd.f32 %v3684, %v3726
    %v3728 = vpop.f32.mrf.mxu0
    %v3729 = vadd.f32 %v3686, %v3728
    %3730 = vdwg.mxu0
    %3731 = vmatprep.subr.bf16.mxu0 %v2396
    %3732 = vmatpush1.bf16.msra.mxu0 %v2395
    %3733 = vmatprep.subr.bf16.mxu0 %v2380
    %3734 = vmatpush1.bf16.msra.mxu0 %v2379
    %3735 = vmatprep.subr.bf16.mxu0 %v2364
    %3736 = vmatpush1.bf16.msra.mxu0 %v2363
    %3737 = vmatprep.subr.bf16.mxu0 %v2348
    %3738 = vmatpush1.bf16.msra.mxu0 %v2347
    %3739 = vmatprep.subr.bf16.mxu0 %v2332
    %3740 = vmatpush1.bf16.msra.mxu0 %v2331
    %3741 = vmatprep.subr.bf16.mxu0 %v2316
    %3742 = vmatpush1.bf16.msra.mxu0 %v2315
    %3743 = vmatprep.subr.bf16.mxu0 %v2300
    %3744 = vmatpush1.bf16.msra.mxu0 %v2299
    %3745 = vmatprep.subr.bf16.mxu0 %v2284
    %3746 = vmatpush1.bf16.msra.mxu0 %v2283
    %3747 = vmatprep.subr.bf16.mxu0 %v2524
    %3748 = vmatpush2.bf16.msra.mxu0 %v2523
    %3749 = vmatprep.subr.bf16.mxu0 %v2508
    %3750 = vmatpush2.bf16.msra.mxu0 %v2507
    %3751 = vmatprep.subr.bf16.mxu0 %v2492
    %3752 = vmatpush2.bf16.msra.mxu0 %v2491
    %3753 = vmatprep.subr.bf16.mxu0 %v2476
    %3754 = vmatpush2.bf16.msra.mxu0 %v2475
    %3755 = vmatprep.subr.bf16.mxu0 %v2460
    %3756 = vmatpush2.bf16.msra.mxu0 %v2459
    %3757 = vmatprep.subr.bf16.mxu0 %v2444
    %3758 = vmatpush2.bf16.msra.mxu0 %v2443
    %3759 = vmatprep.subr.bf16.mxu0 %v2428
    %3760 = vmatpush2.bf16.msra.mxu0 %v2427
    %3761 = vmatprep.subr.bf16.mxu0 %v2412
    %3762 = vmatpush2.bf16.msra.mxu0 %v2411
    %3763 = vmatprep.mubr.bf16.mxu0 %v1246
    %3764 = vmatmul.mubr.bf16.gmra.mxu0 %v1245
    %v3765 = vpop.f32.mrf.mxu0
    %v3766 = vadd.f32 %v3723, %v3765
    %v3767 = vpop.f32.mrf.mxu0
    %v3768 = vadd.f32 %v3725, %v3767
    %v3769 = vpop.f32.mrf.mxu0
    %v3770 = vadd.f32 %v3727, %v3769
    %v3771 = vpop.f32.mrf.mxu0
    %v3772 = vadd.f32 %v3729, %v3771
    %3773 = vdwg.mxu0
    %3774 = vmatprep.subr.bf16.mxu0 %v2652
    %3775 = vmatpush1.bf16.msra.mxu0 %v2651
    %3776 = vmatprep.subr.bf16.mxu0 %v2636
    %3777 = vmatpush1.bf16.msra.mxu0 %v2635
    %3778 = vmatprep.subr.bf16.mxu0 %v2620
    %3779 = vmatpush1.bf16.msra.mxu0 %v2619
    %3780 = vmatprep.subr.bf16.mxu0 %v2604
    %3781 = vmatpush1.bf16.msra.mxu0 %v2603
    %3782 = vmatprep.subr.bf16.mxu0 %v2588
    %3783 = vmatpush1.bf16.msra.mxu0 %v2587
    %3784 = vmatprep.subr.bf16.mxu0 %v2572
    %3785 = vmatpush1.bf16.msra.mxu0 %v2571
    %3786 = vmatprep.subr.bf16.mxu0 %v2556
    %3787 = vmatpush1.bf16.msra.mxu0 %v2555
    %3788 = vmatprep.subr.bf16.mxu0 %v2540
    %3789 = vmatpush1.bf16.msra.mxu0 %v2539
    %3790 = vmatprep.subr.bf16.mxu0 %v2780
    %3791 = vmatpush2.bf16.msra.mxu0 %v2779
    %3792 = vmatprep.subr.bf16.mxu0 %v2764
    %3793 = vmatpush2.bf16.msra.mxu0 %v2763
    %3794 = vmatprep.subr.bf16.mxu0 %v2748
    %3795 = vmatpush2.bf16.msra.mxu0 %v2747
    %3796 = vmatprep.subr.bf16.mxu0 %v2732
    %3797 = vmatpush2.bf16.msra.mxu0 %v2731
    %3798 = vmatprep.subr.bf16.mxu0 %v2716
    %3799 = vmatpush2.bf16.msra.mxu0 %v2715
    %3800 = vmatprep.subr.bf16.mxu0 %v2700
    %3801 = vmatpush2.bf16.msra.mxu0 %v2699
    %3802 = vmatprep.subr.bf16.mxu0 %v2684
    %3803 = vmatpush2.bf16.msra.mxu0 %v2683
    %3804 = vmatprep.subr.bf16.mxu0 %v2668
    %3805 = vmatpush2.bf16.msra.mxu0 %v2667
    %3806 = vmatprep.mubr.bf16.mxu0 %v1248
    %3807 = vmatmul.mubr.bf16.gmra.mxu0 %v1247
    %v3808 = vpop.f32.mrf.mxu0
    %v3809 = vadd.f32 %v3766, %v3808
    %v3810 = vpop.f32.mrf.mxu0
    %v3811 = vadd.f32 %v3768, %v3810
    %v3812 = vpop.f32.mrf.mxu0
    %v3813 = vadd.f32 %v3770, %v3812
    %v3814 = vpop.f32.mrf.mxu0
    %v3815 = vadd.f32 %v3772, %v3814
    %3816 = vdwg.mxu0
    %3817 = vmatprep.subr.bf16.mxu0 %v1886
    %3818 = vmatpush1.bf16.msra.mxu0 %v1885
    %3819 = vmatprep.subr.bf16.mxu0 %v1870
    %3820 = vmatpush1.bf16.msra.mxu0 %v1869
    %3821 = vmatprep.subr.bf16.mxu0 %v1854
    %3822 = vmatpush1.bf16.msra.mxu0 %v1853
    %3823 = vmatprep.subr.bf16.mxu0 %v1838
    %3824 = vmatpush1.bf16.msra.mxu0 %v1837
    %3825 = vmatprep.subr.bf16.mxu0 %v1822
    %3826 = vmatpush1.bf16.msra.mxu0 %v1821
    %3827 = vmatprep.subr.bf16.mxu0 %v1806
    %3828 = vmatpush1.bf16.msra.mxu0 %v1805
    %3829 = vmatprep.subr.bf16.mxu0 %v1790
    %3830 = vmatpush1.bf16.msra.mxu0 %v1789
    %3831 = vmatprep.subr.bf16.mxu0 %v1774
    %3832 = vmatpush1.bf16.msra.mxu0 %v1773
    %3833 = vmatprep.subr.bf16.mxu0 %v2014
    %3834 = vmatpush2.bf16.msra.mxu0 %v2013
    %3835 = vmatprep.subr.bf16.mxu0 %v1998
    %3836 = vmatpush2.bf16.msra.mxu0 %v1997
    %3837 = vmatprep.subr.bf16.mxu0 %v1982
    %3838 = vmatpush2.bf16.msra.mxu0 %v1981
    %3839 = vmatprep.subr.bf16.mxu0 %v1966
    %3840 = vmatpush2.bf16.msra.mxu0 %v1965
    %3841 = vmatprep.subr.bf16.mxu0 %v1950
    %3842 = vmatpush2.bf16.msra.mxu0 %v1949
    %3843 = vmatprep.subr.bf16.mxu0 %v1934
    %3844 = vmatpush2.bf16.msra.mxu0 %v1933
    %3845 = vmatprep.subr.bf16.mxu0 %v1918
    %3846 = vmatpush2.bf16.msra.mxu0 %v1917
    %3847 = vmatprep.subr.bf16.mxu0 %v1902
    %3848 = vmatpush2.bf16.msra.mxu0 %v1901
    %3849 = vmatprep.mubr.bf16.mxu0 %v1242
    %3850 = vmatmul.mubr.bf16.gmra.mxu0 %v1241
    %v3851 = vpop.f32.mrf.mxu0
    %v3852 = vadd.f32 0.0, %v3851
    %v3853 = vpop.f32.mrf.mxu0
    %v3854 = vadd.f32 0.0, %v3853
    %v3855 = vpop.f32.mrf.mxu0
    %v3856 = vadd.f32 0.0, %v3855
    %v3857 = vpop.f32.mrf.mxu0
    %v3858 = vadd.f32 0.0, %v3857
    %3859 = vdwg.mxu0
    %3860 = vmatprep.subr.bf16.mxu0 %v2142
    %3861 = vmatpush1.bf16.msra.mxu0 %v2141
    %3862 = vmatprep.subr.bf16.mxu0 %v2126
    %3863 = vmatpush1.bf16.msra.mxu0 %v2125
    %3864 = vmatprep.subr.bf16.mxu0 %v2110
    %3865 = vmatpush1.bf16.msra.mxu0 %v2109
    %3866 = vmatprep.subr.bf16.mxu0 %v2094
    %3867 = vmatpush1.bf16.msra.mxu0 %v2093
    %3868 = vmatprep.subr.bf16.mxu0 %v2078
    %3869 = vmatpush1.bf16.msra.mxu0 %v2077
    %3870 = vmatprep.subr.bf16.mxu0 %v2062
    %3871 = vmatpush1.bf16.msra.mxu0 %v2061
    %3872 = vmatprep.subr.bf16.mxu0 %v2046
    %3873 = vmatpush1.bf16.msra.mxu0 %v2045
    %3874 = vmatprep.subr.bf16.mxu0 %v2030
    %3875 = vmatpush1.bf16.msra.mxu0 %v2029
    %3876 = vmatprep.subr.bf16.mxu0 %v2270
    %3877 = vmatpush2.bf16.msra.mxu0 %v2269
    %3878 = vmatprep.subr.bf16.mxu0 %v2254
    %3879 = vmatpush2.bf16.msra.mxu0 %v2253
    %3880 = vmatprep.subr.bf16.mxu0 %v2238
    %3881 = vmatpush2.bf16.msra.mxu0 %v2237
    %3882 = vmatprep.subr.bf16.mxu0 %v2222
    %3883 = vmatpush2.bf16.msra.mxu0 %v2221
    %3884 = vmatprep.subr.bf16.mxu0 %v2206
    %3885 = vmatpush2.bf16.msra.mxu0 %v2205
    %3886 = vmatprep.subr.bf16.mxu0 %v2190
    %3887 = vmatpush2.bf16.msra.mxu0 %v2189
    %3888 = vmatprep.subr.bf16.mxu0 %v2174
    %3889 = vmatpush2.bf16.msra.mxu0 %v2173
    %3890 = vmatprep.subr.bf16.mxu0 %v2158
    %3891 = vmatpush2.bf16.msra.mxu0 %v2157
    %3892 = vmatprep.mubr.bf16.mxu0 %v1244
    %3893 = vmatmul.mubr.bf16.gmra.mxu0 %v1243
    %v3894 = vpop.f32.mrf.mxu0
    %v3895 = vadd.f32 %v3852, %v3894
    %v3896 = vpop.f32.mrf.mxu0
    %v3897 = vadd.f32 %v3854, %v3896
    %v3898 = vpop.f32.mrf.mxu0
    %v3899 = vadd.f32 %v3856, %v3898
    %v3900 = vpop.f32.mrf.mxu0
    %v3901 = vadd.f32 %v3858, %v3900
    %3902 = vdwg.mxu0
    %3903 = vmatprep.subr.bf16.mxu0 %v2398
    %3904 = vmatpush1.bf16.msra.mxu0 %v2397
    %3905 = vmatprep.subr.bf16.mxu0 %v2382
    %3906 = vmatpush1.bf16.msra.mxu0 %v2381
    %3907 = vmatprep.subr.bf16.mxu0 %v2366
    %3908 = vmatpush1.bf16.msra.mxu0 %v2365
    %3909 = vmatprep.subr.bf16.mxu0 %v2350
    %3910 = vmatpush1.bf16.msra.mxu0 %v2349
    %3911 = vmatprep.subr.bf16.mxu0 %v2334
    %3912 = vmatpush1.bf16.msra.mxu0 %v2333
    %3913 = vmatprep.subr.bf16.mxu0 %v2318
    %3914 = vmatpush1.bf16.msra.mxu0 %v2317
    %3915 = vmatprep.subr.bf16.mxu0 %v2302
    %3916 = vmatpush1.bf16.msra.mxu0 %v2301
    %3917 = vmatprep.subr.bf16.mxu0 %v2286
    %3918 = vmatpush1.bf16.msra.mxu0 %v2285
    %3919 = vmatprep.subr.bf16.mxu0 %v2526
    %3920 = vmatpush2.bf16.msra.mxu0 %v2525
    %3921 = vmatprep.subr.bf16.mxu0 %v2510
    %3922 = vmatpush2.bf16.msra.mxu0 %v2509
    %3923 = vmatprep.subr.bf16.mxu0 %v2494
    %3924 = vmatpush2.bf16.msra.mxu0 %v2493
    %3925 = vmatprep.subr.bf16.mxu0 %v2478
    %3926 = vmatpush2.bf16.msra.mxu0 %v2477
    %3927 = vmatprep.subr.bf16.mxu0 %v2462
    %3928 = vmatpush2.bf16.msra.mxu0 %v2461
    %3929 = vmatprep.subr.bf16.mxu0 %v2446
    %3930 = vmatpush2.bf16.msra.mxu0 %v2445
    %3931 = vmatprep.subr.bf16.mxu0 %v2430
    %3932 = vmatpush2.bf16.msra.mxu0 %v2429
    %3933 = vmatprep.subr.bf16.mxu0 %v2414
    %3934 = vmatpush2.bf16.msra.mxu0 %v2413
    %3935 = vmatprep.mubr.bf16.mxu0 %v1246
    %3936 = vmatmul.mubr.bf16.gmra.mxu0 %v1245
    %v3937 = vpop.f32.mrf.mxu0
    %v3938 = vadd.f32 %v3895, %v3937
    %v3939 = vpop.f32.mrf.mxu0
    %v3940 = vadd.f32 %v3897, %v3939
    %v3941 = vpop.f32.mrf.mxu0
    %v3942 = vadd.f32 %v3899, %v3941
    %v3943 = vpop.f32.mrf.mxu0
    %v3944 = vadd.f32 %v3901, %v3943
    %3945 = vdwg.mxu0
    %3946 = vmatprep.subr.bf16.mxu0 %v2654
    %3947 = vmatpush1.bf16.msra.mxu0 %v2653
    %3948 = vmatprep.subr.bf16.mxu0 %v2638
    %3949 = vmatpush1.bf16.msra.mxu0 %v2637
    %3950 = vmatprep.subr.bf16.mxu0 %v2622
    %3951 = vmatpush1.bf16.msra.mxu0 %v2621
    %3952 = vmatprep.subr.bf16.mxu0 %v2606
    %3953 = vmatpush1.bf16.msra.mxu0 %v2605
    %3954 = vmatprep.subr.bf16.mxu0 %v2590
    %3955 = vmatpush1.bf16.msra.mxu0 %v2589
    %3956 = vmatprep.subr.bf16.mxu0 %v2574
    %3957 = vmatpush1.bf16.msra.mxu0 %v2573
    %3958 = vmatprep.subr.bf16.mxu0 %v2558
    %3959 = vmatpush1.bf16.msra.mxu0 %v2557
    %3960 = vmatprep.subr.bf16.mxu0 %v2542
    %3961 = vmatpush1.bf16.msra.mxu0 %v2541
    %3962 = vmatprep.subr.bf16.mxu0 %v2782
    %3963 = vmatpush2.bf16.msra.mxu0 %v2781
    %3964 = vmatprep.subr.bf16.mxu0 %v2766
    %3965 = vmatpush2.bf16.msra.mxu0 %v2765
    %3966 = vmatprep.subr.bf16.mxu0 %v2750
    %3967 = vmatpush2.bf16.msra.mxu0 %v2749
    %3968 = vmatprep.subr.bf16.mxu0 %v2734
    %3969 = vmatpush2.bf16.msra.mxu0 %v2733
    %3970 = vmatprep.subr.bf16.mxu0 %v2718
    %3971 = vmatpush2.bf16.msra.mxu0 %v2717
    %3972 = vmatprep.subr.bf16.mxu0 %v2702
    %3973 = vmatpush2.bf16.msra.mxu0 %v2701
    %3974 = vmatprep.subr.bf16.mxu0 %v2686
    %3975 = vmatpush2.bf16.msra.mxu0 %v2685
    %3976 = vmatprep.subr.bf16.mxu0 %v2670
    %3977 = vmatpush2.bf16.msra.mxu0 %v2669
    %3978 = vmatprep.mubr.bf16.mxu0 %v1248
    %3979 = vmatmul.mubr.bf16.gmra.mxu0 %v1247
    %v3980 = vpop.f32.mrf.mxu0
    %v3981 = vadd.f32 %v3938, %v3980
    %v3982 = vpop.f32.mrf.mxu0
    %v3983 = vadd.f32 %v3940, %v3982
    %v3984 = vpop.f32.mrf.mxu0
    %v3985 = vadd.f32 %v3942, %v3984
    %v3986 = vpop.f32.mrf.mxu0
    %v3987 = vadd.f32 %v3944, %v3986
    %3988 = vdwg.mxu0
    %3989 = vmatprep.subr.bf16.mxu0 %v1888
    %3990 = vmatpush1.bf16.msra.mxu0 %v1887
    %3991 = vmatprep.subr.bf16.mxu0 %v1872
    %3992 = vmatpush1.bf16.msra.mxu0 %v1871
    %3993 = vmatprep.subr.bf16.mxu0 %v1856
    %3994 = vmatpush1.bf16.msra.mxu0 %v1855
    %3995 = vmatprep.subr.bf16.mxu0 %v1840
    %3996 = vmatpush1.bf16.msra.mxu0 %v1839
    %3997 = vmatprep.subr.bf16.mxu0 %v1824
    %3998 = vmatpush1.bf16.msra.mxu0 %v1823
    %3999 = vmatprep.subr.bf16.mxu0 %v1808
    %4000 = vmatpush1.bf16.msra.mxu0 %v1807
    %4001 = vmatprep.subr.bf16.mxu0 %v1792
    %4002 = vmatpush1.bf16.msra.mxu0 %v1791
    %4003 = vmatprep.subr.bf16.mxu0 %v1776
    %4004 = vmatpush1.bf16.msra.mxu0 %v1775
    %4005 = vmatprep.subr.bf16.mxu0 %v2016
    %4006 = vmatpush2.bf16.msra.mxu0 %v2015
    %4007 = vmatprep.subr.bf16.mxu0 %v2000
    %4008 = vmatpush2.bf16.msra.mxu0 %v1999
    %4009 = vmatprep.subr.bf16.mxu0 %v1984
    %4010 = vmatpush2.bf16.msra.mxu0 %v1983
    %4011 = vmatprep.subr.bf16.mxu0 %v1968
    %4012 = vmatpush2.bf16.msra.mxu0 %v1967
    %4013 = vmatprep.subr.bf16.mxu0 %v1952
    %4014 = vmatpush2.bf16.msra.mxu0 %v1951
    %4015 = vmatprep.subr.bf16.mxu0 %v1936
    %4016 = vmatpush2.bf16.msra.mxu0 %v1935
    %4017 = vmatprep.subr.bf16.mxu0 %v1920
    %4018 = vmatpush2.bf16.msra.mxu0 %v1919
    %4019 = vmatprep.subr.bf16.mxu0 %v1904
    %4020 = vmatpush2.bf16.msra.mxu0 %v1903
    %4021 = vmatprep.mubr.bf16.mxu0 %v1242
    %4022 = vmatmul.mubr.bf16.gmra.mxu0 %v1241
    %v4023 = vpop.f32.mrf.mxu0
    %v4024 = vadd.f32 0.0, %v4023
    %v4025 = vpop.f32.mrf.mxu0
    %v4026 = vadd.f32 0.0, %v4025
    %v4027 = vpop.f32.mrf.mxu0
    %v4028 = vadd.f32 0.0, %v4027
    %v4029 = vpop.f32.mrf.mxu0
    %v4030 = vadd.f32 0.0, %v4029
    %4031 = vdwg.mxu0
    %4032 = vmatprep.subr.bf16.mxu0 %v2144
    %4033 = vmatpush1.bf16.msra.mxu0 %v2143
    %4034 = vmatprep.subr.bf16.mxu0 %v2128
    %4035 = vmatpush1.bf16.msra.mxu0 %v2127
    %4036 = vmatprep.subr.bf16.mxu0 %v2112
    %4037 = vmatpush1.bf16.msra.mxu0 %v2111
    %4038 = vmatprep.subr.bf16.mxu0 %v2096
    %4039 = vmatpush1.bf16.msra.mxu0 %v2095
    %4040 = vmatprep.subr.bf16.mxu0 %v2080
    %4041 = vmatpush1.bf16.msra.mxu0 %v2079
    %4042 = vmatprep.subr.bf16.mxu0 %v2064
    %4043 = vmatpush1.bf16.msra.mxu0 %v2063
    %4044 = vmatprep.subr.bf16.mxu0 %v2048
    %4045 = vmatpush1.bf16.msra.mxu0 %v2047
    %4046 = vmatprep.subr.bf16.mxu0 %v2032
    %4047 = vmatpush1.bf16.msra.mxu0 %v2031
    %4048 = vmatprep.subr.bf16.mxu0 %v2272
    %4049 = vmatpush2.bf16.msra.mxu0 %v2271
    %4050 = vmatprep.subr.bf16.mxu0 %v2256
    %4051 = vmatpush2.bf16.msra.mxu0 %v2255
    %4052 = vmatprep.subr.bf16.mxu0 %v2240
    %4053 = vmatpush2.bf16.msra.mxu0 %v2239
    %4054 = vmatprep.subr.bf16.mxu0 %v2224
    %4055 = vmatpush2.bf16.msra.mxu0 %v2223
    %4056 = vmatprep.subr.bf16.mxu0 %v2208
    %4057 = vmatpush2.bf16.msra.mxu0 %v2207
    %4058 = vmatprep.subr.bf16.mxu0 %v2192
    %4059 = vmatpush2.bf16.msra.mxu0 %v2191
    %4060 = vmatprep.subr.bf16.mxu0 %v2176
    %4061 = vmatpush2.bf16.msra.mxu0 %v2175
    %4062 = vmatprep.subr.bf16.mxu0 %v2160
    %4063 = vmatpush2.bf16.msra.mxu0 %v2159
    %4064 = vmatprep.mubr.bf16.mxu0 %v1244
    %4065 = vmatmul.mubr.bf16.gmra.mxu0 %v1243
    %v4066 = vpop.f32.mrf.mxu0
    %v4067 = vadd.f32 %v4024, %v4066
    %v4068 = vpop.f32.mrf.mxu0
    %v4069 = vadd.f32 %v4026, %v4068
    %v4070 = vpop.f32.mrf.mxu0
    %v4071 = vadd.f32 %v4028, %v4070
    %v4072 = vpop.f32.mrf.mxu0
    %v4073 = vadd.f32 %v4030, %v4072
    %4074 = vdwg.mxu0
    %4075 = vmatprep.subr.bf16.mxu0 %v2400
    %4076 = vmatpush1.bf16.msra.mxu0 %v2399
    %4077 = vmatprep.subr.bf16.mxu0 %v2384
    %4078 = vmatpush1.bf16.msra.mxu0 %v2383
    %4079 = vmatprep.subr.bf16.mxu0 %v2368
    %4080 = vmatpush1.bf16.msra.mxu0 %v2367
    %4081 = vmatprep.subr.bf16.mxu0 %v2352
    %4082 = vmatpush1.bf16.msra.mxu0 %v2351
    %4083 = vmatprep.subr.bf16.mxu0 %v2336
    %4084 = vmatpush1.bf16.msra.mxu0 %v2335
    %4085 = vmatprep.subr.bf16.mxu0 %v2320
    %4086 = vmatpush1.bf16.msra.mxu0 %v2319
    %4087 = vmatprep.subr.bf16.mxu0 %v2304
    %4088 = vmatpush1.bf16.msra.mxu0 %v2303
    %4089 = vmatprep.subr.bf16.mxu0 %v2288
    %4090 = vmatpush1.bf16.msra.mxu0 %v2287
    %4091 = vmatprep.subr.bf16.mxu0 %v2528
    %4092 = vmatpush2.bf16.msra.mxu0 %v2527
    %4093 = vmatprep.subr.bf16.mxu0 %v2512
    %4094 = vmatpush2.bf16.msra.mxu0 %v2511
    %4095 = vmatprep.subr.bf16.mxu0 %v2496
    %4096 = vmatpush2.bf16.msra.mxu0 %v2495
    %4097 = vmatprep.subr.bf16.mxu0 %v2480
    %4098 = vmatpush2.bf16.msra.mxu0 %v2479
    %4099 = vmatprep.subr.bf16.mxu0 %v2464
    %4100 = vmatpush2.bf16.msra.mxu0 %v2463
    %4101 = vmatprep.subr.bf16.mxu0 %v2448
    %4102 = vmatpush2.bf16.msra.mxu0 %v2447
    %4103 = vmatprep.subr.bf16.mxu0 %v2432
    %4104 = vmatpush2.bf16.msra.mxu0 %v2431
    %4105 = vmatprep.subr.bf16.mxu0 %v2416
    %4106 = vmatpush2.bf16.msra.mxu0 %v2415
    %4107 = vmatprep.mubr.bf16.mxu0 %v1246
    %4108 = vmatmul.mubr.bf16.gmra.mxu0 %v1245
    %v4109 = vpop.f32.mrf.mxu0
    %v4110 = vadd.f32 %v4067, %v4109
    %v4111 = vpop.f32.mrf.mxu0
    %v4112 = vadd.f32 %v4069, %v4111
    %v4113 = vpop.f32.mrf.mxu0
    %v4114 = vadd.f32 %v4071, %v4113
    %v4115 = vpop.f32.mrf.mxu0
    %v4116 = vadd.f32 %v4073, %v4115
    %4117 = vdwg.mxu0
    %4118 = vmatprep.subr.bf16.mxu0 %v2656
    %4119 = vmatpush1.bf16.msra.mxu0 %v2655
    %4120 = vmatprep.subr.bf16.mxu0 %v2640
    %4121 = vmatpush1.bf16.msra.mxu0 %v2639
    %4122 = vmatprep.subr.bf16.mxu0 %v2624
    %4123 = vmatpush1.bf16.msra.mxu0 %v2623
    %4124 = vmatprep.subr.bf16.mxu0 %v2608
    %4125 = vmatpush1.bf16.msra.mxu0 %v2607
    %4126 = vmatprep.subr.bf16.mxu0 %v2592
    %4127 = vmatpush1.bf16.msra.mxu0 %v2591
    %4128 = vmatprep.subr.bf16.mxu0 %v2576
    %4129 = vmatpush1.bf16.msra.mxu0 %v2575
    %4130 = vmatprep.subr.bf16.mxu0 %v2560
    %4131 = vmatpush1.bf16.msra.mxu0 %v2559
    %4132 = vmatprep.subr.bf16.mxu0 %v2544
    %4133 = vmatpush1.bf16.msra.mxu0 %v2543
    %4134 = vmatprep.subr.bf16.mxu0 %v2784
    %4135 = vmatpush2.bf16.msra.mxu0 %v2783
    %4136 = vmatprep.subr.bf16.mxu0 %v2768
    %4137 = vmatpush2.bf16.msra.mxu0 %v2767
    %4138 = vmatprep.subr.bf16.mxu0 %v2752
    %4139 = vmatpush2.bf16.msra.mxu0 %v2751
    %4140 = vmatprep.subr.bf16.mxu0 %v2736
    %4141 = vmatpush2.bf16.msra.mxu0 %v2735
    %4142 = vmatprep.subr.bf16.mxu0 %v2720
    %4143 = vmatpush2.bf16.msra.mxu0 %v2719
    %4144 = vmatprep.subr.bf16.mxu0 %v2704
    %4145 = vmatpush2.bf16.msra.mxu0 %v2703
    %4146 = vmatprep.subr.bf16.mxu0 %v2688
    %4147 = vmatpush2.bf16.msra.mxu0 %v2687
    %4148 = vmatprep.subr.bf16.mxu0 %v2672
    %4149 = vmatpush2.bf16.msra.mxu0 %v2671
    %4150 = vmatprep.mubr.bf16.mxu0 %v1248
    %4151 = vmatmul.mubr.bf16.gmra.mxu0 %v1247
    %v4152 = vpop.f32.mrf.mxu0
    %v4153 = vadd.f32 %v4110, %v4152
    %v4154 = vpop.f32.mrf.mxu0
    %v4155 = vadd.f32 %v4112, %v4154
    %v4156 = vpop.f32.mrf.mxu0
    %v4157 = vadd.f32 %v4114, %v4156
    %v4158 = vpop.f32.mrf.mxu0
    %v4159 = vadd.f32 %v4116, %v4158
    %4160 = vdwg.mxu0
    %v4161 = vld [vmem:[#allocation16] sm:$0xff]
    %v4162 = vld [vmem:[#allocation16 + $0x8] sm:$0xff]
    %v4165 = vlaneseq
    %v4166 = vshrl.u32 %v4165, 7
    %v4167 = vsub.s32 0, %v4166
    %v4168 = vrot.slane %v4161, %v4167
    %v4169 = vlaneseq
    %v4170 = vshrl.u32 %v4169, 7
    %v4171 = vsub.s32 1, %v4170
    %v4172 = vrot.slane %v4161, %v4171
    %v4173 = vlaneseq
    %v4174 = vshrl.u32 %v4173, 7
    %v4175 = vsub.s32 2, %v4174
    %v4176 = vrot.slane %v4161, %v4175
    %v4177 = vlaneseq
    %v4178 = vshrl.u32 %v4177, 7
    %v4179 = vsub.s32 3, %v4178
    %v4180 = vrot.slane %v4161, %v4179
    %v4181 = vlaneseq
    %v4182 = vshrl.u32 %v4181, 7
    %v4183 = vsub.s32 4, %v4182
    %v4184 = vrot.slane %v4161, %v4183
    %v4185 = vlaneseq
    %v4186 = vshrl.u32 %v4185, 7
    %v4187 = vsub.s32 5, %v4186
    %v4188 = vrot.slane %v4161, %v4187
    %v4189 = vlaneseq
    %v4190 = vshrl.u32 %v4189, 7
    %v4191 = vsub.s32 6, %v4190
    %v4192 = vrot.slane %v4161, %v4191
    %v4193 = vlaneseq
    %v4194 = vshrl.u32 %v4193, 7
    %v4195 = vsub.s32 7, %v4194
    %v4196 = vrot.slane %v4161, %v4195
    %v4197 = vlaneseq
    %v4198 = vshrl.u32 %v4197, 7
    %v4199 = vsub.s32 0, %v4198
    %v4200 = vrot.slane %v4162, %v4199
    %v4201 = vlaneseq
    %v4202 = vshrl.u32 %v4201, 7
    %v4203 = vsub.s32 1, %v4202
    %v4204 = vrot.slane %v4162, %v4203
    %v4205 = vlaneseq
    %v4206 = vshrl.u32 %v4205, 7
    %v4207 = vsub.s32 2, %v4206
    %v4208 = vrot.slane %v4162, %v4207
    %v4209 = vlaneseq
    %v4210 = vshrl.u32 %v4209, 7
    %v4211 = vsub.s32 3, %v4210
    %v4212 = vrot.slane %v4162, %v4211
    %v4213 = vlaneseq
    %v4214 = vshrl.u32 %v4213, 7
    %v4215 = vsub.s32 4, %v4214
    %v4216 = vrot.slane %v4162, %v4215
    %v4217 = vlaneseq
    %v4218 = vshrl.u32 %v4217, 7
    %v4219 = vsub.s32 5, %v4218
    %v4220 = vrot.slane %v4162, %v4219
    %v4221 = vlaneseq
    %v4222 = vshrl.u32 %v4221, 7
    %v4223 = vsub.s32 6, %v4222
    %v4224 = vrot.slane %v4162, %v4223
    %v4225 = vlaneseq
    %v4226 = vshrl.u32 %v4225, 7
    %v4227 = vsub.s32 7, %v4226
    %v4228 = vrot.slane %v4162, %v4227
    %v4245 = vmul.f32 %v2949, %v4168
    %v4246 = vmul.f32 %v2951, %v4172
    %v4247 = vmul.f32 %v3121, %v4176
    %v4248 = vmul.f32 %v3123, %v4180
    %v4249 = vmul.f32 %v3293, %v4184
    %v4250 = vmul.f32 %v3295, %v4188
    %v4251 = vmul.f32 %v3465, %v4192
    %v4252 = vmul.f32 %v3467, %v4196
    %v4253 = vmul.f32 %v3637, %v4200
    %v4254 = vmul.f32 %v3639, %v4204
    %v4255 = vmul.f32 %v3809, %v4208
    %v4256 = vmul.f32 %v3811, %v4212
    %v4257 = vmul.f32 %v3981, %v4216
    %v4258 = vmul.f32 %v3983, %v4220
    %v4259 = vmul.f32 %v4153, %v4224
    %v4260 = vmul.f32 %v4155, %v4228
    %v4261 = vmul.f32 %v2953, %v4168
    %v4262 = vmul.f32 %v2955, %v4172
    %v4263 = vmul.f32 %v3125, %v4176
    %v4264 = vmul.f32 %v3127, %v4180
    %v4265 = vmul.f32 %v3297, %v4184
    %v4266 = vmul.f32 %v3299, %v4188
    %v4267 = vmul.f32 %v3469, %v4192
    %v4268 = vmul.f32 %v3471, %v4196
    %v4269 = vmul.f32 %v3641, %v4200
    %v4270 = vmul.f32 %v3643, %v4204
    %v4271 = vmul.f32 %v3813, %v4208
    %v4272 = vmul.f32 %v3815, %v4212
    %v4273 = vmul.f32 %v3985, %v4216
    %v4274 = vmul.f32 %v3987, %v4220
    %v4275 = vmul.f32 %v4157, %v4224
    %v4276 = vmul.f32 %v4159, %v4228
    %v4277 = vld [vmem:[#allocation17] sm:$0xff]
    %v4278 = vld [vmem:[#allocation17 + $0x8] sm:$0xff]
    %v4281 = vlaneseq
    %v4282 = vshrl.u32 %v4281, 7
    %v4283 = vsub.s32 0, %v4282
    %v4284 = vrot.slane %v4277, %v4283
    %v4285 = vlaneseq
    %v4286 = vshrl.u32 %v4285, 7
    %v4287 = vsub.s32 1, %v4286
    %v4288 = vrot.slane %v4277, %v4287
    %v4289 = vlaneseq
    %v4290 = vshrl.u32 %v4289, 7
    %v4291 = vsub.s32 2, %v4290
    %v4292 = vrot.slane %v4277, %v4291
    %v4293 = vlaneseq
    %v4294 = vshrl.u32 %v4293, 7
    %v4295 = vsub.s32 3, %v4294
    %v4296 = vrot.slane %v4277, %v4295
    %v4297 = vlaneseq
    %v4298 = vshrl.u32 %v4297, 7
    %v4299 = vsub.s32 4, %v4298
    %v4300 = vrot.slane %v4277, %v4299
    %v4301 = vlaneseq
    %v4302 = vshrl.u32 %v4301, 7
    %v4303 = vsub.s32 5, %v4302
    %v4304 = vrot.slane %v4277, %v4303
    %v4305 = vlaneseq
    %v4306 = vshrl.u32 %v4305, 7
    %v4307 = vsub.s32 6, %v4306
    %v4308 = vrot.slane %v4277, %v4307
    %v4309 = vlaneseq
    %v4310 = vshrl.u32 %v4309, 7
    %v4311 = vsub.s32 7, %v4310
    %v4312 = vrot.slane %v4277, %v4311
    %v4313 = vlaneseq
    %v4314 = vshrl.u32 %v4313, 7
    %v4315 = vsub.s32 0, %v4314
    %v4316 = vrot.slane %v4278, %v4315
    %v4317 = vlaneseq
    %v4318 = vshrl.u32 %v4317, 7
    %v4319 = vsub.s32 1, %v4318
    %v4320 = vrot.slane %v4278, %v4319
    %v4321 = vlaneseq
    %v4322 = vshrl.u32 %v4321, 7
    %v4323 = vsub.s32 2, %v4322
    %v4324 = vrot.slane %v4278, %v4323
    %v4325 = vlaneseq
    %v4326 = vshrl.u32 %v4325, 7
    %v4327 = vsub.s32 3, %v4326
    %v4328 = vrot.slane %v4278, %v4327
    %v4329 = vlaneseq
    %v4330 = vshrl.u32 %v4329, 7
    %v4331 = vsub.s32 4, %v4330
    %v4332 = vrot.slane %v4278, %v4331
    %v4333 = vlaneseq
    %v4334 = vshrl.u32 %v4333, 7
    %v4335 = vsub.s32 5, %v4334
    %v4336 = vrot.slane %v4278, %v4335
    %v4337 = vlaneseq
    %v4338 = vshrl.u32 %v4337, 7
    %v4339 = vsub.s32 6, %v4338
    %v4340 = vrot.slane %v4278, %v4339
    %v4341 = vlaneseq
    %v4342 = vshrl.u32 %v4341, 7
    %v4343 = vsub.s32 7, %v4342
    %v4344 = vrot.slane %v4278, %v4343
    %v4361 = vadd.f32 %v4245, %v4284
    %v4362 = vadd.f32 %v4246, %v4288
    %v4363 = vadd.f32 %v4247, %v4292
    %v4364 = vadd.f32 %v4248, %v4296
    %v4365 = vadd.f32 %v4249, %v4300
    %v4366 = vadd.f32 %v4250, %v4304
    %v4367 = vadd.f32 %v4251, %v4308
    %v4368 = vadd.f32 %v4252, %v4312
    %v4369 = vadd.f32 %v4253, %v4316
    %v4370 = vadd.f32 %v4254, %v4320
    %v4371 = vadd.f32 %v4255, %v4324
    %v4372 = vadd.f32 %v4256, %v4328
    %v4373 = vadd.f32 %v4257, %v4332
    %v4374 = vadd.f32 %v4258, %v4336
    %v4375 = vadd.f32 %v4259, %v4340
    %v4376 = vadd.f32 %v4260, %v4344
    %v4377 = vadd.f32 %v4261, %v4284
    %v4378 = vadd.f32 %v4262, %v4288
    %v4379 = vadd.f32 %v4263, %v4292
    %v4380 = vadd.f32 %v4264, %v4296
    %v4381 = vadd.f32 %v4265, %v4300
    %v4382 = vadd.f32 %v4266, %v4304
    %v4383 = vadd.f32 %v4267, %v4308
    %v4384 = vadd.f32 %v4268, %v4312
    %v4385 = vadd.f32 %v4269, %v4316
    %v4386 = vadd.f32 %v4270, %v4320
    %v4387 = vadd.f32 %v4271, %v4324
    %v4388 = vadd.f32 %v4272, %v4328
    %v4389 = vadd.f32 %v4273, %v4332
    %v4390 = vadd.f32 %v4274, %v4336
    %v4391 = vadd.f32 %v4275, %v4340
    %v4392 = vadd.f32 %v4276, %v4344
    %v4393 = vmax.f32 %v4361, 0.0
    %v4394 = vmax.f32 %v4362, 0.0
    %v4395 = vmax.f32 %v4363, 0.0
    %v4396 = vmax.f32 %v4364, 0.0
    %v4397 = vmax.f32 %v4365, 0.0
    %v4398 = vmax.f32 %v4366, 0.0
    %v4399 = vmax.f32 %v4367, 0.0
    %v4400 = vmax.f32 %v4368, 0.0
    %v4401 = vmax.f32 %v4369, 0.0
    %v4402 = vmax.f32 %v4370, 0.0
    %v4403 = vmax.f32 %v4371, 0.0
    %v4404 = vmax.f32 %v4372, 0.0
    %v4405 = vmax.f32 %v4373, 0.0
    %v4406 = vmax.f32 %v4374, 0.0
    %v4407 = vmax.f32 %v4375, 0.0
    %v4408 = vmax.f32 %v4376, 0.0
    %v4409 = vmax.f32 %v4377, 0.0
    %v4410 = vmax.f32 %v4378, 0.0
    %v4411 = vmax.f32 %v4379, 0.0
    %v4412 = vmax.f32 %v4380, 0.0
    %v4413 = vmax.f32 %v4381, 0.0
    %v4414 = vmax.f32 %v4382, 0.0
    %v4415 = vmax.f32 %v4383, 0.0
    %v4416 = vmax.f32 %v4384, 0.0
    %v4417 = vmax.f32 %v4385, 0.0
    %v4418 = vmax.f32 %v4386, 0.0
    %v4419 = vmax.f32 %v4387, 0.0
    %v4420 = vmax.f32 %v4388, 0.0
    %v4421 = vmax.f32 %v4389, 0.0
    %v4422 = vmax.f32 %v4390, 0.0
    %v4423 = vmax.f32 %v4391, 0.0
    %v4424 = vmax.f32 %v4392, 0.0
    %v4425 = vpack.c.bf16 %v4409, %v4393
    %v4426 = vpack.c.bf16 %v4410, %v4394
    %v4427 = vpack.c.bf16 %v4411, %v4395
    %v4428 = vpack.c.bf16 %v4412, %v4396
    %v4429 = vpack.c.bf16 %v4413, %v4397
    %v4430 = vpack.c.bf16 %v4414, %v4398
    %v4431 = vpack.c.bf16 %v4415, %v4399
    %v4432 = vpack.c.bf16 %v4416, %v4400
    %v4433 = vpack.c.bf16 %v4417, %v4401
    %v4434 = vpack.c.bf16 %v4418, %v4402
    %v4435 = vpack.c.bf16 %v4419, %v4403
    %v4436 = vpack.c.bf16 %v4420, %v4404
    %v4437 = vpack.c.bf16 %v4421, %v4405
    %v4438 = vpack.c.bf16 %v4422, %v4406
    %v4439 = vpack.c.bf16 %v4423, %v4407
    %v4440 = vpack.c.bf16 %v4424, %v4408
    %v4441 = vld [vmem:[#allocation19] sm:$0xff]
    %v4442 = vld [vmem:[#allocation19 + $0x8] sm:$0xff]
    %v4443 = vld [vmem:[#allocation19 + $0x10] sm:$0xff]
    %v4444 = vld [vmem:[#allocation19 + $0x18] sm:$0xff]
    %v4445 = vld [vmem:[#allocation19 + $0x20] sm:$0xff]
    %v4446 = vld [vmem:[#allocation19 + $0x28] sm:$0xff]
    %v4447 = vld [vmem:[#allocation19 + $0x30] sm:$0xff]
    %v4448 = vld [vmem:[#allocation19 + $0x38] sm:$0xff]
    %v4449 = vld [vmem:[#allocation19 + $0x40] sm:$0xff]
    %v4450 = vld [vmem:[#allocation19 + $0x48] sm:$0xff]
    %v4451 = vld [vmem:[#allocation19 + $0x50] sm:$0xff]
    %v4452 = vld [vmem:[#allocation19 + $0x58] sm:$0xff]
    %v4453 = vld [vmem:[#allocation19 + $0x60] sm:$0xff]
    %v4454 = vld [vmem:[#allocation19 + $0x68] sm:$0xff]
    %v4455 = vld [vmem:[#allocation19 + $0x70] sm:$0xff]
    %v4456 = vld [vmem:[#allocation19 + $0x78] sm:$0xff]
    %v4457 = vld [vmem:[#allocation19 + $0x80] sm:$0xff]
    %v4458 = vld [vmem:[#allocation19 + $0x88] sm:$0xff]
    %v4459 = vld [vmem:[#allocation19 + $0x90] sm:$0xff]
    %v4460 = vld [vmem:[#allocation19 + $0x98] sm:$0xff]
    %v4461 = vld [vmem:[#allocation19 + $0xa0] sm:$0xff]
    %v4462 = vld [vmem:[#allocation19 + $0xa8] sm:$0xff]
    %v4463 = vld [vmem:[#allocation19 + $0xb0] sm:$0xff]
    %v4464 = vld [vmem:[#allocation19 + $0xb8] sm:$0xff]
    %v4465 = vld [vmem:[#allocation19 + $0xc0] sm:$0xff]
    %v4466 = vld [vmem:[#allocation19 + $0xc8] sm:$0xff]
    %v4467 = vld [vmem:[#allocation19 + $0xd0] sm:$0xff]
    %v4468 = vld [vmem:[#allocation19 + $0xd8] sm:$0xff]
    %v4469 = vld [vmem:[#allocation19 + $0xe0] sm:$0xff]
    %v4470 = vld [vmem:[#allocation19 + $0xe8] sm:$0xff]
    %v4471 = vld [vmem:[#allocation19 + $0xf0] sm:$0xff]
    %v4472 = vld [vmem:[#allocation19 + $0xf8] sm:$0xff]
    %v4473 = vld [vmem:[#allocation19 + $0x100] sm:$0xff]
    %v4474 = vld [vmem:[#allocation19 + $0x108] sm:$0xff]
    %v4475 = vld [vmem:[#allocation19 + $0x110] sm:$0xff]
    %v4476 = vld [vmem:[#allocation19 + $0x118] sm:$0xff]
    %v4477 = vld [vmem:[#allocation19 + $0x120] sm:$0xff]
    %v4478 = vld [vmem:[#allocation19 + $0x128] sm:$0xff]
    %v4479 = vld [vmem:[#allocation19 + $0x130] sm:$0xff]
    %v4480 = vld [vmem:[#allocation19 + $0x138] sm:$0xff]
    %v4481 = vld [vmem:[#allocation19 + $0x140] sm:$0xff]
    %v4482 = vld [vmem:[#allocation19 + $0x148] sm:$0xff]
    %v4483 = vld [vmem:[#allocation19 + $0x150] sm:$0xff]
    %v4484 = vld [vmem:[#allocation19 + $0x158] sm:$0xff]
    %v4485 = vld [vmem:[#allocation19 + $0x160] sm:$0xff]
    %v4486 = vld [vmem:[#allocation19 + $0x168] sm:$0xff]
    %v4487 = vld [vmem:[#allocation19 + $0x170] sm:$0xff]
    %v4488 = vld [vmem:[#allocation19 + $0x178] sm:$0xff]
    %v4489 = vld [vmem:[#allocation19 + $0x180] sm:$0xff]
    %v4490 = vld [vmem:[#allocation19 + $0x188] sm:$0xff]
    %v4491 = vld [vmem:[#allocation19 + $0x190] sm:$0xff]
    %v4492 = vld [vmem:[#allocation19 + $0x198] sm:$0xff]
    %v4493 = vld [vmem:[#allocation19 + $0x1a0] sm:$0xff]
    %v4494 = vld [vmem:[#allocation19 + $0x1a8] sm:$0xff]
    %v4495 = vld [vmem:[#allocation19 + $0x1b0] sm:$0xff]
    %v4496 = vld [vmem:[#allocation19 + $0x1b8] sm:$0xff]
    %v4497 = vld [vmem:[#allocation19 + $0x1c0] sm:$0xff]
    %v4498 = vld [vmem:[#allocation19 + $0x1c8] sm:$0xff]
    %v4499 = vld [vmem:[#allocation19 + $0x1d0] sm:$0xff]
    %v4500 = vld [vmem:[#allocation19 + $0x1d8] sm:$0xff]
    %v4501 = vld [vmem:[#allocation19 + $0x1e0] sm:$0xff]
    %v4502 = vld [vmem:[#allocation19 + $0x1e8] sm:$0xff]
    %v4503 = vld [vmem:[#allocation19 + $0x1f0] sm:$0xff]
    %v4504 = vld [vmem:[#allocation19 + $0x1f8] sm:$0xff]
    %v4505 = vld [vmem:[#allocation19 + $0x200] sm:$0xff]
    %v4506 = vld [vmem:[#allocation19 + $0x208] sm:$0xff]
    %v4507 = vld [vmem:[#allocation19 + $0x210] sm:$0xff]
    %v4508 = vld [vmem:[#allocation19 + $0x218] sm:$0xff]
    %v4509 = vld [vmem:[#allocation19 + $0x220] sm:$0xff]
    %v4510 = vld [vmem:[#allocation19 + $0x228] sm:$0xff]
    %v4511 = vld [vmem:[#allocation19 + $0x230] sm:$0xff]
    %v4512 = vld [vmem:[#allocation19 + $0x238] sm:$0xff]
    %v4513 = vld [vmem:[#allocation19 + $0x240] sm:$0xff]
    %v4514 = vld [vmem:[#allocation19 + $0x248] sm:$0xff]
    %v4515 = vld [vmem:[#allocation19 + $0x250] sm:$0xff]
    %v4516 = vld [vmem:[#allocation19 + $0x258] sm:$0xff]
    %v4517 = vld [vmem:[#allocation19 + $0x260] sm:$0xff]
    %v4518 = vld [vmem:[#allocation19 + $0x268] sm:$0xff]
    %v4519 = vld [vmem:[#allocation19 + $0x270] sm:$0xff]
    %v4520 = vld [vmem:[#allocation19 + $0x278] sm:$0xff]
    %v4521 = vld [vmem:[#allocation19 + $0x280] sm:$0xff]
    %v4522 = vld [vmem:[#allocation19 + $0x288] sm:$0xff]
    %v4523 = vld [vmem:[#allocation19 + $0x290] sm:$0xff]
    %v4524 = vld [vmem:[#allocation19 + $0x298] sm:$0xff]
    %v4525 = vld [vmem:[#allocation19 + $0x2a0] sm:$0xff]
    %v4526 = vld [vmem:[#allocation19 + $0x2a8] sm:$0xff]
    %v4527 = vld [vmem:[#allocation19 + $0x2b0] sm:$0xff]
    %v4528 = vld [vmem:[#allocation19 + $0x2b8] sm:$0xff]
    %v4529 = vld [vmem:[#allocation19 + $0x2c0] sm:$0xff]
    %v4530 = vld [vmem:[#allocation19 + $0x2c8] sm:$0xff]
    %v4531 = vld [vmem:[#allocation19 + $0x2d0] sm:$0xff]
    %v4532 = vld [vmem:[#allocation19 + $0x2d8] sm:$0xff]
    %v4533 = vld [vmem:[#allocation19 + $0x2e0] sm:$0xff]
    %v4534 = vld [vmem:[#allocation19 + $0x2e8] sm:$0xff]
    %v4535 = vld [vmem:[#allocation19 + $0x2f0] sm:$0xff]
    %v4536 = vld [vmem:[#allocation19 + $0x2f8] sm:$0xff]
    %v4537 = vld [vmem:[#allocation19 + $0x300] sm:$0xff]
    %v4538 = vld [vmem:[#allocation19 + $0x308] sm:$0xff]
    %v4539 = vld [vmem:[#allocation19 + $0x310] sm:$0xff]
    %v4540 = vld [vmem:[#allocation19 + $0x318] sm:$0xff]
    %v4541 = vld [vmem:[#allocation19 + $0x320] sm:$0xff]
    %v4542 = vld [vmem:[#allocation19 + $0x328] sm:$0xff]
    %v4543 = vld [vmem:[#allocation19 + $0x330] sm:$0xff]
    %v4544 = vld [vmem:[#allocation19 + $0x338] sm:$0xff]
    %v4545 = vld [vmem:[#allocation19 + $0x340] sm:$0xff]
    %v4546 = vld [vmem:[#allocation19 + $0x348] sm:$0xff]
    %v4547 = vld [vmem:[#allocation19 + $0x350] sm:$0xff]
    %v4548 = vld [vmem:[#allocation19 + $0x358] sm:$0xff]
    %v4549 = vld [vmem:[#allocation19 + $0x360] sm:$0xff]
    %v4550 = vld [vmem:[#allocation19 + $0x368] sm:$0xff]
    %v4551 = vld [vmem:[#allocation19 + $0x370] sm:$0xff]
    %v4552 = vld [vmem:[#allocation19 + $0x378] sm:$0xff]
    %v4553 = vld [vmem:[#allocation19 + $0x380] sm:$0xff]
    %v4554 = vld [vmem:[#allocation19 + $0x388] sm:$0xff]
    %v4555 = vld [vmem:[#allocation19 + $0x390] sm:$0xff]
    %v4556 = vld [vmem:[#allocation19 + $0x398] sm:$0xff]
    %v4557 = vld [vmem:[#allocation19 + $0x3a0] sm:$0xff]
    %v4558 = vld [vmem:[#allocation19 + $0x3a8] sm:$0xff]
    %v4559 = vld [vmem:[#allocation19 + $0x3b0] sm:$0xff]
    %v4560 = vld [vmem:[#allocation19 + $0x3b8] sm:$0xff]
    %v4561 = vld [vmem:[#allocation19 + $0x3c0] sm:$0xff]
    %v4562 = vld [vmem:[#allocation19 + $0x3c8] sm:$0xff]
    %v4563 = vld [vmem:[#allocation19 + $0x3d0] sm:$0xff]
    %v4564 = vld [vmem:[#allocation19 + $0x3d8] sm:$0xff]
    %v4565 = vld [vmem:[#allocation19 + $0x3e0] sm:$0xff]
    %v4566 = vld [vmem:[#allocation19 + $0x3e8] sm:$0xff]
    %v4567 = vld [vmem:[#allocation19 + $0x3f0] sm:$0xff]
    %v4568 = vld [vmem:[#allocation19 + $0x3f8] sm:$0xff]
    %v4569 = vunpack.c.l.s8.bf16 %v4441
    %v4570 = vunpack.c.l.s8.bf16 %v4442
    %v4571 = vunpack.c.h.s8.bf16 %v4441
    %v4572 = vunpack.c.h.s8.bf16 %v4442
    %v4573 = vunpack.c.l.s8.bf16 %v4443
    %v4574 = vunpack.c.l.s8.bf16 %v4444
    %v4575 = vunpack.c.h.s8.bf16 %v4443
    %v4576 = vunpack.c.h.s8.bf16 %v4444
    %v4577 = vunpack.c.l.s8.bf16 %v4445
    %v4578 = vunpack.c.l.s8.bf16 %v4446
    %v4579 = vunpack.c.h.s8.bf16 %v4445
    %v4580 = vunpack.c.h.s8.bf16 %v4446
    %v4581 = vunpack.c.l.s8.bf16 %v4447
    %v4582 = vunpack.c.l.s8.bf16 %v4448
    %v4583 = vunpack.c.h.s8.bf16 %v4447
    %v4584 = vunpack.c.h.s8.bf16 %v4448
    %v4585 = vunpack.c.l.s8.bf16 %v4449
    %v4586 = vunpack.c.l.s8.bf16 %v4450
    %v4587 = vunpack.c.h.s8.bf16 %v4449
    %v4588 = vunpack.c.h.s8.bf16 %v4450
    %v4589 = vunpack.c.l.s8.bf16 %v4451
    %v4590 = vunpack.c.l.s8.bf16 %v4452
    %v4591 = vunpack.c.h.s8.bf16 %v4451
    %v4592 = vunpack.c.h.s8.bf16 %v4452
    %v4593 = vunpack.c.l.s8.bf16 %v4453
    %v4594 = vunpack.c.l.s8.bf16 %v4454
    %v4595 = vunpack.c.h.s8.bf16 %v4453
    %v4596 = vunpack.c.h.s8.bf16 %v4454
    %v4597 = vunpack.c.l.s8.bf16 %v4455
    %v4598 = vunpack.c.l.s8.bf16 %v4456
    %v4599 = vunpack.c.h.s8.bf16 %v4455
    %v4600 = vunpack.c.h.s8.bf16 %v4456
    %v4601 = vunpack.c.l.s8.bf16 %v4457
    %v4602 = vunpack.c.l.s8.bf16 %v4458
    %v4603 = vunpack.c.h.s8.bf16 %v4457
    %v4604 = vunpack.c.h.s8.bf16 %v4458
    %v4605 = vunpack.c.l.s8.bf16 %v4459
    %v4606 = vunpack.c.l.s8.bf16 %v4460
    %v4607 = vunpack.c.h.s8.bf16 %v4459
    %v4608 = vunpack.c.h.s8.bf16 %v4460
    %v4609 = vunpack.c.l.s8.bf16 %v4461
    %v4610 = vunpack.c.l.s8.bf16 %v4462
    %v4611 = vunpack.c.h.s8.bf16 %v4461
    %v4612 = vunpack.c.h.s8.bf16 %v4462
    %v4613 = vunpack.c.l.s8.bf16 %v4463
    %v4614 = vunpack.c.l.s8.bf16 %v4464
    %v4615 = vunpack.c.h.s8.bf16 %v4463
    %v4616 = vunpack.c.h.s8.bf16 %v4464
    %v4617 = vunpack.c.l.s8.bf16 %v4465
    %v4618 = vunpack.c.l.s8.bf16 %v4466
    %v4619 = vunpack.c.h.s8.bf16 %v4465
    %v4620 = vunpack.c.h.s8.bf16 %v4466
    %v4621 = vunpack.c.l.s8.bf16 %v4467
    %v4622 = vunpack.c.l.s8.bf16 %v4468
    %v4623 = vunpack.c.h.s8.bf16 %v4467
    %v4624 = vunpack.c.h.s8.bf16 %v4468
    %v4625 = vunpack.c.l.s8.bf16 %v4469
    %v4626 = vunpack.c.l.s8.bf16 %v4470
    %v4627 = vunpack.c.h.s8.bf16 %v4469
    %v4628 = vunpack.c.h.s8.bf16 %v4470
    %v4629 = vunpack.c.l.s8.bf16 %v4471
    %v4630 = vunpack.c.l.s8.bf16 %v4472
    %v4631 = vunpack.c.h.s8.bf16 %v4471
    %v4632 = vunpack.c.h.s8.bf16 %v4472
    %v4633 = vunpack.c.l.s8.bf16 %v4473
    %v4634 = vunpack.c.l.s8.bf16 %v4474
    %v4635 = vunpack.c.h.s8.bf16 %v4473
    %v4636 = vunpack.c.h.s8.bf16 %v4474
    %v4637 = vunpack.c.l.s8.bf16 %v4475
    %v4638 = vunpack.c.l.s8.bf16 %v4476
    %v4639 = vunpack.c.h.s8.bf16 %v4475
    %v4640 = vunpack.c.h.s8.bf16 %v4476
    %v4641 = vunpack.c.l.s8.bf16 %v4477
    %v4642 = vunpack.c.l.s8.bf16 %v4478
    %v4643 = vunpack.c.h.s8.bf16 %v4477
    %v4644 = vunpack.c.h.s8.bf16 %v4478
    %v4645 = vunpack.c.l.s8.bf16 %v4479
    %v4646 = vunpack.c.l.s8.bf16 %v4480
    %v4647 = vunpack.c.h.s8.bf16 %v4479
    %v4648 = vunpack.c.h.s8.bf16 %v4480
    %v4649 = vunpack.c.l.s8.bf16 %v4481
    %v4650 = vunpack.c.l.s8.bf16 %v4482
    %v4651 = vunpack.c.h.s8.bf16 %v4481
    %v4652 = vunpack.c.h.s8.bf16 %v4482
    %v4653 = vunpack.c.l.s8.bf16 %v4483
    %v4654 = vunpack.c.l.s8.bf16 %v4484
    %v4655 = vunpack.c.h.s8.bf16 %v4483
    %v4656 = vunpack.c.h.s8.bf16 %v4484
    %v4657 = vunpack.c.l.s8.bf16 %v4485
    %v4658 = vunpack.c.l.s8.bf16 %v4486
    %v4659 = vunpack.c.h.s8.bf16 %v4485
    %v4660 = vunpack.c.h.s8.bf16 %v4486
    %v4661 = vunpack.c.l.s8.bf16 %v4487
    %v4662 = vunpack.c.l.s8.bf16 %v4488
    %v4663 = vunpack.c.h.s8.bf16 %v4487
    %v4664 = vunpack.c.h.s8.bf16 %v4488
    %v4665 = vunpack.c.l.s8.bf16 %v4489
    %v4666 = vunpack.c.l.s8.bf16 %v4490
    %v4667 = vunpack.c.h.s8.bf16 %v4489
    %v4668 = vunpack.c.h.s8.bf16 %v4490
    %v4669 = vunpack.c.l.s8.bf16 %v4491
    %v4670 = vunpack.c.l.s8.bf16 %v4492
    %v4671 = vunpack.c.h.s8.bf16 %v4491
    %v4672 = vunpack.c.h.s8.bf16 %v4492
    %v4673 = vunpack.c.l.s8.bf16 %v4493
    %v4674 = vunpack.c.l.s8.bf16 %v4494
    %v4675 = vunpack.c.h.s8.bf16 %v4493
    %v4676 = vunpack.c.h.s8.bf16 %v4494
    %v4677 = vunpack.c.l.s8.bf16 %v4495
    %v4678 = vunpack.c.l.s8.bf16 %v4496
    %v4679 = vunpack.c.h.s8.bf16 %v4495
    %v4680 = vunpack.c.h.s8.bf16 %v4496
    %v4681 = vunpack.c.l.s8.bf16 %v4497
    %v4682 = vunpack.c.l.s8.bf16 %v4498
    %v4683 = vunpack.c.h.s8.bf16 %v4497
    %v4684 = vunpack.c.h.s8.bf16 %v4498
    %v4685 = vunpack.c.l.s8.bf16 %v4499
    %v4686 = vunpack.c.l.s8.bf16 %v4500
    %v4687 = vunpack.c.h.s8.bf16 %v4499
    %v4688 = vunpack.c.h.s8.bf16 %v4500
    %v4689 = vunpack.c.l.s8.bf16 %v4501
    %v4690 = vunpack.c.l.s8.bf16 %v4502
    %v4691 = vunpack.c.h.s8.bf16 %v4501
    %v4692 = vunpack.c.h.s8.bf16 %v4502
    %v4693 = vunpack.c.l.s8.bf16 %v4503
    %v4694 = vunpack.c.l.s8.bf16 %v4504
    %v4695 = vunpack.c.h.s8.bf16 %v4503
    %v4696 = vunpack.c.h.s8.bf16 %v4504
    %v4697 = vunpack.c.l.s8.bf16 %v4505
    %v4698 = vunpack.c.l.s8.bf16 %v4506
    %v4699 = vunpack.c.h.s8.bf16 %v4505
    %v4700 = vunpack.c.h.s8.bf16 %v4506
    %v4701 = vunpack.c.l.s8.bf16 %v4507
    %v4702 = vunpack.c.l.s8.bf16 %v4508
    %v4703 = vunpack.c.h.s8.bf16 %v4507
    %v4704 = vunpack.c.h.s8.bf16 %v4508
    %v4705 = vunpack.c.l.s8.bf16 %v4509
    %v4706 = vunpack.c.l.s8.bf16 %v4510
    %v4707 = vunpack.c.h.s8.bf16 %v4509
    %v4708 = vunpack.c.h.s8.bf16 %v4510
    %v4709 = vunpack.c.l.s8.bf16 %v4511
    %v4710 = vunpack.c.l.s8.bf16 %v4512
    %v4711 = vunpack.c.h.s8.bf16 %v4511
    %v4712 = vunpack.c.h.s8.bf16 %v4512
    %v4713 = vunpack.c.l.s8.bf16 %v4513
    %v4714 = vunpack.c.l.s8.bf16 %v4514
    %v4715 = vunpack.c.h.s8.bf16 %v4513
    %v4716 = vunpack.c.h.s8.bf16 %v4514
    %v4717 = vunpack.c.l.s8.bf16 %v4515
    %v4718 = vunpack.c.l.s8.bf16 %v4516
    %v4719 = vunpack.c.h.s8.bf16 %v4515
    %v4720 = vunpack.c.h.s8.bf16 %v4516
    %v4721 = vunpack.c.l.s8.bf16 %v4517
    %v4722 = vunpack.c.l.s8.bf16 %v4518
    %v4723 = vunpack.c.h.s8.bf16 %v4517
    %v4724 = vunpack.c.h.s8.bf16 %v4518
    %v4725 = vunpack.c.l.s8.bf16 %v4519
    %v4726 = vunpack.c.l.s8.bf16 %v4520
    %v4727 = vunpack.c.h.s8.bf16 %v4519
    %v4728 = vunpack.c.h.s8.bf16 %v4520
    %v4729 = vunpack.c.l.s8.bf16 %v4521
    %v4730 = vunpack.c.l.s8.bf16 %v4522
    %v4731 = vunpack.c.h.s8.bf16 %v4521
    %v4732 = vunpack.c.h.s8.bf16 %v4522
    %v4733 = vunpack.c.l.s8.bf16 %v4523
    %v4734 = vunpack.c.l.s8.bf16 %v4524
    %v4735 = vunpack.c.h.s8.bf16 %v4523
    %v4736 = vunpack.c.h.s8.bf16 %v4524
    %v4737 = vunpack.c.l.s8.bf16 %v4525
    %v4738 = vunpack.c.l.s8.bf16 %v4526
    %v4739 = vunpack.c.h.s8.bf16 %v4525
    %v4740 = vunpack.c.h.s8.bf16 %v4526
    %v4741 = vunpack.c.l.s8.bf16 %v4527
    %v4742 = vunpack.c.l.s8.bf16 %v4528
    %v4743 = vunpack.c.h.s8.bf16 %v4527
    %v4744 = vunpack.c.h.s8.bf16 %v4528
    %v4745 = vunpack.c.l.s8.bf16 %v4529
    %v4746 = vunpack.c.l.s8.bf16 %v4530
    %v4747 = vunpack.c.h.s8.bf16 %v4529
    %v4748 = vunpack.c.h.s8.bf16 %v4530
    %v4749 = vunpack.c.l.s8.bf16 %v4531
    %v4750 = vunpack.c.l.s8.bf16 %v4532
    %v4751 = vunpack.c.h.s8.bf16 %v4531
    %v4752 = vunpack.c.h.s8.bf16 %v4532
    %v4753 = vunpack.c.l.s8.bf16 %v4533
    %v4754 = vunpack.c.l.s8.bf16 %v4534
    %v4755 = vunpack.c.h.s8.bf16 %v4533
    %v4756 = vunpack.c.h.s8.bf16 %v4534
    %v4757 = vunpack.c.l.s8.bf16 %v4535
    %v4758 = vunpack.c.l.s8.bf16 %v4536
    %v4759 = vunpack.c.h.s8.bf16 %v4535
    %v4760 = vunpack.c.h.s8.bf16 %v4536
    %v4761 = vunpack.c.l.s8.bf16 %v4537
    %v4762 = vunpack.c.l.s8.bf16 %v4538
    %v4763 = vunpack.c.h.s8.bf16 %v4537
    %v4764 = vunpack.c.h.s8.bf16 %v4538
    %v4765 = vunpack.c.l.s8.bf16 %v4539
    %v4766 = vunpack.c.l.s8.bf16 %v4540
    %v4767 = vunpack.c.h.s8.bf16 %v4539
    %v4768 = vunpack.c.h.s8.bf16 %v4540
    %v4769 = vunpack.c.l.s8.bf16 %v4541
    %v4770 = vunpack.c.l.s8.bf16 %v4542
    %v4771 = vunpack.c.h.s8.bf16 %v4541
    %v4772 = vunpack.c.h.s8.bf16 %v4542
    %v4773 = vunpack.c.l.s8.bf16 %v4543
    %v4774 = vunpack.c.l.s8.bf16 %v4544
    %v4775 = vunpack.c.h.s8.bf16 %v4543
    %v4776 = vunpack.c.h.s8.bf16 %v4544
    %v4777 = vunpack.c.l.s8.bf16 %v4545
    %v4778 = vunpack.c.l.s8.bf16 %v4546
    %v4779 = vunpack.c.h.s8.bf16 %v4545
    %v4780 = vunpack.c.h.s8.bf16 %v4546
    %v4781 = vunpack.c.l.s8.bf16 %v4547
    %v4782 = vunpack.c.l.s8.bf16 %v4548
    %v4783 = vunpack.c.h.s8.bf16 %v4547
    %v4784 = vunpack.c.h.s8.bf16 %v4548
    %v4785 = vunpack.c.l.s8.bf16 %v4549
    %v4786 = vunpack.c.l.s8.bf16 %v4550
    %v4787 = vunpack.c.h.s8.bf16 %v4549
    %v4788 = vunpack.c.h.s8.bf16 %v4550
    %v4789 = vunpack.c.l.s8.bf16 %v4551
    %v4790 = vunpack.c.l.s8.bf16 %v4552
    %v4791 = vunpack.c.h.s8.bf16 %v4551
    %v4792 = vunpack.c.h.s8.bf16 %v4552
    %v4793 = vunpack.c.l.s8.bf16 %v4553
    %v4794 = vunpack.c.l.s8.bf16 %v4554
    %v4795 = vunpack.c.h.s8.bf16 %v4553
    %v4796 = vunpack.c.h.s8.bf16 %v4554
    %v4797 = vunpack.c.l.s8.bf16 %v4555
    %v4798 = vunpack.c.l.s8.bf16 %v4556
    %v4799 = vunpack.c.h.s8.bf16 %v4555
    %v4800 = vunpack.c.h.s8.bf16 %v4556
    %v4801 = vunpack.c.l.s8.bf16 %v4557
    %v4802 = vunpack.c.l.s8.bf16 %v4558
    %v4803 = vunpack.c.h.s8.bf16 %v4557
    %v4804 = vunpack.c.h.s8.bf16 %v4558
    %v4805 = vunpack.c.l.s8.bf16 %v4559
    %v4806 = vunpack.c.l.s8.bf16 %v4560
    %v4807 = vunpack.c.h.s8.bf16 %v4559
    %v4808 = vunpack.c.h.s8.bf16 %v4560
    %v4809 = vunpack.c.l.s8.bf16 %v4561
    %v4810 = vunpack.c.l.s8.bf16 %v4562
    %v4811 = vunpack.c.h.s8.bf16 %v4561
    %v4812 = vunpack.c.h.s8.bf16 %v4562
    %v4813 = vunpack.c.l.s8.bf16 %v4563
    %v4814 = vunpack.c.l.s8.bf16 %v4564
    %v4815 = vunpack.c.h.s8.bf16 %v4563
    %v4816 = vunpack.c.h.s8.bf16 %v4564
    %v4817 = vunpack.c.l.s8.bf16 %v4565
    %v4818 = vunpack.c.l.s8.bf16 %v4566
    %v4819 = vunpack.c.h.s8.bf16 %v4565
    %v4820 = vunpack.c.h.s8.bf16 %v4566
    %v4821 = vunpack.c.l.s8.bf16 %v4567
    %v4822 = vunpack.c.l.s8.bf16 %v4568
    %v4823 = vunpack.c.h.s8.bf16 %v4567
    %v4824 = vunpack.c.h.s8.bf16 %v4568
    %4825 = vmatprep.subr.bf16.mxu0 %v4584
    %4826 = vmatpush1.bf16.msra.mxu0 %v4583
    %4827 = vmatprep.subr.bf16.mxu0 %v4582
    %4828 = vmatpush1.bf16.msra.mxu0 %v4581
    %4829 = vmatprep.subr.bf16.mxu0 %v4580
    %4830 = vmatpush1.bf16.msra.mxu0 %v4579
    %4831 = vmatprep.subr.bf16.mxu0 %v4578
    %4832 = vmatpush1.bf16.msra.mxu0 %v4577
    %4833 = vmatprep.subr.bf16.mxu0 %v4576
    %4834 = vmatpush1.bf16.msra.mxu0 %v4575
    %4835 = vmatprep.subr.bf16.mxu0 %v4574
    %4836 = vmatpush1.bf16.msra.mxu0 %v4573
    %4837 = vmatprep.subr.bf16.mxu0 %v4572
    %4838 = vmatpush1.bf16.msra.mxu0 %v4571
    %4839 = vmatprep.subr.bf16.mxu0 %v4570
    %4840 = vmatpush1.bf16.msra.mxu0 %v4569
    %4841 = vmatprep.subr.bf16.mxu0 %v4600
    %4842 = vmatpush2.bf16.msra.mxu0 %v4599
    %4843 = vmatprep.subr.bf16.mxu0 %v4598
    %4844 = vmatpush2.bf16.msra.mxu0 %v4597
    %4845 = vmatprep.subr.bf16.mxu0 %v4596
    %4846 = vmatpush2.bf16.msra.mxu0 %v4595
    %4847 = vmatprep.subr.bf16.mxu0 %v4594
    %4848 = vmatpush2.bf16.msra.mxu0 %v4593
    %4849 = vmatprep.subr.bf16.mxu0 %v4592
    %4850 = vmatpush2.bf16.msra.mxu0 %v4591
    %4851 = vmatprep.subr.bf16.mxu0 %v4590
    %4852 = vmatpush2.bf16.msra.mxu0 %v4589
    %4853 = vmatprep.subr.bf16.mxu0 %v4588
    %4854 = vmatpush2.bf16.msra.mxu0 %v4587
    %4855 = vmatprep.subr.bf16.mxu0 %v4586
    %4856 = vmatpush2.bf16.msra.mxu0 %v4585
    %4857 = vmatprep.mubr.bf16.mxu0 %v4426
    %4858 = vmatmul.mubr.bf16.gmra.mxu0 %v4425
    %v4859 = vpop.f32.mrf.mxu0
    %v4860 = vadd.f32 0.0, %v4859
    %v4861 = vpop.f32.mrf.mxu0
    %v4862 = vadd.f32 0.0, %v4861
    %v4863 = vpop.f32.mrf.mxu0
    %v4864 = vadd.f32 0.0, %v4863
    %v4865 = vpop.f32.mrf.mxu0
    %v4866 = vadd.f32 0.0, %v4865
    %4867 = vdwg.mxu0
    %4868 = vmatprep.subr.bf16.mxu0 %v4616
    %4869 = vmatpush1.bf16.msra.mxu0 %v4615
    %4870 = vmatprep.subr.bf16.mxu0 %v4614
    %4871 = vmatpush1.bf16.msra.mxu0 %v4613
    %4872 = vmatprep.subr.bf16.mxu0 %v4612
    %4873 = vmatpush1.bf16.msra.mxu0 %v4611
    %4874 = vmatprep.subr.bf16.mxu0 %v4610
    %4875 = vmatpush1.bf16.msra.mxu0 %v4609
    %4876 = vmatprep.subr.bf16.mxu0 %v4608
    %4877 = vmatpush1.bf16.msra.mxu0 %v4607
    %4878 = vmatprep.subr.bf16.mxu0 %v4606
    %4879 = vmatpush1.bf16.msra.mxu0 %v4605
    %4880 = vmatprep.subr.bf16.mxu0 %v4604
    %4881 = vmatpush1.bf16.msra.mxu0 %v4603
    %4882 = vmatprep.subr.bf16.mxu0 %v4602
    %4883 = vmatpush1.bf16.msra.mxu0 %v4601
    %4884 = vmatprep.subr.bf16.mxu0 %v4632
    %4885 = vmatpush2.bf16.msra.mxu0 %v4631
    %4886 = vmatprep.subr.bf16.mxu0 %v4630
    %4887 = vmatpush2.bf16.msra.mxu0 %v4629
    %4888 = vmatprep.subr.bf16.mxu0 %v4628
    %4889 = vmatpush2.bf16.msra.mxu0 %v4627
    %4890 = vmatprep.subr.bf16.mxu0 %v4626
    %4891 = vmatpush2.bf16.msra.mxu0 %v4625
    %4892 = vmatprep.subr.bf16.mxu0 %v4624
    %4893 = vmatpush2.bf16.msra.mxu0 %v4623
    %4894 = vmatprep.subr.bf16.mxu0 %v4622
    %4895 = vmatpush2.bf16.msra.mxu0 %v4621
    %4896 = vmatprep.subr.bf16.mxu0 %v4620
    %4897 = vmatpush2.bf16.msra.mxu0 %v4619
    %4898 = vmatprep.subr.bf16.mxu0 %v4618
    %4899 = vmatpush2.bf16.msra.mxu0 %v4617
    %4900 = vmatprep.mubr.bf16.mxu0 %v4428
    %4901 = vmatmul.mubr.bf16.gmra.mxu0 %v4427
    %v4902 = vpop.f32.mrf.mxu0
    %v4903 = vadd.f32 %v4860, %v4902
    %v4904 = vpop.f32.mrf.mxu0
    %v4905 = vadd.f32 %v4862, %v4904
    %v4906 = vpop.f32.mrf.mxu0
    %v4907 = vadd.f32 %v4864, %v4906
    %v4908 = vpop.f32.mrf.mxu0
    %v4909 = vadd.f32 %v4866, %v4908
    %4910 = vdwg.mxu0
    %4911 = vmatprep.subr.bf16.mxu0 %v4648
    %4912 = vmatpush1.bf16.msra.mxu0 %v4647
    %4913 = vmatprep.subr.bf16.mxu0 %v4646
    %4914 = vmatpush1.bf16.msra.mxu0 %v4645
    %4915 = vmatprep.subr.bf16.mxu0 %v4644
    %4916 = vmatpush1.bf16.msra.mxu0 %v4643
    %4917 = vmatprep.subr.bf16.mxu0 %v4642
    %4918 = vmatpush1.bf16.msra.mxu0 %v4641
    %4919 = vmatprep.subr.bf16.mxu0 %v4640
    %4920 = vmatpush1.bf16.msra.mxu0 %v4639
    %4921 = vmatprep.subr.bf16.mxu0 %v4638
    %4922 = vmatpush1.bf16.msra.mxu0 %v4637
    %4923 = vmatprep.subr.bf16.mxu0 %v4636
    %4924 = vmatpush1.bf16.msra.mxu0 %v4635
    %4925 = vmatprep.subr.bf16.mxu0 %v4634
    %4926 = vmatpush1.bf16.msra.mxu0 %v4633
    %4927 = vmatprep.subr.bf16.mxu0 %v4664
    %4928 = vmatpush2.bf16.msra.mxu0 %v4663
    %4929 = vmatprep.subr.bf16.mxu0 %v4662
    %4930 = vmatpush2.bf16.msra.mxu0 %v4661
    %4931 = vmatprep.subr.bf16.mxu0 %v4660
    %4932 = vmatpush2.bf16.msra.mxu0 %v4659
    %4933 = vmatprep.subr.bf16.mxu0 %v4658
    %4934 = vmatpush2.bf16.msra.mxu0 %v4657
    %4935 = vmatprep.subr.bf16.mxu0 %v4656
    %4936 = vmatpush2.bf16.msra.mxu0 %v4655
    %4937 = vmatprep.subr.bf16.mxu0 %v4654
    %4938 = vmatpush2.bf16.msra.mxu0 %v4653
    %4939 = vmatprep.subr.bf16.mxu0 %v4652
    %4940 = vmatpush2.bf16.msra.mxu0 %v4651
    %4941 = vmatprep.subr.bf16.mxu0 %v4650
    %4942 = vmatpush2.bf16.msra.mxu0 %v4649
    %4943 = vmatprep.mubr.bf16.mxu0 %v4430
    %4944 = vmatmul.mubr.bf16.gmra.mxu0 %v4429
    %v4945 = vpop.f32.mrf.mxu0
    %v4946 = vadd.f32 %v4903, %v4945
    %v4947 = vpop.f32.mrf.mxu0
    %v4948 = vadd.f32 %v4905, %v4947
    %v4949 = vpop.f32.mrf.mxu0
    %v4950 = vadd.f32 %v4907, %v4949
    %v4951 = vpop.f32.mrf.mxu0
    %v4952 = vadd.f32 %v4909, %v4951
    %4953 = vdwg.mxu0
    %4954 = vmatprep.subr.bf16.mxu0 %v4680
    %4955 = vmatpush1.bf16.msra.mxu0 %v4679
    %4956 = vmatprep.subr.bf16.mxu0 %v4678
    %4957 = vmatpush1.bf16.msra.mxu0 %v4677
    %4958 = vmatprep.subr.bf16.mxu0 %v4676
    %4959 = vmatpush1.bf16.msra.mxu0 %v4675
    %4960 = vmatprep.subr.bf16.mxu0 %v4674
    %4961 = vmatpush1.bf16.msra.mxu0 %v4673
    %4962 = vmatprep.subr.bf16.mxu0 %v4672
    %4963 = vmatpush1.bf16.msra.mxu0 %v4671
    %4964 = vmatprep.subr.bf16.mxu0 %v4670
    %4965 = vmatpush1.bf16.msra.mxu0 %v4669
    %4966 = vmatprep.subr.bf16.mxu0 %v4668
    %4967 = vmatpush1.bf16.msra.mxu0 %v4667
    %4968 = vmatprep.subr.bf16.mxu0 %v4666
    %4969 = vmatpush1.bf16.msra.mxu0 %v4665
    %4970 = vmatprep.subr.bf16.mxu0 %v4696
    %4971 = vmatpush2.bf16.msra.mxu0 %v4695
    %4972 = vmatprep.subr.bf16.mxu0 %v4694
    %4973 = vmatpush2.bf16.msra.mxu0 %v4693
    %4974 = vmatprep.subr.bf16.mxu0 %v4692
    %4975 = vmatpush2.bf16.msra.mxu0 %v4691
    %4976 = vmatprep.subr.bf16.mxu0 %v4690
    %4977 = vmatpush2.bf16.msra.mxu0 %v4689
    %4978 = vmatprep.subr.bf16.mxu0 %v4688
    %4979 = vmatpush2.bf16.msra.mxu0 %v4687
    %4980 = vmatprep.subr.bf16.mxu0 %v4686
    %4981 = vmatpush2.bf16.msra.mxu0 %v4685
    %4982 = vmatprep.subr.bf16.mxu0 %v4684
    %4983 = vmatpush2.bf16.msra.mxu0 %v4683
    %4984 = vmatprep.subr.bf16.mxu0 %v4682
    %4985 = vmatpush2.bf16.msra.mxu0 %v4681
    %4986 = vmatprep.mubr.bf16.mxu0 %v4432
    %4987 = vmatmul.mubr.bf16.gmra.mxu0 %v4431
    %v4988 = vpop.f32.mrf.mxu0
    %v4989 = vadd.f32 %v4946, %v4988
    %v4990 = vpop.f32.mrf.mxu0
    %v4991 = vadd.f32 %v4948, %v4990
    %v4992 = vpop.f32.mrf.mxu0
    %v4993 = vadd.f32 %v4950, %v4992
    %v4994 = vpop.f32.mrf.mxu0
    %v4995 = vadd.f32 %v4952, %v4994
    %4996 = vdwg.mxu0
    %4997 = vmatprep.subr.bf16.mxu0 %v4712
    %4998 = vmatpush1.bf16.msra.mxu0 %v4711
    %4999 = vmatprep.subr.bf16.mxu0 %v4710
    %5000 = vmatpush1.bf16.msra.mxu0 %v4709
    %5001 = vmatprep.subr.bf16.mxu0 %v4708
    %5002 = vmatpush1.bf16.msra.mxu0 %v4707
    %5003 = vmatprep.subr.bf16.mxu0 %v4706
    %5004 = vmatpush1.bf16.msra.mxu0 %v4705
    %5005 = vmatprep.subr.bf16.mxu0 %v4704
    %5006 = vmatpush1.bf16.msra.mxu0 %v4703
    %5007 = vmatprep.subr.bf16.mxu0 %v4702
    %5008 = vmatpush1.bf16.msra.mxu0 %v4701
    %5009 = vmatprep.subr.bf16.mxu0 %v4700
    %5010 = vmatpush1.bf16.msra.mxu0 %v4699
    %5011 = vmatprep.subr.bf16.mxu0 %v4698
    %5012 = vmatpush1.bf16.msra.mxu0 %v4697
    %5013 = vmatprep.subr.bf16.mxu0 %v4728
    %5014 = vmatpush2.bf16.msra.mxu0 %v4727
    %5015 = vmatprep.subr.bf16.mxu0 %v4726
    %5016 = vmatpush2.bf16.msra.mxu0 %v4725
    %5017 = vmatprep.subr.bf16.mxu0 %v4724
    %5018 = vmatpush2.bf16.msra.mxu0 %v4723
    %5019 = vmatprep.subr.bf16.mxu0 %v4722
    %5020 = vmatpush2.bf16.msra.mxu0 %v4721
    %5021 = vmatprep.subr.bf16.mxu0 %v4720
    %5022 = vmatpush2.bf16.msra.mxu0 %v4719
    %5023 = vmatprep.subr.bf16.mxu0 %v4718
    %5024 = vmatpush2.bf16.msra.mxu0 %v4717
    %5025 = vmatprep.subr.bf16.mxu0 %v4716
    %5026 = vmatpush2.bf16.msra.mxu0 %v4715
    %5027 = vmatprep.subr.bf16.mxu0 %v4714
    %5028 = vmatpush2.bf16.msra.mxu0 %v4713
    %5029 = vmatprep.mubr.bf16.mxu0 %v4434
    %5030 = vmatmul.mubr.bf16.gmra.mxu0 %v4433
    %v5031 = vpop.f32.mrf.mxu0
    %v5032 = vadd.f32 %v4989, %v5031
    %v5033 = vpop.f32.mrf.mxu0
    %v5034 = vadd.f32 %v4991, %v5033
    %v5035 = vpop.f32.mrf.mxu0
    %v5036 = vadd.f32 %v4993, %v5035
    %v5037 = vpop.f32.mrf.mxu0
    %v5038 = vadd.f32 %v4995, %v5037
    %5039 = vdwg.mxu0
    %5040 = vmatprep.subr.bf16.mxu0 %v4744
    %5041 = vmatpush1.bf16.msra.mxu0 %v4743
    %5042 = vmatprep.subr.bf16.mxu0 %v4742
    %5043 = vmatpush1.bf16.msra.mxu0 %v4741
    %5044 = vmatprep.subr.bf16.mxu0 %v4740
    %5045 = vmatpush1.bf16.msra.mxu0 %v4739
    %5046 = vmatprep.subr.bf16.mxu0 %v4738
    %5047 = vmatpush1.bf16.msra.mxu0 %v4737
    %5048 = vmatprep.subr.bf16.mxu0 %v4736
    %5049 = vmatpush1.bf16.msra.mxu0 %v4735
    %5050 = vmatprep.subr.bf16.mxu0 %v4734
    %5051 = vmatpush1.bf16.msra.mxu0 %v4733
    %5052 = vmatprep.subr.bf16.mxu0 %v4732
    %5053 = vmatpush1.bf16.msra.mxu0 %v4731
    %5054 = vmatprep.subr.bf16.mxu0 %v4730
    %5055 = vmatpush1.bf16.msra.mxu0 %v4729
    %5056 = vmatprep.subr.bf16.mxu0 %v4760
    %5057 = vmatpush2.bf16.msra.mxu0 %v4759
    %5058 = vmatprep.subr.bf16.mxu0 %v4758
    %5059 = vmatpush2.bf16.msra.mxu0 %v4757
    %5060 = vmatprep.subr.bf16.mxu0 %v4756
    %5061 = vmatpush2.bf16.msra.mxu0 %v4755
    %5062 = vmatprep.subr.bf16.mxu0 %v4754
    %5063 = vmatpush2.bf16.msra.mxu0 %v4753
    %5064 = vmatprep.subr.bf16.mxu0 %v4752
    %5065 = vmatpush2.bf16.msra.mxu0 %v4751
    %5066 = vmatprep.subr.bf16.mxu0 %v4750
    %5067 = vmatpush2.bf16.msra.mxu0 %v4749
    %5068 = vmatprep.subr.bf16.mxu0 %v4748
    %5069 = vmatpush2.bf16.msra.mxu0 %v4747
    %5070 = vmatprep.subr.bf16.mxu0 %v4746
    %5071 = vmatpush2.bf16.msra.mxu0 %v4745
    %5072 = vmatprep.mubr.bf16.mxu0 %v4436
    %5073 = vmatmul.mubr.bf16.gmra.mxu0 %v4435
    %v5074 = vpop.f32.mrf.mxu0
    %v5075 = vadd.f32 %v5032, %v5074
    %v5076 = vpop.f32.mrf.mxu0
    %v5077 = vadd.f32 %v5034, %v5076
    %v5078 = vpop.f32.mrf.mxu0
    %v5079 = vadd.f32 %v5036, %v5078
    %v5080 = vpop.f32.mrf.mxu0
    %v5081 = vadd.f32 %v5038, %v5080
    %5082 = vdwg.mxu0
    %5083 = vmatprep.subr.bf16.mxu0 %v4776
    %5084 = vmatpush1.bf16.msra.mxu0 %v4775
    %5085 = vmatprep.subr.bf16.mxu0 %v4774
    %5086 = vmatpush1.bf16.msra.mxu0 %v4773
    %5087 = vmatprep.subr.bf16.mxu0 %v4772
    %5088 = vmatpush1.bf16.msra.mxu0 %v4771
    %5089 = vmatprep.subr.bf16.mxu0 %v4770
    %5090 = vmatpush1.bf16.msra.mxu0 %v4769
    %5091 = vmatprep.subr.bf16.mxu0 %v4768
    %5092 = vmatpush1.bf16.msra.mxu0 %v4767
    %5093 = vmatprep.subr.bf16.mxu0 %v4766
    %5094 = vmatpush1.bf16.msra.mxu0 %v4765
    %5095 = vmatprep.subr.bf16.mxu0 %v4764
    %5096 = vmatpush1.bf16.msra.mxu0 %v4763
    %5097 = vmatprep.subr.bf16.mxu0 %v4762
    %5098 = vmatpush1.bf16.msra.mxu0 %v4761
    %5099 = vmatprep.subr.bf16.mxu0 %v4792
    %5100 = vmatpush2.bf16.msra.mxu0 %v4791
    %5101 = vmatprep.subr.bf16.mxu0 %v4790
    %5102 = vmatpush2.bf16.msra.mxu0 %v4789
    %5103 = vmatprep.subr.bf16.mxu0 %v4788
    %5104 = vmatpush2.bf16.msra.mxu0 %v4787
    %5105 = vmatprep.subr.bf16.mxu0 %v4786
    %5106 = vmatpush2.bf16.msra.mxu0 %v4785
    %5107 = vmatprep.subr.bf16.mxu0 %v4784
    %5108 = vmatpush2.bf16.msra.mxu0 %v4783
    %5109 = vmatprep.subr.bf16.mxu0 %v4782
    %5110 = vmatpush2.bf16.msra.mxu0 %v4781
    %5111 = vmatprep.subr.bf16.mxu0 %v4780
    %5112 = vmatpush2.bf16.msra.mxu0 %v4779
    %5113 = vmatprep.subr.bf16.mxu0 %v4778
    %5114 = vmatpush2.bf16.msra.mxu0 %v4777
    %5115 = vmatprep.mubr.bf16.mxu0 %v4438
    %5116 = vmatmul.mubr.bf16.gmra.mxu0 %v4437
    %v5117 = vpop.f32.mrf.mxu0
    %v5118 = vadd.f32 %v5075, %v5117
    %v5119 = vpop.f32.mrf.mxu0
    %v5120 = vadd.f32 %v5077, %v5119
    %v5121 = vpop.f32.mrf.mxu0
    %v5122 = vadd.f32 %v5079, %v5121
    %v5123 = vpop.f32.mrf.mxu0
    %v5124 = vadd.f32 %v5081, %v5123
    %5125 = vdwg.mxu0
    %5126 = vmatprep.subr.bf16.mxu0 %v4808
    %5127 = vmatpush1.bf16.msra.mxu0 %v4807
    %5128 = vmatprep.subr.bf16.mxu0 %v4806
    %5129 = vmatpush1.bf16.msra.mxu0 %v4805
    %5130 = vmatprep.subr.bf16.mxu0 %v4804
    %5131 = vmatpush1.bf16.msra.mxu0 %v4803
    %5132 = vmatprep.subr.bf16.mxu0 %v4802
    %5133 = vmatpush1.bf16.msra.mxu0 %v4801
    %5134 = vmatprep.subr.bf16.mxu0 %v4800
    %5135 = vmatpush1.bf16.msra.mxu0 %v4799
    %5136 = vmatprep.subr.bf16.mxu0 %v4798
    %5137 = vmatpush1.bf16.msra.mxu0 %v4797
    %5138 = vmatprep.subr.bf16.mxu0 %v4796
    %5139 = vmatpush1.bf16.msra.mxu0 %v4795
    %5140 = vmatprep.subr.bf16.mxu0 %v4794
    %5141 = vmatpush1.bf16.msra.mxu0 %v4793
    %5142 = vmatprep.subr.bf16.mxu0 %v4824
    %5143 = vmatpush2.bf16.msra.mxu0 %v4823
    %5144 = vmatprep.subr.bf16.mxu0 %v4822
    %5145 = vmatpush2.bf16.msra.mxu0 %v4821
    %5146 = vmatprep.subr.bf16.mxu0 %v4820
    %5147 = vmatpush2.bf16.msra.mxu0 %v4819
    %5148 = vmatprep.subr.bf16.mxu0 %v4818
    %5149 = vmatpush2.bf16.msra.mxu0 %v4817
    %5150 = vmatprep.subr.bf16.mxu0 %v4816
    %5151 = vmatpush2.bf16.msra.mxu0 %v4815
    %5152 = vmatprep.subr.bf16.mxu0 %v4814
    %5153 = vmatpush2.bf16.msra.mxu0 %v4813
    %5154 = vmatprep.subr.bf16.mxu0 %v4812
    %5155 = vmatpush2.bf16.msra.mxu0 %v4811
    %5156 = vmatprep.subr.bf16.mxu0 %v4810
    %5157 = vmatpush2.bf16.msra.mxu0 %v4809
    %5158 = vmatprep.mubr.bf16.mxu0 %v4440
    %5159 = vmatmul.mubr.bf16.gmra.mxu0 %v4439
    %v5160 = vpop.f32.mrf.mxu0
    %v5161 = vadd.f32 %v5118, %v5160
    %v5162 = vpop.f32.mrf.mxu0
    %v5163 = vadd.f32 %v5120, %v5162
    %v5164 = vpop.f32.mrf.mxu0
    %v5165 = vadd.f32 %v5122, %v5164
    %v5166 = vpop.f32.mrf.mxu0
    %v5167 = vadd.f32 %v5124, %v5166
    %5168 = vdwg.mxu0
    %v5169 = vld [vmem:[#allocation20] sm:$0x3]
    %v5171 = vlaneseq
    %v5172 = vshrl.u32 %v5171, 7
    %v5173 = vsub.s32 0, %v5172
    %v5174 = vrot.slane %v5169, %v5173
    %v5175 = vlaneseq
    %v5176 = vshrl.u32 %v5175, 7
    %v5177 = vsub.s32 1, %v5176
    %v5178 = vrot.slane %v5169, %v5177
    %v5181 = vmul.f32 %v5161, %v5174
    %v5182 = vmul.f32 %v5163, %v5178
    %v5183 = vmul.f32 %v5165, %v5174
    %v5184 = vmul.f32 %v5167, %v5178
    %v5185 = vld [vmem:[#allocation22] sm:$0x3]
    %v5187 = vlaneseq
    %v5188 = vshrl.u32 %v5187, 7
    %v5189 = vsub.s32 0, %v5188
    %v5190 = vrot.slane %v5185, %v5189
    %v5191 = vlaneseq
    %v5192 = vshrl.u32 %v5191, 7
    %v5193 = vsub.s32 1, %v5192
    %v5194 = vrot.slane %v5185, %v5193
    %v5197 = vadd.f32 %v5181, %v5190
    %v5198 = vadd.f32 %v5182, %v5194
    %v5199 = vadd.f32 %v5183, %v5190
    %v5200 = vadd.f32 %v5184, %v5194
    %v5201 = vxor.u32 %v5197, 2147483648
    %v5202 = vxor.u32 %v5198, 2147483648
    %v5203 = vxor.u32 %v5199, 2147483648
    %v5204 = vxor.u32 %v5200, 2147483648
    %v5205 = vmul.f32 %v5201, 1.442695
    %v5206 = vpow.pop %v5205
    %v5207 = vmul.f32 %v5202, 1.442695
    %v5208 = vpow.pop %v5207
    %v5209 = vmul.f32 %v5203, 1.442695
    %v5210 = vpow.pop %v5209
    %v5211 = vmul.f32 %v5204, 1.442695
    %v5212 = vpow.pop %v5211
    %v5213 = vadd.f32 %v5206, 1.0
    %v5214 = vadd.f32 %v5208, 1.0
    %v5215 = vadd.f32 %v5210, 1.0
    %v5216 = vadd.f32 %v5212, 1.0
    %v5217 = vrcp.pop %v5213
    %v5218 = vmul.f32 1.0, %v5217
    %v5219 = vrcp.pop %v5214
    %v5220 = vmul.f32 1.0, %v5219
    %v5221 = vrcp.pop %v5215
    %v5222 = vmul.f32 1.0, %v5221
    %v5223 = vrcp.pop %v5216
    %v5224 = vmul.f32 1.0, %v5223
    %5225 = vst [vmem:[#allocation23] sm:$0xff] %v5218
    %5226 = vst [vmem:[#allocation23 + $0x8] sm:$0xff] %v5220
    %5227 = vst [vmem:[#allocation23 + $0x10] sm:$0xff] %v5222
    %5228 = vst [vmem:[#allocation23 + $0x18] sm:$0xff] %v5224
    // Predicated region
    $region106: #{_forward_impl.1} parent=1 // pred_check
      _
    $region107: #{_forward_impl.1} parent=1 // pred_check_branch
      %5230 = sbr.rel (0) target = $region109
    $region108: #{_forward_impl.1} parent=1 // pred_region
      %s5232 = ssub.s32 512, 512
      %5233 = vsyncadd [#allocation4], %s5232
      %s5234 = sshll.u32 [#allocation23], 4
      %s5235 = int_to_ptr.vmem [resolvable:$true] %s5234
      %5240 = dma.vmem_to_hbm [thread:$0]  %s5235, 512, %s13, [#allocation4], 256, 256, 16
    $region109: #{_forward_impl.1} parent=1 // pred_fallthru
      _
    // Predicated region
    $region110: #{_forward_impl.1} parent=1 // pred_check
      _
    $region111: #{_forward_impl.1} parent=1 // pred_check_branch
      %5242 = sbr.rel (0) target = $region113
    $region112: #{_forward_impl.1} parent=1 // pred_region
      %5243 = dma.done [#allocation4], 512
    $region113: #{_forward_impl.1} parent=1 // pred_fallthru
      _
    %5244 = vsyncpa [#allocation3], 1
    %5245 = vsyncpa [#allocation6], 1
    %5246 = vsyncpa [#allocation9], 1
    %5247 = vsyncpa [#allocation12], 1
    %5248 = vsyncpa [#allocation15], 1
    %5249 = vsyncpa [#allocation18], 1
    %5250 = vsyncpa [#allocation21], 1
    %5251 = vsyncpa [#allocation4], 1

</llo_original>
